<compile_context>
chip_gen: v7x
topology: tpu7x:2x2x1
jax: 0.10.0
libtpu: 0.0.40
codegen_flags: <defaults>
</compile_context>

<pallas_src>
from functools import partial

import jax
import jax.numpy as jnp
from jax import lax
from jax.experimental import pallas as pl
from jax.experimental.pallas import tpu as pltpu


def _round_up(x, m):
    return (x + m - 1) // m * m


def _sigmoid(x):
    # sigmoid(x) = 0.5*tanh(0.5*x) + 0.5 -> one EUP op instead of exp+recip.
    return 0.5 * jnp.tanh(0.5 * x) + 0.5


# ----------------------- fused LSTM(+FC) kernel ---------------------------

def _lotto_lstm_kernel(x_ref, wih_ref, whh_ref, b_ref, wfc_ref, bfc_ref,
                       out_ref, seq_scr, gx_scr):
    # x_ref   : [T, BB, P]    bf16   (time-major, lane/sublane padded, batch block)
    # wih_ref : [L, P, 4P]    bf16   (gate k in lanes [k*P, k*P+H))
    # whh_ref : [L, P, 4P]    bf16
    # b_ref   : [L, 1, 4P]    f32    (b_ih + b_hh, padded)
    # wfc_ref : [P, Op]       bf16
    # bfc_ref : [1, Op]       f32
    # out_ref : [BB, Op]      f32
    # seq_scr : [T, BB, P]    bf16   (inter-layer activations, matmul-ready)
    # gx_scr  : [T, BB, 4P]   bf16   (hoisted input projection for the layer)
    T, BB, P = x_ref.shape
    L = wih_ref.shape[0]
    G = 4 * P

    h_final = None
    for layer in range(L):                       # static unroll over layers
        # ---- hoisted input projection: one big MXU matmul over the sequence
        if layer == 0:
            x_all = x_ref[...].reshape(T * BB, P)
        else:
            x_all = seq_scr[...].reshape(T * BB, P)
        gx = jnp.dot(x_all, wih_ref[layer],
                     preferred_element_type=jnp.float32) + b_ref[layer]
        gx_scr[...] = gx.reshape(T, BB, G).astype(jnp.bfloat16)

        whh = whh_ref[layer]                     # [P, 4P] bf16
        write_seq = (layer + 1 < L)              # last layer: skip dead store

        def step(t, carry, write_seq=write_seq, whh=whh):
            h_prev, c_prev = carry               # bf16 [BB,P], f32 [BB,P]
            gates = gx_scr[t] + jnp.dot(h_prev, whh,
                                        preferred_element_type=jnp.float32)
            i = _sigmoid(gates[:, 0 * P:1 * P])  # lane-aligned gate slices
            f = _sigmoid(gates[:, 1 * P:2 * P])
            g = jnp.tanh(gates[:, 2 * P:3 * P])
            o = _sigmoid(gates[:, 3 * P:4 * P])
            c_new = f * c_prev + i * g
            h_bf = (o * jnp.tanh(c_new)).astype(jnp.bfloat16)
            if write_seq:
                seq_scr[t] = h_bf                # next layer's input
            return h_bf, c_new

        h0 = jnp.zeros((BB, P), jnp.bfloat16)
        c0 = jnp.zeros((BB, P), jnp.float32)
        h_final, _ = lax.fori_loop(0, T, step, (h0, c0), unroll=min(T, 8))

    # ---- fused FC on the last time step's hidden state (dropout p=0 elided)
    out_ref[...] = (jnp.dot(h_final, wfc_ref[...],
                            preferred_element_type=jnp.float32)
                    + bfc_ref[...])


# -------------------- parameter prep (done once) --------------------------

def prepare_params(params, input_size, hidden_size, output_size):
    """Pad/transpose/stack all weights once into lane-dense, kernel-ready form."""
    H = hidden_size
    L = len(params["lstm"])
    P = max(_round_up(input_size, 128), _round_up(H, 128))
    G = 4 * P
    Op = _round_up(output_size, 128)

    wih_list, whh_list, b_list = [], [], []
    for l, layer in enumerate(params["lstm"]):
        d_in = input_size if l == 0 else H
        w_ih, w_hh = layer["w_ih"], layer["w_hh"]          # [4H,d_in], [4H,H]
        b = layer["b_ih"] + layer["b_hh"]                  # [4H]
        wih_t = jnp.zeros((P, G), jnp.float32)
        whh_t = jnp.zeros((P, G), jnp.float32)
        b_pad = jnp.zeros((1, G), jnp.float32)
        for k in range(4):                                 # gate k -> lanes k*P..k*P+H
            wih_t = wih_t.at[:d_in, k * P:k * P + H].set(
                w_ih[k * H:(k + 1) * H, :].T)
            whh_t = whh_t.at[:H, k * P:k * P + H].set(
                w_hh[k * H:(k + 1) * H, :].T)
            b_pad = b_pad.at[0, k * P:k * P + H].set(b[k * H:(k + 1) * H])
        wih_list.append(wih_t)
        whh_list.append(whh_t)
        b_list.append(b_pad)

    wfc_pad = jnp.zeros((P, Op), jnp.float32)
    wfc_pad = wfc_pad.at[:H, :output_size].set(params["fc_w"].T)
    bfc_pad = jnp.zeros((1, Op), jnp.float32)
    bfc_pad = bfc_pad.at[0, :output_size].set(params["fc_b"])

    return {
        "wih": jnp.stack(wih_list).astype(jnp.bfloat16),   # [L, P, 4P]
        "whh": jnp.stack(whh_list).astype(jnp.bfloat16),   # [L, P, 4P]
        "b":   jnp.stack(b_list),                          # [L, 1, 4P] f32
        "wfc": wfc_pad.astype(jnp.bfloat16),               # [P, Op]
        "bfc": bfc_pad,                                    # [1, Op] f32
    }


# --------------------------- full forward pass ----------------------------

_BB = 16  # batch block (sublane-friendly for both bf16 and f32)


@partial(jax.jit, static_argnames=("dims",))
def lotto_lstm_forward(x, prep, dims):
    """x: [B, T, input_size] (batch_first, as in PyTorch)."""
    input_size, hidden_size, output_size = dims
    B, T, D = x.shape
    L, P, G = prep["wih"].shape
    Op = prep["wfc"].shape[1]
    BB = _BB
    Bp = _round_up(B, BB)
    nb = Bp // BB

    # batch_first -> time-major; single cast + pad (no zeros + scatter pass).
    x_tm = jnp.transpose(x, (1, 0, 2)).astype(jnp.bfloat16)
    x_pad = jnp.pad(x_tm, ((0, 0), (0, Bp - B), (0, P - D)))

    # Derived VMEM budget: double-buffered input/output blocks + scratch,
    # plus ~30% and a small fixed headroom for compiler-internal scratch.
    resident_bytes = (
        2 * (T * BB * P * 2)            # x block
        + 2 * (L * P * G * 2) * 2       # wih + whh
        + 2 * (L * 1 * G * 4)           # combined bias
        + 2 * (P * Op * 2)              # fc weight
        + 2 * (1 * Op * 4)              # fc bias
        + 2 * (BB * Op * 4)             # out block
        + T * BB * P * 2                # seq_scr
        + T * BB * G * 2                # gx_scr (bf16)
    )
    vmem_limit = int(resident_bytes * 1.3) + (4 << 20)

    out_pad = pl.pallas_call(
        _lotto_lstm_kernel,
        out_shape=jax.ShapeDtypeStruct((Bp, Op), jnp.float32),
        grid=(nb,),
        in_specs=[
            pl.BlockSpec((T, BB, P), lambda b: (0, b, 0)),   # x (batch-blocked)
            pl.BlockSpec((L, P, G), lambda b: (0, 0, 0)),    # wih (resident)
            pl.BlockSpec((L, P, G), lambda b: (0, 0, 0)),    # whh (resident)
            pl.BlockSpec((L, 1, G), lambda b: (0, 0, 0)),    # bias
            pl.BlockSpec((P, Op), lambda b: (0, 0)),         # fc weight
            pl.BlockSpec((1, Op), lambda b: (0, 0)),         # fc bias
        ],
        out_specs=pl.BlockSpec((BB, Op), lambda b: (b, 0)),
        scratch_shapes=[pltpu.VMEM((T, BB, P), jnp.bfloat16),   # seq_scr
                        pltpu.VMEM((T, BB, G), jnp.bfloat16)],  # gx_scr
        compiler_params=pltpu.CompilerParams(
            dimension_semantics=("parallel",),
            vmem_limit_bytes=vmem_limit),
    )(x_pad, prep["wih"], prep["whh"], prep["b"], prep["wfc"], prep["bfc"])

    return out_pad[:B, :output_size]


# ----------------------- deterministic parameter init ---------------------

def init_params(key, input_size, hidden_size, num_layers, output_size):
    H = hidden_size
    params = {"lstm": []}
    for l in range(num_layers):
        d_in = input_size if l == 0 else H
        key, k1, k2 = jax.random.split(key, 3)
        # xavier_uniform for weight_ih
        limit = jnp.sqrt(6.0 / (4 * H + d_in))
        w_ih = jax.random.uniform(k1, (4 * H, d_in), jnp.float32, -limit, limit)
        # orthogonal for weight_hh (QR + sign(diag(R)) fix, as in torch orthogonal_)
        a = jax.random.normal(k2, (4 * H, H), jnp.float32)
        q, r = jnp.linalg.qr(a)
        sign = jnp.where(jnp.diag(r) >= 0, 1.0, -1.0)
        q = q * sign[None, :]
        params["lstm"].append({
            "w_ih": w_ih,
            "w_hh": q.astype(jnp.float32),
            "b_ih": jnp.zeros((4 * H,), jnp.float32),
            "b_hh": jnp.zeros((4 * H,), jnp.float32),
        })
    key, k3, k4 = jax.random.split(key, 3)
    bound = 1.0 / jnp.sqrt(float(H))
    params["fc_w"] = jax.random.uniform(k3, (output_size, H), jnp.float32,
                                        -bound, bound)
    params["fc_b"] = jax.random.uniform(k4, (output_size,), jnp.float32,
                                        -bound, bound)
    return params


# ------------------------- pure-JAX reference -----------------------------

def reference_forward(x, params):
    B, T, _ = x.shape
    h_seq = x.astype(jnp.float32)
    for layer in params["lstm"]:
        H = layer["w_hh"].shape[1]
        w_ih, w_hh = layer["w_ih"], layer["w_hh"]
        b = layer["b_ih"] + layer["b_hh"]
        h = jnp.zeros((B, H), jnp.float32)
        c = jnp.zeros((B, H), jnp.float32)
        outs = []
        for t in range(T):
            gates = h_seq[:, t, :] @ w_ih.T + h @ w_hh.T + b
            i = jax.nn.sigmoid(gates[:, 0 * H:1 * H])
            f = jax.nn.sigmoid(gates[:, 1 * H:2 * H])
            g = jnp.tanh(gates[:, 2 * H:3 * H])
            o = jax.nn.sigmoid(gates[:, 3 * H:4 * H])
            c = f * c + i * g
            h = o * jnp.tanh(c)
            outs.append(h)
        h_seq = jnp.stack(outs, axis=1)
    return h_seq[:, -1, :] @ params["fc_w"].T + params["fc_b"]


if __name__ == "__main__":
    B, T = 2, 8
    input_size, hidden_size, num_layers, output_size = 16, 32, 2, 10

    key = jax.random.PRNGKey(0)
    key, xk = jax.random.split(key)
    x = jax.random.normal(xk, (B, T, input_size), jnp.float32)

    params = init_params(key, input_size, hidden_size, num_layers, output_size)
    prep = prepare_params(params, input_size, hidden_size, output_size)

    out = lotto_lstm_forward(x, prep, (input_size, hidden_size, output_size))
    out = jax.block_until_ready(out)
    assert out.shape == (B, output_size)

    # loose tolerance: kernel uses bf16 MXU inputs / bf16 gx storage
    # (f32 accumulate and f32 cell state)
    ref = jax.block_until_ready(reference_forward(x, params))
    assert jnp.all(jnp.isfinite(out))
    assert jnp.max(jnp.abs(out - ref)) < 0.1, float(jnp.max(jnp.abs(out - ref)))

    print("KERNEL_OK")
</pallas_src>

<mosaic_0001>
module attributes {stable_mosaic.version = 11 : i64} {
  func.func @_lotto_lstm_kernel(%arg0: i32, %arg1: memref<8x16x128xbf16, #tpu.memory_space<vmem>>, %arg2: memref<2x128x512xbf16, #tpu.memory_space<vmem>>, %arg3: memref<2x128x512xbf16, #tpu.memory_space<vmem>>, %arg4: memref<2x1x512xf32, #tpu.memory_space<vmem>>, %arg5: memref<128x128xbf16, #tpu.memory_space<vmem>>, %arg6: memref<1x128xf32, #tpu.memory_space<vmem>>, %arg7: memref<16x128xf32, #tpu.memory_space<vmem>>, %arg8: memref<8x16x128xbf16, #tpu.memory_space<vmem>>, %arg9: memref<8x16x512xbf16, #tpu.memory_space<vmem>>) attributes {dimension_semantics = [#tpu.dimension_semantics<parallel>], iteration_bounds = array<i64: 1>, scalar_prefetch = 0 : i64, scratch_operands = 2 : i64, tpu.core_type = #tpu.core_type<tc>, window_params = [{transform_indices = @transform_0, window_bounds = array<i64: 8, 16, 128>}, {pipeline_mode = #tpu.pipeline_mode<synchronous>, transform_indices = @transform_1, window_bounds = array<i64: 2, 128, 512>}, {pipeline_mode = #tpu.pipeline_mode<synchronous>, transform_indices = @transform_2, window_bounds = array<i64: 2, 128, 512>}, {pipeline_mode = #tpu.pipeline_mode<synchronous>, transform_indices = @transform_3, window_bounds = array<i64: 2, 1, 512>}, {pipeline_mode = #tpu.pipeline_mode<synchronous>, transform_indices = @transform_4, window_bounds = array<i64: 128, 128>}, {pipeline_mode = #tpu.pipeline_mode<synchronous>, transform_indices = @transform_5, window_bounds = array<i64: 1, 128>}, {transform_indices = @transform_6, window_bounds = array<i64: 16, 128>}]} {
    %c0 = arith.constant 0 : index
    %c0_0 = arith.constant 0 : index
    %c0_1 = arith.constant 0 : index
    %0 = vector.load %arg1[%c0, %c0_0, %c0_1] : memref<8x16x128xbf16, #tpu.memory_space<vmem>>, vector<8x16x128xbf16>
    %1 = vector.shape_cast %0 : vector<8x16x128xbf16> to vector<128x128xbf16>
    %c0_2 = arith.constant 0 : index
    %c0_3 = arith.constant 0 : index
    %c0_4 = arith.constant 0 : index
    %2 = vector.load %arg2[%c0_2, %c0_3, %c0_4] : memref<2x128x512xbf16, #tpu.memory_space<vmem>>, vector<1x128x512xbf16>
    %3 = vector.shape_cast %2 : vector<1x128x512xbf16> to vector<128x512xbf16>
    %cst = arith.constant dense<0.000000e+00> : vector<128x512xf32>
    %4 = tpu.matmul %1, %3, %cst {dimension_numbers = #tpu.dot_dimension_numbers<[1], [0], [0], [1], [0, 0, 1, 1], [], []>} : vector<128x128xbf16>, vector<128x512xbf16>, vector<128x512xf32> -> vector<128x512xf32>
    %c0_5 = arith.constant 0 : index
    %c0_6 = arith.constant 0 : index
    %c0_7 = arith.constant 0 : index
    %5 = vector.load %arg4[%c0_5, %c0_6, %c0_7] : memref<2x1x512xf32, #tpu.memory_space<vmem>>, vector<1x1x512xf32>
    %6 = vector.shape_cast %5 : vector<1x1x512xf32> to vector<1x512xf32>
    %7 = vector.broadcast %6 : vector<1x512xf32> to vector<128x512xf32>
    %8 = arith.addf %4, %7 : vector<128x512xf32>
    %9 = vector.shape_cast %8 : vector<128x512xf32> to vector<8x16x512xf32>
    %10 = arith.truncf %9 : vector<8x16x512xf32> to vector<8x16x512xbf16>
    %c0_8 = arith.constant 0 : index
    %c0_9 = arith.constant 0 : index
    %c0_10 = arith.constant 0 : index
    %11 = vector.load %arg9[%c0_8, %c0_9, %c0_10] : memref<8x16x512xbf16, #tpu.memory_space<vmem>>, vector<8x16x512xbf16>
    tpu.vector_store %arg9[%c0_8, %c0_9, %c0_10], %10 {strides = array<i32>} : memref<8x16x512xbf16, #tpu.memory_space<vmem>>, vector<8x16x512xbf16>,
    %c0_11 = arith.constant 0 : index
    %c0_12 = arith.constant 0 : index
    %c0_13 = arith.constant 0 : index
    %12 = vector.load %arg3[%c0_11, %c0_12, %c0_13] : memref<2x128x512xbf16, #tpu.memory_space<vmem>>, vector<1x128x512xbf16>
    %13 = vector.shape_cast %12 : vector<1x128x512xbf16> to vector<128x512xbf16>
    %cst_14 = arith.constant 0.000000e+00 : bf16
    %14 = vector.broadcast %cst_14 : bf16 to vector<16x128xbf16>
    %cst_15 = arith.constant 0.000000e+00 : f32
    %15 = vector.broadcast %cst_15 : f32 to vector<16x128xf32>
    %c0_i32 = arith.constant 0 : i32
    %16 = arith.index_cast %c0_i32 : i32 to index
    %c0_16 = arith.constant 0 : index
    %c0_17 = arith.constant 0 : index
    %17 = vector.load %arg9[%16, %c0_16, %c0_17] : memref<8x16x512xbf16, #tpu.memory_space<vmem>>, vector<1x16x512xbf16>
    %18 = vector.shape_cast %17 : vector<1x16x512xbf16> to vector<16x512xbf16>
    %cst_18 = arith.constant dense<0.000000e+00> : vector<16x512xf32>
    %19 = tpu.matmul %14, %13, %cst_18 {dimension_numbers = #tpu.dot_dimension_numbers<[1], [0], [0], [1], [0, 0, 1, 1], [], []>} : vector<16x128xbf16>, vector<128x512xbf16>, vector<16x512xf32> -> vector<16x512xf32>
    %20 = arith.extf %18 : vector<16x512xbf16> to vector<16x512xf32>
    %21 = arith.addf %20, %19 : vector<16x512xf32>
    %22 = vector.extract_strided_slice %21 {offsets = [0, 0], sizes = [16, 128], strides = [1, 1]} : vector<16x512xf32> to vector<16x128xf32>
    %cst_19 = arith.constant 5.000000e-01 : f32
    %23 = vector.broadcast %cst_19 : f32 to vector<16x128xf32>
    %24 = arith.mulf %23, %22 : vector<16x128xf32>
    %25 = math.tanh %24 : vector<16x128xf32>
    %cst_20 = arith.constant 5.000000e-01 : f32
    %26 = vector.broadcast %cst_20 : f32 to vector<16x128xf32>
    %27 = arith.mulf %26, %25 : vector<16x128xf32>
    %cst_21 = arith.constant 5.000000e-01 : f32
    %28 = vector.broadcast %cst_21 : f32 to vector<16x128xf32>
    %29 = arith.addf %27, %28 : vector<16x128xf32>
    %30 = vector.extract_strided_slice %21 {offsets = [0, 128], sizes = [16, 128], strides = [1, 1]} : vector<16x512xf32> to vector<16x128xf32>
    %cst_22 = arith.constant 5.000000e-01 : f32
    %31 = vector.broadcast %cst_22 : f32 to vector<16x128xf32>
    %32 = arith.mulf %31, %30 : vector<16x128xf32>
    %33 = math.tanh %32 : vector<16x128xf32>
    %cst_23 = arith.constant 5.000000e-01 : f32
    %34 = vector.broadcast %cst_23 : f32 to vector<16x128xf32>
    %35 = arith.mulf %34, %33 : vector<16x128xf32>
    %cst_24 = arith.constant 5.000000e-01 : f32
    %36 = vector.broadcast %cst_24 : f32 to vector<16x128xf32>
    %37 = arith.addf %35, %36 : vector<16x128xf32>
    %38 = vector.extract_strided_slice %21 {offsets = [0, 256], sizes = [16, 128], strides = [1, 1]} : vector<16x512xf32> to vector<16x128xf32>
    %39 = math.tanh %38 : vector<16x128xf32>
    %40 = vector.extract_strided_slice %21 {offsets = [0, 384], sizes = [16, 128], strides = [1, 1]} : vector<16x512xf32> to vector<16x128xf32>
    %cst_25 = arith.constant 5.000000e-01 : f32
    %41 = vector.broadcast %cst_25 : f32 to vector<16x128xf32>
    %42 = arith.mulf %41, %40 : vector<16x128xf32>
    %43 = math.tanh %42 : vector<16x128xf32>
    %cst_26 = arith.constant 5.000000e-01 : f32
    %44 = vector.broadcast %cst_26 : f32 to vector<16x128xf32>
    %45 = arith.mulf %44, %43 : vector<16x128xf32>
    %cst_27 = arith.constant 5.000000e-01 : f32
    %46 = vector.broadcast %cst_27 : f32 to vector<16x128xf32>
    %47 = arith.addf %45, %46 : vector<16x128xf32>
    %48 = arith.mulf %37, %15 : vector<16x128xf32>
    %49 = arith.mulf %29, %39 : vector<16x128xf32>
    %50 = arith.addf %48, %49 : vector<16x128xf32>
    %51 = math.tanh %50 : vector<16x128xf32>
    %52 = arith.mulf %47, %51 : vector<16x128xf32>
    %53 = arith.truncf %52 : vector<16x128xf32> to vector<16x128xbf16>
    %54 = arith.index_cast %c0_i32 : i32 to index
    %c0_28 = arith.constant 0 : index
    %c0_29 = arith.constant 0 : index
    %55 = vector.load %arg8[%54, %c0_28, %c0_29] : memref<8x16x128xbf16, #tpu.memory_space<vmem>>, vector<1x16x128xbf16>
    %56 = vector.shape_cast %55 : vector<1x16x128xbf16> to vector<16x128xbf16>
    %57 = vector.shape_cast %53 : vector<16x128xbf16> to vector<1x16x128xbf16>
    tpu.vector_store %arg8[%54, %c0_28, %c0_29], %57 {strides = array<i32>} : memref<8x16x128xbf16, #tpu.memory_space<vmem>>, vector<1x16x128xbf16>,
    %c1_i32 = arith.constant 1 : i32
    %58 = arith.index_cast %c1_i32 : i32 to index
    %c0_30 = arith.constant 0 : index
    %c0_31 = arith.constant 0 : index
    %59 = vector.load %arg9[%58, %c0_30, %c0_31] : memref<8x16x512xbf16, #tpu.memory_space<vmem>>, vector<1x16x512xbf16>
    %60 = vector.shape_cast %59 : vector<1x16x512xbf16> to vector<16x512xbf16>
    %cst_32 = arith.constant dense<0.000000e+00> : vector<16x512xf32>
    %61 = tpu.matmul %53, %13, %cst_32 {dimension_numbers = #tpu.dot_dimension_numbers<[1], [0], [0], [1], [0, 0, 1, 1], [], []>} : vector<16x128xbf16>, vector<128x512xbf16>, vector<16x512xf32> -> vector<16x512xf32>
    %62 = arith.extf %60 : vector<16x512xbf16> to vector<16x512xf32>
    %63 = arith.addf %62, %61 : vector<16x512xf32>
    %64 = vector.extract_strided_slice %63 {offsets = [0, 0], sizes = [16, 128], strides = [1, 1]} : vector<16x512xf32> to vector<16x128xf32>
    %cst_33 = arith.constant 5.000000e-01 : f32
    %65 = vector.broadcast %cst_33 : f32 to vector<16x128xf32>
    %66 = arith.mulf %65, %64 : vector<16x128xf32>
    %67 = math.tanh %66 : vector<16x128xf32>
    %cst_34 = arith.constant 5.000000e-01 : f32
    %68 = vector.broadcast %cst_34 : f32 to vector<16x128xf32>
    %69 = arith.mulf %68, %67 : vector<16x128xf32>
    %cst_35 = arith.constant 5.000000e-01 : f32
    %70 = vector.broadcast %cst_35 : f32 to vector<16x128xf32>
    %71 = arith.addf %69, %70 : vector<16x128xf32>
    %72 = vector.extract_strided_slice %63 {offsets = [0, 128], sizes = [16, 128], strides = [1, 1]} : vector<16x512xf32> to vector<16x128xf32>
    %cst_36 = arith.constant 5.000000e-01 : f32
    %73 = vector.broadcast %cst_36 : f32 to vector<16x128xf32>
    %74 = arith.mulf %73, %72 : vector<16x128xf32>
    %75 = math.tanh %74 : vector<16x128xf32>
    %cst_37 = arith.constant 5.000000e-01 : f32
    %76 = vector.broadcast %cst_37 : f32 to vector<16x128xf32>
    %77 = arith.mulf %76, %75 : vector<16x128xf32>
    %cst_38 = arith.constant 5.000000e-01 : f32
    %78 = vector.broadcast %cst_38 : f32 to vector<16x128xf32>
    %79 = arith.addf %77, %78 : vector<16x128xf32>
    %80 = vector.extract_strided_slice %63 {offsets = [0, 256], sizes = [16, 128], strides = [1, 1]} : vector<16x512xf32> to vector<16x128xf32>
    %81 = math.tanh %80 : vector<16x128xf32>
    %82 = vector.extract_strided_slice %63 {offsets = [0, 384], sizes = [16, 128], strides = [1, 1]} : vector<16x512xf32> to vector<16x128xf32>
    %cst_39 = arith.constant 5.000000e-01 : f32
    %83 = vector.broadcast %cst_39 : f32 to vector<16x128xf32>
    %84 = arith.mulf %83, %82 : vector<16x128xf32>
    %85 = math.tanh %84 : vector<16x128xf32>
    %cst_40 = arith.constant 5.000000e-01 : f32
    %86 = vector.broadcast %cst_40 : f32 to vector<16x128xf32>
    %87 = arith.mulf %86, %85 : vector<16x128xf32>
    %cst_41 = arith.constant 5.000000e-01 : f32
    %88 = vector.broadcast %cst_41 : f32 to vector<16x128xf32>
    %89 = arith.addf %87, %88 : vector<16x128xf32>
    %90 = arith.mulf %79, %50 : vector<16x128xf32>
    %91 = arith.mulf %71, %81 : vector<16x128xf32>
    %92 = arith.addf %90, %91 : vector<16x128xf32>
    %93 = math.tanh %92 : vector<16x128xf32>
    %94 = arith.mulf %89, %93 : vector<16x128xf32>
    %95 = arith.truncf %94 : vector<16x128xf32> to vector<16x128xbf16>
    %96 = arith.index_cast %c1_i32 : i32 to index
    %c0_42 = arith.constant 0 : index
    %c0_43 = arith.constant 0 : index
    %97 = vector.load %arg8[%96, %c0_42, %c0_43] : memref<8x16x128xbf16, #tpu.memory_space<vmem>>, vector<1x16x128xbf16>
    %98 = vector.shape_cast %97 : vector<1x16x128xbf16> to vector<16x128xbf16>
    %99 = vector.shape_cast %95 : vector<16x128xbf16> to vector<1x16x128xbf16>
    tpu.vector_store %arg8[%96, %c0_42, %c0_43], %99 {strides = array<i32>} : memref<8x16x128xbf16, #tpu.memory_space<vmem>>, vector<1x16x128xbf16>,
    %c2_i32 = arith.constant 2 : i32
    %100 = arith.index_cast %c2_i32 : i32 to index
    %c0_44 = arith.constant 0 : index
    %c0_45 = arith.constant 0 : index
    %101 = vector.load %arg9[%100, %c0_44, %c0_45] : memref<8x16x512xbf16, #tpu.memory_space<vmem>>, vector<1x16x512xbf16>
    %102 = vector.shape_cast %101 : vector<1x16x512xbf16> to vector<16x512xbf16>
    %cst_46 = arith.constant dense<0.000000e+00> : vector<16x512xf32>
    %103 = tpu.matmul %95, %13, %cst_46 {dimension_numbers = #tpu.dot_dimension_numbers<[1], [0], [0], [1], [0, 0, 1, 1], [], []>} : vector<16x128xbf16>, vector<128x512xbf16>, vector<16x512xf32> -> vector<16x512xf32>
    %104 = arith.extf %102 : vector<16x512xbf16> to vector<16x512xf32>
    %105 = arith.addf %104, %103 : vector<16x512xf32>
    %106 = vector.extract_strided_slice %105 {offsets = [0, 0], sizes = [16, 128], strides = [1, 1]} : vector<16x512xf32> to vector<16x128xf32>
    %cst_47 = arith.constant 5.000000e-01 : f32
    %107 = vector.broadcast %cst_47 : f32 to vector<16x128xf32>
    %108 = arith.mulf %107, %106 : vector<16x128xf32>
    %109 = math.tanh %108 : vector<16x128xf32>
    %cst_48 = arith.constant 5.000000e-01 : f32
    %110 = vector.broadcast %cst_48 : f32 to vector<16x128xf32>
    %111 = arith.mulf %110, %109 : vector<16x128xf32>
    %cst_49 = arith.constant 5.000000e-01 : f32
    %112 = vector.broadcast %cst_49 : f32 to vector<16x128xf32>
    %113 = arith.addf %111, %112 : vector<16x128xf32>
    %114 = vector.extract_strided_slice %105 {offsets = [0, 128], sizes = [16, 128], strides = [1, 1]} : vector<16x512xf32> to vector<16x128xf32>
    %cst_50 = arith.constant 5.000000e-01 : f32
    %115 = vector.broadcast %cst_50 : f32 to vector<16x128xf32>
    %116 = arith.mulf %115, %114 : vector<16x128xf32>
    %117 = math.tanh %116 : vector<16x128xf32>
    %cst_51 = arith.constant 5.000000e-01 : f32
    %118 = vector.broadcast %cst_51 : f32 to vector<16x128xf32>
    %119 = arith.mulf %118, %117 : vector<16x128xf32>
    %cst_52 = arith.constant 5.000000e-01 : f32
    %120 = vector.broadcast %cst_52 : f32 to vector<16x128xf32>
    %121 = arith.addf %119, %120 : vector<16x128xf32>
    %122 = vector.extract_strided_slice %105 {offsets = [0, 256], sizes = [16, 128], strides = [1, 1]} : vector<16x512xf32> to vector<16x128xf32>
    %123 = math.tanh %122 : vector<16x128xf32>
    %124 = vector.extract_strided_slice %105 {offsets = [0, 384], sizes = [16, 128], strides = [1, 1]} : vector<16x512xf32> to vector<16x128xf32>
    %cst_53 = arith.constant 5.000000e-01 : f32
    %125 = vector.broadcast %cst_53 : f32 to vector<16x128xf32>
    %126 = arith.mulf %125, %124 : vector<16x128xf32>
    %127 = math.tanh %126 : vector<16x128xf32>
    %cst_54 = arith.constant 5.000000e-01 : f32
    %128 = vector.broadcast %cst_54 : f32 to vector<16x128xf32>
    %129 = arith.mulf %128, %127 : vector<16x128xf32>
    %cst_55 = arith.constant 5.000000e-01 : f32
    %130 = vector.broadcast %cst_55 : f32 to vector<16x128xf32>
    %131 = arith.addf %129, %130 : vector<16x128xf32>
    %132 = arith.mulf %121, %92 : vector<16x128xf32>
    %133 = arith.mulf %113, %123 : vector<16x128xf32>
    %134 = arith.addf %132, %133 : vector<16x128xf32>
    %135 = math.tanh %134 : vector<16x128xf32>
    %136 = arith.mulf %131, %135 : vector<16x128xf32>
    %137 = arith.truncf %136 : vector<16x128xf32> to vector<16x128xbf16>
    %138 = arith.index_cast %c2_i32 : i32 to index
    %c0_56 = arith.constant 0 : index
    %c0_57 = arith.constant 0 : index
    %139 = vector.load %arg8[%138, %c0_56, %c0_57] : memref<8x16x128xbf16, #tpu.memory_space<vmem>>, vector<1x16x128xbf16>
    %140 = vector.shape_cast %139 : vector<1x16x128xbf16> to vector<16x128xbf16>
    %141 = vector.shape_cast %137 : vector<16x128xbf16> to vector<1x16x128xbf16>
    tpu.vector_store %arg8[%138, %c0_56, %c0_57], %141 {strides = array<i32>} : memref<8x16x128xbf16, #tpu.memory_space<vmem>>, vector<1x16x128xbf16>,
    %c3_i32 = arith.constant 3 : i32
    %142 = arith.index_cast %c3_i32 : i32 to index
    %c0_58 = arith.constant 0 : index
    %c0_59 = arith.constant 0 : index
    %143 = vector.load %arg9[%142, %c0_58, %c0_59] : memref<8x16x512xbf16, #tpu.memory_space<vmem>>, vector<1x16x512xbf16>
    %144 = vector.shape_cast %143 : vector<1x16x512xbf16> to vector<16x512xbf16>
    %cst_60 = arith.constant dense<0.000000e+00> : vector<16x512xf32>
    %145 = tpu.matmul %137, %13, %cst_60 {dimension_numbers = #tpu.dot_dimension_numbers<[1], [0], [0], [1], [0, 0, 1, 1], [], []>} : vector<16x128xbf16>, vector<128x512xbf16>, vector<16x512xf32> -> vector<16x512xf32>
    %146 = arith.extf %144 : vector<16x512xbf16> to vector<16x512xf32>
    %147 = arith.addf %146, %145 : vector<16x512xf32>
    %148 = vector.extract_strided_slice %147 {offsets = [0, 0], sizes = [16, 128], strides = [1, 1]} : vector<16x512xf32> to vector<16x128xf32>
    %cst_61 = arith.constant 5.000000e-01 : f32
    %149 = vector.broadcast %cst_61 : f32 to vector<16x128xf32>
    %150 = arith.mulf %149, %148 : vector<16x128xf32>
    %151 = math.tanh %150 : vector<16x128xf32>
    %cst_62 = arith.constant 5.000000e-01 : f32
    %152 = vector.broadcast %cst_62 : f32 to vector<16x128xf32>
    %153 = arith.mulf %152, %151 : vector<16x128xf32>
    %cst_63 = arith.constant 5.000000e-01 : f32
    %154 = vector.broadcast %cst_63 : f32 to vector<16x128xf32>
    %155 = arith.addf %153, %154 : vector<16x128xf32>
    %156 = vector.extract_strided_slice %147 {offsets = [0, 128], sizes = [16, 128], strides = [1, 1]} : vector<16x512xf32> to vector<16x128xf32>
    %cst_64 = arith.constant 5.000000e-01 : f32
    %157 = vector.broadcast %cst_64 : f32 to vector<16x128xf32>
    %158 = arith.mulf %157, %156 : vector<16x128xf32>
    %159 = math.tanh %158 : vector<16x128xf32>
    %cst_65 = arith.constant 5.000000e-01 : f32
    %160 = vector.broadcast %cst_65 : f32 to vector<16x128xf32>
    %161 = arith.mulf %160, %159 : vector<16x128xf32>
    %cst_66 = arith.constant 5.000000e-01 : f32
    %162 = vector.broadcast %cst_66 : f32 to vector<16x128xf32>
    %163 = arith.addf %161, %162 : vector<16x128xf32>
    %164 = vector.extract_strided_slice %147 {offsets = [0, 256], sizes = [16, 128], strides = [1, 1]} : vector<16x512xf32> to vector<16x128xf32>
    %165 = math.tanh %164 : vector<16x128xf32>
    %166 = vector.extract_strided_slice %147 {offsets = [0, 384], sizes = [16, 128], strides = [1, 1]} : vector<16x512xf32> to vector<16x128xf32>
    %cst_67 = arith.constant 5.000000e-01 : f32
    %167 = vector.broadcast %cst_67 : f32 to vector<16x128xf32>
    %168 = arith.mulf %167, %166 : vector<16x128xf32>
    %169 = math.tanh %168 : vector<16x128xf32>
    %cst_68 = arith.constant 5.000000e-01 : f32
    %170 = vector.broadcast %cst_68 : f32 to vector<16x128xf32>
    %171 = arith.mulf %170, %169 : vector<16x128xf32>
    %cst_69 = arith.constant 5.000000e-01 : f32
    %172 = vector.broadcast %cst_69 : f32 to vector<16x128xf32>
    %173 = arith.addf %171, %172 : vector<16x128xf32>
    %174 = arith.mulf %163, %134 : vector<16x128xf32>
    %175 = arith.mulf %155, %165 : vector<16x128xf32>
    %176 = arith.addf %174, %175 : vector<16x128xf32>
    %177 = math.tanh %176 : vector<16x128xf32>
    %178 = arith.mulf %173, %177 : vector<16x128xf32>
    %179 = arith.truncf %178 : vector<16x128xf32> to vector<16x128xbf16>
    %180 = arith.index_cast %c3_i32 : i32 to index
    %c0_70 = arith.constant 0 : index
    %c0_71 = arith.constant 0 : index
    %181 = vector.load %arg8[%180, %c0_70, %c0_71] : memref<8x16x128xbf16, #tpu.memory_space<vmem>>, vector<1x16x128xbf16>
    %182 = vector.shape_cast %181 : vector<1x16x128xbf16> to vector<16x128xbf16>
    %183 = vector.shape_cast %179 : vector<16x128xbf16> to vector<1x16x128xbf16>
    tpu.vector_store %arg8[%180, %c0_70, %c0_71], %183 {strides = array<i32>} : memref<8x16x128xbf16, #tpu.memory_space<vmem>>, vector<1x16x128xbf16>,
    %c4_i32 = arith.constant 4 : i32
    %184 = arith.index_cast %c4_i32 : i32 to index
    %c0_72 = arith.constant 0 : index
    %c0_73 = arith.constant 0 : index
    %185 = vector.load %arg9[%184, %c0_72, %c0_73] : memref<8x16x512xbf16, #tpu.memory_space<vmem>>, vector<1x16x512xbf16>
    %186 = vector.shape_cast %185 : vector<1x16x512xbf16> to vector<16x512xbf16>
    %cst_74 = arith.constant dense<0.000000e+00> : vector<16x512xf32>
    %187 = tpu.matmul %179, %13, %cst_74 {dimension_numbers = #tpu.dot_dimension_numbers<[1], [0], [0], [1], [0, 0, 1, 1], [], []>} : vector<16x128xbf16>, vector<128x512xbf16>, vector<16x512xf32> -> vector<16x512xf32>
    %188 = arith.extf %186 : vector<16x512xbf16> to vector<16x512xf32>
    %189 = arith.addf %188, %187 : vector<16x512xf32>
    %190 = vector.extract_strided_slice %189 {offsets = [0, 0], sizes = [16, 128], strides = [1, 1]} : vector<16x512xf32> to vector<16x128xf32>
    %cst_75 = arith.constant 5.000000e-01 : f32
    %191 = vector.broadcast %cst_75 : f32 to vector<16x128xf32>
    %192 = arith.mulf %191, %190 : vector<16x128xf32>
    %193 = math.tanh %192 : vector<16x128xf32>
    %cst_76 = arith.constant 5.000000e-01 : f32
    %194 = vector.broadcast %cst_76 : f32 to vector<16x128xf32>
    %195 = arith.mulf %194, %193 : vector<16x128xf32>
    %cst_77 = arith.constant 5.000000e-01 : f32
    %196 = vector.broadcast %cst_77 : f32 to vector<16x128xf32>
    %197 = arith.addf %195, %196 : vector<16x128xf32>
    %198 = vector.extract_strided_slice %189 {offsets = [0, 128], sizes = [16, 128], strides = [1, 1]} : vector<16x512xf32> to vector<16x128xf32>
    %cst_78 = arith.constant 5.000000e-01 : f32
    %199 = vector.broadcast %cst_78 : f32 to vector<16x128xf32>
    %200 = arith.mulf %199, %198 : vector<16x128xf32>
    %201 = math.tanh %200 : vector<16x128xf32>
    %cst_79 = arith.constant 5.000000e-01 : f32
    %202 = vector.broadcast %cst_79 : f32 to vector<16x128xf32>
    %203 = arith.mulf %202, %201 : vector<16x128xf32>
    %cst_80 = arith.constant 5.000000e-01 : f32
    %204 = vector.broadcast %cst_80 : f32 to vector<16x128xf32>
    %205 = arith.addf %203, %204 : vector<16x128xf32>
    %206 = vector.extract_strided_slice %189 {offsets = [0, 256], sizes = [16, 128], strides = [1, 1]} : vector<16x512xf32> to vector<16x128xf32>
    %207 = math.tanh %206 : vector<16x128xf32>
    %208 = vector.extract_strided_slice %189 {offsets = [0, 384], sizes = [16, 128], strides = [1, 1]} : vector<16x512xf32> to vector<16x128xf32>
    %cst_81 = arith.constant 5.000000e-01 : f32
    %209 = vector.broadcast %cst_81 : f32 to vector<16x128xf32>
    %210 = arith.mulf %209, %208 : vector<16x128xf32>
    %211 = math.tanh %210 : vector<16x128xf32>
    %cst_82 = arith.constant 5.000000e-01 : f32
    %212 = vector.broadcast %cst_82 : f32 to vector<16x128xf32>
    %213 = arith.mulf %212, %211 : vector<16x128xf32>
    %cst_83 = arith.constant 5.000000e-01 : f32
    %214 = vector.broadcast %cst_83 : f32 to vector<16x128xf32>
    %215 = arith.addf %213, %214 : vector<16x128xf32>
    %216 = arith.mulf %205, %176 : vector<16x128xf32>
    %217 = arith.mulf %197, %207 : vector<16x128xf32>
    %218 = arith.addf %216, %217 : vector<16x128xf32>
    %219 = math.tanh %218 : vector<16x128xf32>
    %220 = arith.mulf %215, %219 : vector<16x128xf32>
    %221 = arith.truncf %220 : vector<16x128xf32> to vector<16x128xbf16>
    %222 = arith.index_cast %c4_i32 : i32 to index
    %c0_84 = arith.constant 0 : index
    %c0_85 = arith.constant 0 : index
    %223 = vector.load %arg8[%222, %c0_84, %c0_85] : memref<8x16x128xbf16, #tpu.memory_space<vmem>>, vector<1x16x128xbf16>
    %224 = vector.shape_cast %223 : vector<1x16x128xbf16> to vector<16x128xbf16>
    %225 = vector.shape_cast %221 : vector<16x128xbf16> to vector<1x16x128xbf16>
    tpu.vector_store %arg8[%222, %c0_84, %c0_85], %225 {strides = array<i32>} : memref<8x16x128xbf16, #tpu.memory_space<vmem>>, vector<1x16x128xbf16>,
    %c5_i32 = arith.constant 5 : i32
    %226 = arith.index_cast %c5_i32 : i32 to index
    %c0_86 = arith.constant 0 : index
    %c0_87 = arith.constant 0 : index
    %227 = vector.load %arg9[%226, %c0_86, %c0_87] : memref<8x16x512xbf16, #tpu.memory_space<vmem>>, vector<1x16x512xbf16>
    %228 = vector.shape_cast %227 : vector<1x16x512xbf16> to vector<16x512xbf16>
    %cst_88 = arith.constant dense<0.000000e+00> : vector<16x512xf32>
    %229 = tpu.matmul %221, %13, %cst_88 {dimension_numbers = #tpu.dot_dimension_numbers<[1], [0], [0], [1], [0, 0, 1, 1], [], []>} : vector<16x128xbf16>, vector<128x512xbf16>, vector<16x512xf32> -> vector<16x512xf32>
    %230 = arith.extf %228 : vector<16x512xbf16> to vector<16x512xf32>
    %231 = arith.addf %230, %229 : vector<16x512xf32>
    %232 = vector.extract_strided_slice %231 {offsets = [0, 0], sizes = [16, 128], strides = [1, 1]} : vector<16x512xf32> to vector<16x128xf32>
    %cst_89 = arith.constant 5.000000e-01 : f32
    %233 = vector.broadcast %cst_89 : f32 to vector<16x128xf32>
    %234 = arith.mulf %233, %232 : vector<16x128xf32>
    %235 = math.tanh %234 : vector<16x128xf32>
    %cst_90 = arith.constant 5.000000e-01 : f32
    %236 = vector.broadcast %cst_90 : f32 to vector<16x128xf32>
    %237 = arith.mulf %236, %235 : vector<16x128xf32>
    %cst_91 = arith.constant 5.000000e-01 : f32
    %238 = vector.broadcast %cst_91 : f32 to vector<16x128xf32>
    %239 = arith.addf %237, %238 : vector<16x128xf32>
    %240 = vector.extract_strided_slice %231 {offsets = [0, 128], sizes = [16, 128], strides = [1, 1]} : vector<16x512xf32> to vector<16x128xf32>
    %cst_92 = arith.constant 5.000000e-01 : f32
    %241 = vector.broadcast %cst_92 : f32 to vector<16x128xf32>
    %242 = arith.mulf %241, %240 : vector<16x128xf32>
    %243 = math.tanh %242 : vector<16x128xf32>
    %cst_93 = arith.constant 5.000000e-01 : f32
    %244 = vector.broadcast %cst_93 : f32 to vector<16x128xf32>
    %245 = arith.mulf %244, %243 : vector<16x128xf32>
    %cst_94 = arith.constant 5.000000e-01 : f32
    %246 = vector.broadcast %cst_94 : f32 to vector<16x128xf32>
    %247 = arith.addf %245, %246 : vector<16x128xf32>
    %248 = vector.extract_strided_slice %231 {offsets = [0, 256], sizes = [16, 128], strides = [1, 1]} : vector<16x512xf32> to vector<16x128xf32>
    %249 = math.tanh %248 : vector<16x128xf32>
    %250 = vector.extract_strided_slice %231 {offsets = [0, 384], sizes = [16, 128], strides = [1, 1]} : vector<16x512xf32> to vector<16x128xf32>
    %cst_95 = arith.constant 5.000000e-01 : f32
    %251 = vector.broadcast %cst_95 : f32 to vector<16x128xf32>
    %252 = arith.mulf %251, %250 : vector<16x128xf32>
    %253 = math.tanh %252 : vector<16x128xf32>
    %cst_96 = arith.constant 5.000000e-01 : f32
    %254 = vector.broadcast %cst_96 : f32 to vector<16x128xf32>
    %255 = arith.mulf %254, %253 : vector<16x128xf32>
    %cst_97 = arith.constant 5.000000e-01 : f32
    %256 = vector.broadcast %cst_97 : f32 to vector<16x128xf32>
    %257 = arith.addf %255, %256 : vector<16x128xf32>
    %258 = arith.mulf %247, %218 : vector<16x128xf32>
    %259 = arith.mulf %239, %249 : vector<16x128xf32>
    %260 = arith.addf %258, %259 : vector<16x128xf32>
    %261 = math.tanh %260 : vector<16x128xf32>
    %262 = arith.mulf %257, %261 : vector<16x128xf32>
    %263 = arith.truncf %262 : vector<16x128xf32> to vector<16x128xbf16>
    %264 = arith.index_cast %c5_i32 : i32 to index
    %c0_98 = arith.constant 0 : index
    %c0_99 = arith.constant 0 : index
    %265 = vector.load %arg8[%264, %c0_98, %c0_99] : memref<8x16x128xbf16, #tpu.memory_space<vmem>>, vector<1x16x128xbf16>
    %266 = vector.shape_cast %265 : vector<1x16x128xbf16> to vector<16x128xbf16>
    %267 = vector.shape_cast %263 : vector<16x128xbf16> to vector<1x16x128xbf16>
    tpu.vector_store %arg8[%264, %c0_98, %c0_99], %267 {strides = array<i32>} : memref<8x16x128xbf16, #tpu.memory_space<vmem>>, vector<1x16x128xbf16>,
    %c6_i32 = arith.constant 6 : i32
    %268 = arith.index_cast %c6_i32 : i32 to index
    %c0_100 = arith.constant 0 : index
    %c0_101 = arith.constant 0 : index
    %269 = vector.load %arg9[%268, %c0_100, %c0_101] : memref<8x16x512xbf16, #tpu.memory_space<vmem>>, vector<1x16x512xbf16>
    %270 = vector.shape_cast %269 : vector<1x16x512xbf16> to vector<16x512xbf16>
    %cst_102 = arith.constant dense<0.000000e+00> : vector<16x512xf32>
    %271 = tpu.matmul %263, %13, %cst_102 {dimension_numbers = #tpu.dot_dimension_numbers<[1], [0], [0], [1], [0, 0, 1, 1], [], []>} : vector<16x128xbf16>, vector<128x512xbf16>, vector<16x512xf32> -> vector<16x512xf32>
    %272 = arith.extf %270 : vector<16x512xbf16> to vector<16x512xf32>
    %273 = arith.addf %272, %271 : vector<16x512xf32>
    %274 = vector.extract_strided_slice %273 {offsets = [0, 0], sizes = [16, 128], strides = [1, 1]} : vector<16x512xf32> to vector<16x128xf32>
    %cst_103 = arith.constant 5.000000e-01 : f32
    %275 = vector.broadcast %cst_103 : f32 to vector<16x128xf32>
    %276 = arith.mulf %275, %274 : vector<16x128xf32>
    %277 = math.tanh %276 : vector<16x128xf32>
    %cst_104 = arith.constant 5.000000e-01 : f32
    %278 = vector.broadcast %cst_104 : f32 to vector<16x128xf32>
    %279 = arith.mulf %278, %277 : vector<16x128xf32>
    %cst_105 = arith.constant 5.000000e-01 : f32
    %280 = vector.broadcast %cst_105 : f32 to vector<16x128xf32>
    %281 = arith.addf %279, %280 : vector<16x128xf32>
    %282 = vector.extract_strided_slice %273 {offsets = [0, 128], sizes = [16, 128], strides = [1, 1]} : vector<16x512xf32> to vector<16x128xf32>
    %cst_106 = arith.constant 5.000000e-01 : f32
    %283 = vector.broadcast %cst_106 : f32 to vector<16x128xf32>
    %284 = arith.mulf %283, %282 : vector<16x128xf32>
    %285 = math.tanh %284 : vector<16x128xf32>
    %cst_107 = arith.constant 5.000000e-01 : f32
    %286 = vector.broadcast %cst_107 : f32 to vector<16x128xf32>
    %287 = arith.mulf %286, %285 : vector<16x128xf32>
    %cst_108 = arith.constant 5.000000e-01 : f32
    %288 = vector.broadcast %cst_108 : f32 to vector<16x128xf32>
    %289 = arith.addf %287, %288 : vector<16x128xf32>
    %290 = vector.extract_strided_slice %273 {offsets = [0, 256], sizes = [16, 128], strides = [1, 1]} : vector<16x512xf32> to vector<16x128xf32>
    %291 = math.tanh %290 : vector<16x128xf32>
    %292 = vector.extract_strided_slice %273 {offsets = [0, 384], sizes = [16, 128], strides = [1, 1]} : vector<16x512xf32> to vector<16x128xf32>
    %cst_109 = arith.constant 5.000000e-01 : f32
    %293 = vector.broadcast %cst_109 : f32 to vector<16x128xf32>
    %294 = arith.mulf %293, %292 : vector<16x128xf32>
    %295 = math.tanh %294 : vector<16x128xf32>
    %cst_110 = arith.constant 5.000000e-01 : f32
    %296 = vector.broadcast %cst_110 : f32 to vector<16x128xf32>
    %297 = arith.mulf %296, %295 : vector<16x128xf32>
    %cst_111 = arith.constant 5.000000e-01 : f32
    %298 = vector.broadcast %cst_111 : f32 to vector<16x128xf32>
    %299 = arith.addf %297, %298 : vector<16x128xf32>
    %300 = arith.mulf %289, %260 : vector<16x128xf32>
    %301 = arith.mulf %281, %291 : vector<16x128xf32>
    %302 = arith.addf %300, %301 : vector<16x128xf32>
    %303 = math.tanh %302 : vector<16x128xf32>
    %304 = arith.mulf %299, %303 : vector<16x128xf32>
    %305 = arith.truncf %304 : vector<16x128xf32> to vector<16x128xbf16>
    %306 = arith.index_cast %c6_i32 : i32 to index
    %c0_112 = arith.constant 0 : index
    %c0_113 = arith.constant 0 : index
    %307 = vector.load %arg8[%306, %c0_112, %c0_113] : memref<8x16x128xbf16, #tpu.memory_space<vmem>>, vector<1x16x128xbf16>
    %308 = vector.shape_cast %307 : vector<1x16x128xbf16> to vector<16x128xbf16>
    %309 = vector.shape_cast %305 : vector<16x128xbf16> to vector<1x16x128xbf16>
    tpu.vector_store %arg8[%306, %c0_112, %c0_113], %309 {strides = array<i32>} : memref<8x16x128xbf16, #tpu.memory_space<vmem>>, vector<1x16x128xbf16>,
    %c7_i32 = arith.constant 7 : i32
    %310 = arith.index_cast %c7_i32 : i32 to index
    %c0_114 = arith.constant 0 : index
    %c0_115 = arith.constant 0 : index
    %311 = vector.load %arg9[%310, %c0_114, %c0_115] : memref<8x16x512xbf16, #tpu.memory_space<vmem>>, vector<1x16x512xbf16>
    %312 = vector.shape_cast %311 : vector<1x16x512xbf16> to vector<16x512xbf16>
    %cst_116 = arith.constant dense<0.000000e+00> : vector<16x512xf32>
    %313 = tpu.matmul %305, %13, %cst_116 {dimension_numbers = #tpu.dot_dimension_numbers<[1], [0], [0], [1], [0, 0, 1, 1], [], []>} : vector<16x128xbf16>, vector<128x512xbf16>, vector<16x512xf32> -> vector<16x512xf32>
    %314 = arith.extf %312 : vector<16x512xbf16> to vector<16x512xf32>
    %315 = arith.addf %314, %313 : vector<16x512xf32>
    %316 = vector.extract_strided_slice %315 {offsets = [0, 0], sizes = [16, 128], strides = [1, 1]} : vector<16x512xf32> to vector<16x128xf32>
    %cst_117 = arith.constant 5.000000e-01 : f32
    %317 = vector.broadcast %cst_117 : f32 to vector<16x128xf32>
    %318 = arith.mulf %317, %316 : vector<16x128xf32>
    %319 = math.tanh %318 : vector<16x128xf32>
    %cst_118 = arith.constant 5.000000e-01 : f32
    %320 = vector.broadcast %cst_118 : f32 to vector<16x128xf32>
    %321 = arith.mulf %320, %319 : vector<16x128xf32>
    %cst_119 = arith.constant 5.000000e-01 : f32
    %322 = vector.broadcast %cst_119 : f32 to vector<16x128xf32>
    %323 = arith.addf %321, %322 : vector<16x128xf32>
    %324 = vector.extract_strided_slice %315 {offsets = [0, 128], sizes = [16, 128], strides = [1, 1]} : vector<16x512xf32> to vector<16x128xf32>
    %cst_120 = arith.constant 5.000000e-01 : f32
    %325 = vector.broadcast %cst_120 : f32 to vector<16x128xf32>
    %326 = arith.mulf %325, %324 : vector<16x128xf32>
    %327 = math.tanh %326 : vector<16x128xf32>
    %cst_121 = arith.constant 5.000000e-01 : f32
    %328 = vector.broadcast %cst_121 : f32 to vector<16x128xf32>
    %329 = arith.mulf %328, %327 : vector<16x128xf32>
    %cst_122 = arith.constant 5.000000e-01 : f32
    %330 = vector.broadcast %cst_122 : f32 to vector<16x128xf32>
    %331 = arith.addf %329, %330 : vector<16x128xf32>
    %332 = vector.extract_strided_slice %315 {offsets = [0, 256], sizes = [16, 128], strides = [1, 1]} : vector<16x512xf32> to vector<16x128xf32>
    %333 = math.tanh %332 : vector<16x128xf32>
    %334 = vector.extract_strided_slice %315 {offsets = [0, 384], sizes = [16, 128], strides = [1, 1]} : vector<16x512xf32> to vector<16x128xf32>
    %cst_123 = arith.constant 5.000000e-01 : f32
    %335 = vector.broadcast %cst_123 : f32 to vector<16x128xf32>
    %336 = arith.mulf %335, %334 : vector<16x128xf32>
    %337 = math.tanh %336 : vector<16x128xf32>
    %cst_124 = arith.constant 5.000000e-01 : f32
    %338 = vector.broadcast %cst_124 : f32 to vector<16x128xf32>
    %339 = arith.mulf %338, %337 : vector<16x128xf32>
    %cst_125 = arith.constant 5.000000e-01 : f32
    %340 = vector.broadcast %cst_125 : f32 to vector<16x128xf32>
    %341 = arith.addf %339, %340 : vector<16x128xf32>
    %342 = arith.mulf %331, %302 : vector<16x128xf32>
    %343 = arith.mulf %323, %333 : vector<16x128xf32>
    %344 = arith.addf %342, %343 : vector<16x128xf32>
    %345 = math.tanh %344 : vector<16x128xf32>
    %346 = arith.mulf %341, %345 : vector<16x128xf32>
    %347 = arith.truncf %346 : vector<16x128xf32> to vector<16x128xbf16>
    %348 = arith.index_cast %c7_i32 : i32 to index
    %c0_126 = arith.constant 0 : index
    %c0_127 = arith.constant 0 : index
    %349 = vector.load %arg8[%348, %c0_126, %c0_127] : memref<8x16x128xbf16, #tpu.memory_space<vmem>>, vector<1x16x128xbf16>
    %350 = vector.shape_cast %349 : vector<1x16x128xbf16> to vector<16x128xbf16>
    %351 = vector.shape_cast %347 : vector<16x128xbf16> to vector<1x16x128xbf16>
    tpu.vector_store %arg8[%348, %c0_126, %c0_127], %351 {strides = array<i32>} : memref<8x16x128xbf16, #tpu.memory_space<vmem>>, vector<1x16x128xbf16>,
    %c8_i32 = arith.constant 8 : i32
    %c0_128 = arith.constant 0 : index
    %c0_129 = arith.constant 0 : index
    %c0_130 = arith.constant 0 : index
    %352 = vector.load %arg8[%c0_128, %c0_129, %c0_130] : memref<8x16x128xbf16, #tpu.memory_space<vmem>>, vector<8x16x128xbf16>
    %353 = vector.shape_cast %352 : vector<8x16x128xbf16> to vector<128x128xbf16>
    %c1 = arith.constant 1 : index
    %c0_131 = arith.constant 0 : index
    %c0_132 = arith.constant 0 : index
    %354 = vector.load %arg2[%c1, %c0_131, %c0_132] : memref<2x128x512xbf16, #tpu.memory_space<vmem>>, vector<1x128x512xbf16>
    %355 = vector.shape_cast %354 : vector<1x128x512xbf16> to vector<128x512xbf16>
    %cst_133 = arith.constant dense<0.000000e+00> : vector<128x512xf32>
    %356 = tpu.matmul %353, %355, %cst_133 {dimension_numbers = #tpu.dot_dimension_numbers<[1], [0], [0], [1], [0, 0, 1, 1], [], []>} : vector<128x128xbf16>, vector<128x512xbf16>, vector<128x512xf32> -> vector<128x512xf32>
    %c1_134 = arith.constant 1 : index
    %c0_135 = arith.constant 0 : index
    %c0_136 = arith.constant 0 : index
    %357 = vector.load %arg4[%c1_134, %c0_135, %c0_136] : memref<2x1x512xf32, #tpu.memory_space<vmem>>, vector<1x1x512xf32>
    %358 = vector.shape_cast %357 : vector<1x1x512xf32> to vector<1x512xf32>
    %359 = vector.broadcast %358 : vector<1x512xf32> to vector<128x512xf32>
    %360 = arith.addf %356, %359 : vector<128x512xf32>
    %361 = vector.shape_cast %360 : vector<128x512xf32> to vector<8x16x512xf32>
    %362 = arith.truncf %361 : vector<8x16x512xf32> to vector<8x16x512xbf16>
    %c0_137 = arith.constant 0 : index
    %c0_138 = arith.constant 0 : index
    %c0_139 = arith.constant 0 : index
    %363 = vector.load %arg9[%c0_137, %c0_138, %c0_139] : memref<8x16x512xbf16, #tpu.memory_space<vmem>>, vector<8x16x512xbf16>
    tpu.vector_store %arg9[%c0_137, %c0_138, %c0_139], %362 {strides = array<i32>} : memref<8x16x512xbf16, #tpu.memory_space<vmem>>, vector<8x16x512xbf16>,
    %c1_140 = arith.constant 1 : index
    %c0_141 = arith.constant 0 : index
    %c0_142 = arith.constant 0 : index
    %364 = vector.load %arg3[%c1_140, %c0_141, %c0_142] : memref<2x128x512xbf16, #tpu.memory_space<vmem>>, vector<1x128x512xbf16>
    %365 = vector.shape_cast %364 : vector<1x128x512xbf16> to vector<128x512xbf16>
    %cst_143 = arith.constant 0.000000e+00 : bf16
    %366 = vector.broadcast %cst_143 : bf16 to vector<16x128xbf16>
    %cst_144 = arith.constant 0.000000e+00 : f32
    %367 = vector.broadcast %cst_144 : f32 to vector<16x128xf32>
    %c0_i32_145 = arith.constant 0 : i32
    %368 = arith.index_cast %c0_i32_145 : i32 to index
    %c0_146 = arith.constant 0 : index
    %c0_147 = arith.constant 0 : index
    %369 = vector.load %arg9[%368, %c0_146, %c0_147] : memref<8x16x512xbf16, #tpu.memory_space<vmem>>, vector<1x16x512xbf16>
    %370 = vector.shape_cast %369 : vector<1x16x512xbf16> to vector<16x512xbf16>
    %cst_148 = arith.constant dense<0.000000e+00> : vector<16x512xf32>
    %371 = tpu.matmul %366, %365, %cst_148 {dimension_numbers = #tpu.dot_dimension_numbers<[1], [0], [0], [1], [0, 0, 1, 1], [], []>} : vector<16x128xbf16>, vector<128x512xbf16>, vector<16x512xf32> -> vector<16x512xf32>
    %372 = arith.extf %370 : vector<16x512xbf16> to vector<16x512xf32>
    %373 = arith.addf %372, %371 : vector<16x512xf32>
    %374 = vector.extract_strided_slice %373 {offsets = [0, 0], sizes = [16, 128], strides = [1, 1]} : vector<16x512xf32> to vector<16x128xf32>
    %cst_149 = arith.constant 5.000000e-01 : f32
    %375 = vector.broadcast %cst_149 : f32 to vector<16x128xf32>
    %376 = arith.mulf %375, %374 : vector<16x128xf32>
    %377 = math.tanh %376 : vector<16x128xf32>
    %cst_150 = arith.constant 5.000000e-01 : f32
    %378 = vector.broadcast %cst_150 : f32 to vector<16x128xf32>
    %379 = arith.mulf %378, %377 : vector<16x128xf32>
    %cst_151 = arith.constant 5.000000e-01 : f32
    %380 = vector.broadcast %cst_151 : f32 to vector<16x128xf32>
    %381 = arith.addf %379, %380 : vector<16x128xf32>
    %382 = vector.extract_strided_slice %373 {offsets = [0, 128], sizes = [16, 128], strides = [1, 1]} : vector<16x512xf32> to vector<16x128xf32>
    %cst_152 = arith.constant 5.000000e-01 : f32
    %383 = vector.broadcast %cst_152 : f32 to vector<16x128xf32>
    %384 = arith.mulf %383, %382 : vector<16x128xf32>
    %385 = math.tanh %384 : vector<16x128xf32>
    %cst_153 = arith.constant 5.000000e-01 : f32
    %386 = vector.broadcast %cst_153 : f32 to vector<16x128xf32>
    %387 = arith.mulf %386, %385 : vector<16x128xf32>
    %cst_154 = arith.constant 5.000000e-01 : f32
    %388 = vector.broadcast %cst_154 : f32 to vector<16x128xf32>
    %389 = arith.addf %387, %388 : vector<16x128xf32>
    %390 = vector.extract_strided_slice %373 {offsets = [0, 256], sizes = [16, 128], strides = [1, 1]} : vector<16x512xf32> to vector<16x128xf32>
    %391 = math.tanh %390 : vector<16x128xf32>
    %392 = vector.extract_strided_slice %373 {offsets = [0, 384], sizes = [16, 128], strides = [1, 1]} : vector<16x512xf32> to vector<16x128xf32>
    %cst_155 = arith.constant 5.000000e-01 : f32
    %393 = vector.broadcast %cst_155 : f32 to vector<16x128xf32>
    %394 = arith.mulf %393, %392 : vector<16x128xf32>
    %395 = math.tanh %394 : vector<16x128xf32>
    %cst_156 = arith.constant 5.000000e-01 : f32
    %396 = vector.broadcast %cst_156 : f32 to vector<16x128xf32>
    %397 = arith.mulf %396, %395 : vector<16x128xf32>
    %cst_157 = arith.constant 5.000000e-01 : f32
    %398 = vector.broadcast %cst_157 : f32 to vector<16x128xf32>
    %399 = arith.addf %397, %398 : vector<16x128xf32>
    %400 = arith.mulf %389, %367 : vector<16x128xf32>
    %401 = arith.mulf %381, %391 : vector<16x128xf32>
    %402 = arith.addf %400, %401 : vector<16x128xf32>
    %403 = math.tanh %402 : vector<16x128xf32>
    %404 = arith.mulf %399, %403 : vector<16x128xf32>
    %405 = arith.truncf %404 : vector<16x128xf32> to vector<16x128xbf16>
    %c1_i32_158 = arith.constant 1 : i32
    %406 = arith.index_cast %c1_i32_158 : i32 to index
    %c0_159 = arith.constant 0 : index
    %c0_160 = arith.constant 0 : index
    %407 = vector.load %arg9[%406, %c0_159, %c0_160] : memref<8x16x512xbf16, #tpu.memory_space<vmem>>, vector<1x16x512xbf16>
    %408 = vector.shape_cast %407 : vector<1x16x512xbf16> to vector<16x512xbf16>
    %cst_161 = arith.constant dense<0.000000e+00> : vector<16x512xf32>
    %409 = tpu.matmul %405, %365, %cst_161 {dimension_numbers = #tpu.dot_dimension_numbers<[1], [0], [0], [1], [0, 0, 1, 1], [], []>} : vector<16x128xbf16>, vector<128x512xbf16>, vector<16x512xf32> -> vector<16x512xf32>
    %410 = arith.extf %408 : vector<16x512xbf16> to vector<16x512xf32>
    %411 = arith.addf %410, %409 : vector<16x512xf32>
    %412 = vector.extract_strided_slice %411 {offsets = [0, 0], sizes = [16, 128], strides = [1, 1]} : vector<16x512xf32> to vector<16x128xf32>
    %cst_162 = arith.constant 5.000000e-01 : f32
    %413 = vector.broadcast %cst_162 : f32 to vector<16x128xf32>
    %414 = arith.mulf %413, %412 : vector<16x128xf32>
    %415 = math.tanh %414 : vector<16x128xf32>
    %cst_163 = arith.constant 5.000000e-01 : f32
    %416 = vector.broadcast %cst_163 : f32 to vector<16x128xf32>
    %417 = arith.mulf %416, %415 : vector<16x128xf32>
    %cst_164 = arith.constant 5.000000e-01 : f32
    %418 = vector.broadcast %cst_164 : f32 to vector<16x128xf32>
    %419 = arith.addf %417, %418 : vector<16x128xf32>
    %420 = vector.extract_strided_slice %411 {offsets = [0, 128], sizes = [16, 128], strides = [1, 1]} : vector<16x512xf32> to vector<16x128xf32>
    %cst_165 = arith.constant 5.000000e-01 : f32
    %421 = vector.broadcast %cst_165 : f32 to vector<16x128xf32>
    %422 = arith.mulf %421, %420 : vector<16x128xf32>
    %423 = math.tanh %422 : vector<16x128xf32>
    %cst_166 = arith.constant 5.000000e-01 : f32
    %424 = vector.broadcast %cst_166 : f32 to vector<16x128xf32>
    %425 = arith.mulf %424, %423 : vector<16x128xf32>
    %cst_167 = arith.constant 5.000000e-01 : f32
    %426 = vector.broadcast %cst_167 : f32 to vector<16x128xf32>
    %427 = arith.addf %425, %426 : vector<16x128xf32>
    %428 = vector.extract_strided_slice %411 {offsets = [0, 256], sizes = [16, 128], strides = [1, 1]} : vector<16x512xf32> to vector<16x128xf32>
    %429 = math.tanh %428 : vector<16x128xf32>
    %430 = vector.extract_strided_slice %411 {offsets = [0, 384], sizes = [16, 128], strides = [1, 1]} : vector<16x512xf32> to vector<16x128xf32>
    %cst_168 = arith.constant 5.000000e-01 : f32
    %431 = vector.broadcast %cst_168 : f32 to vector<16x128xf32>
    %432 = arith.mulf %431, %430 : vector<16x128xf32>
    %433 = math.tanh %432 : vector<16x128xf32>
    %cst_169 = arith.constant 5.000000e-01 : f32
    %434 = vector.broadcast %cst_169 : f32 to vector<16x128xf32>
    %435 = arith.mulf %434, %433 : vector<16x128xf32>
    %cst_170 = arith.constant 5.000000e-01 : f32
    %436 = vector.broadcast %cst_170 : f32 to vector<16x128xf32>
    %437 = arith.addf %435, %436 : vector<16x128xf32>
    %438 = arith.mulf %427, %402 : vector<16x128xf32>
    %439 = arith.mulf %419, %429 : vector<16x128xf32>
    %440 = arith.addf %438, %439 : vector<16x128xf32>
    %441 = math.tanh %440 : vector<16x128xf32>
    %442 = arith.mulf %437, %441 : vector<16x128xf32>
    %443 = arith.truncf %442 : vector<16x128xf32> to vector<16x128xbf16>
    %c2_i32_171 = arith.constant 2 : i32
    %444 = arith.index_cast %c2_i32_171 : i32 to index
    %c0_172 = arith.constant 0 : index
    %c0_173 = arith.constant 0 : index
    %445 = vector.load %arg9[%444, %c0_172, %c0_173] : memref<8x16x512xbf16, #tpu.memory_space<vmem>>, vector<1x16x512xbf16>
    %446 = vector.shape_cast %445 : vector<1x16x512xbf16> to vector<16x512xbf16>
    %cst_174 = arith.constant dense<0.000000e+00> : vector<16x512xf32>
    %447 = tpu.matmul %443, %365, %cst_174 {dimension_numbers = #tpu.dot_dimension_numbers<[1], [0], [0], [1], [0, 0, 1, 1], [], []>} : vector<16x128xbf16>, vector<128x512xbf16>, vector<16x512xf32> -> vector<16x512xf32>
    %448 = arith.extf %446 : vector<16x512xbf16> to vector<16x512xf32>
    %449 = arith.addf %448, %447 : vector<16x512xf32>
    %450 = vector.extract_strided_slice %449 {offsets = [0, 0], sizes = [16, 128], strides = [1, 1]} : vector<16x512xf32> to vector<16x128xf32>
    %cst_175 = arith.constant 5.000000e-01 : f32
    %451 = vector.broadcast %cst_175 : f32 to vector<16x128xf32>
    %452 = arith.mulf %451, %450 : vector<16x128xf32>
    %453 = math.tanh %452 : vector<16x128xf32>
    %cst_176 = arith.constant 5.000000e-01 : f32
    %454 = vector.broadcast %cst_176 : f32 to vector<16x128xf32>
    %455 = arith.mulf %454, %453 : vector<16x128xf32>
    %cst_177 = arith.constant 5.000000e-01 : f32
    %456 = vector.broadcast %cst_177 : f32 to vector<16x128xf32>
    %457 = arith.addf %455, %456 : vector<16x128xf32>
    %458 = vector.extract_strided_slice %449 {offsets = [0, 128], sizes = [16, 128], strides = [1, 1]} : vector<16x512xf32> to vector<16x128xf32>
    %cst_178 = arith.constant 5.000000e-01 : f32
    %459 = vector.broadcast %cst_178 : f32 to vector<16x128xf32>
    %460 = arith.mulf %459, %458 : vector<16x128xf32>
    %461 = math.tanh %460 : vector<16x128xf32>
    %cst_179 = arith.constant 5.000000e-01 : f32
    %462 = vector.broadcast %cst_179 : f32 to vector<16x128xf32>
    %463 = arith.mulf %462, %461 : vector<16x128xf32>
    %cst_180 = arith.constant 5.000000e-01 : f32
    %464 = vector.broadcast %cst_180 : f32 to vector<16x128xf32>
    %465 = arith.addf %463, %464 : vector<16x128xf32>
    %466 = vector.extract_strided_slice %449 {offsets = [0, 256], sizes = [16, 128], strides = [1, 1]} : vector<16x512xf32> to vector<16x128xf32>
    %467 = math.tanh %466 : vector<16x128xf32>
    %468 = vector.extract_strided_slice %449 {offsets = [0, 384], sizes = [16, 128], strides = [1, 1]} : vector<16x512xf32> to vector<16x128xf32>
    %cst_181 = arith.constant 5.000000e-01 : f32
    %469 = vector.broadcast %cst_181 : f32 to vector<16x128xf32>
    %470 = arith.mulf %469, %468 : vector<16x128xf32>
    %471 = math.tanh %470 : vector<16x128xf32>
    %cst_182 = arith.constant 5.000000e-01 : f32
    %472 = vector.broadcast %cst_182 : f32 to vector<16x128xf32>
    %473 = arith.mulf %472, %471 : vector<16x128xf32>
    %cst_183 = arith.constant 5.000000e-01 : f32
    %474 = vector.broadcast %cst_183 : f32 to vector<16x128xf32>
    %475 = arith.addf %473, %474 : vector<16x128xf32>
    %476 = arith.mulf %465, %440 : vector<16x128xf32>
    %477 = arith.mulf %457, %467 : vector<16x128xf32>
    %478 = arith.addf %476, %477 : vector<16x128xf32>
    %479 = math.tanh %478 : vector<16x128xf32>
    %480 = arith.mulf %475, %479 : vector<16x128xf32>
    %481 = arith.truncf %480 : vector<16x128xf32> to vector<16x128xbf16>
    %c3_i32_184 = arith.constant 3 : i32
    %482 = arith.index_cast %c3_i32_184 : i32 to index
    %c0_185 = arith.constant 0 : index
    %c0_186 = arith.constant 0 : index
    %483 = vector.load %arg9[%482, %c0_185, %c0_186] : memref<8x16x512xbf16, #tpu.memory_space<vmem>>, vector<1x16x512xbf16>
    %484 = vector.shape_cast %483 : vector<1x16x512xbf16> to vector<16x512xbf16>
    %cst_187 = arith.constant dense<0.000000e+00> : vector<16x512xf32>
    %485 = tpu.matmul %481, %365, %cst_187 {dimension_numbers = #tpu.dot_dimension_numbers<[1], [0], [0], [1], [0, 0, 1, 1], [], []>} : vector<16x128xbf16>, vector<128x512xbf16>, vector<16x512xf32> -> vector<16x512xf32>
    %486 = arith.extf %484 : vector<16x512xbf16> to vector<16x512xf32>
    %487 = arith.addf %486, %485 : vector<16x512xf32>
    %488 = vector.extract_strided_slice %487 {offsets = [0, 0], sizes = [16, 128], strides = [1, 1]} : vector<16x512xf32> to vector<16x128xf32>
    %cst_188 = arith.constant 5.000000e-01 : f32
    %489 = vector.broadcast %cst_188 : f32 to vector<16x128xf32>
    %490 = arith.mulf %489, %488 : vector<16x128xf32>
    %491 = math.tanh %490 : vector<16x128xf32>
    %cst_189 = arith.constant 5.000000e-01 : f32
    %492 = vector.broadcast %cst_189 : f32 to vector<16x128xf32>
    %493 = arith.mulf %492, %491 : vector<16x128xf32>
    %cst_190 = arith.constant 5.000000e-01 : f32
    %494 = vector.broadcast %cst_190 : f32 to vector<16x128xf32>
    %495 = arith.addf %493, %494 : vector<16x128xf32>
    %496 = vector.extract_strided_slice %487 {offsets = [0, 128], sizes = [16, 128], strides = [1, 1]} : vector<16x512xf32> to vector<16x128xf32>
    %cst_191 = arith.constant 5.000000e-01 : f32
    %497 = vector.broadcast %cst_191 : f32 to vector<16x128xf32>
    %498 = arith.mulf %497, %496 : vector<16x128xf32>
    %499 = math.tanh %498 : vector<16x128xf32>
    %cst_192 = arith.constant 5.000000e-01 : f32
    %500 = vector.broadcast %cst_192 : f32 to vector<16x128xf32>
    %501 = arith.mulf %500, %499 : vector<16x128xf32>
    %cst_193 = arith.constant 5.000000e-01 : f32
    %502 = vector.broadcast %cst_193 : f32 to vector<16x128xf32>
    %503 = arith.addf %501, %502 : vector<16x128xf32>
    %504 = vector.extract_strided_slice %487 {offsets = [0, 256], sizes = [16, 128], strides = [1, 1]} : vector<16x512xf32> to vector<16x128xf32>
    %505 = math.tanh %504 : vector<16x128xf32>
    %506 = vector.extract_strided_slice %487 {offsets = [0, 384], sizes = [16, 128], strides = [1, 1]} : vector<16x512xf32> to vector<16x128xf32>
    %cst_194 = arith.constant 5.000000e-01 : f32
    %507 = vector.broadcast %cst_194 : f32 to vector<16x128xf32>
    %508 = arith.mulf %507, %506 : vector<16x128xf32>
    %509 = math.tanh %508 : vector<16x128xf32>
    %cst_195 = arith.constant 5.000000e-01 : f32
    %510 = vector.broadcast %cst_195 : f32 to vector<16x128xf32>
    %511 = arith.mulf %510, %509 : vector<16x128xf32>
    %cst_196 = arith.constant 5.000000e-01 : f32
    %512 = vector.broadcast %cst_196 : f32 to vector<16x128xf32>
    %513 = arith.addf %511, %512 : vector<16x128xf32>
    %514 = arith.mulf %503, %478 : vector<16x128xf32>
    %515 = arith.mulf %495, %505 : vector<16x128xf32>
    %516 = arith.addf %514, %515 : vector<16x128xf32>
    %517 = math.tanh %516 : vector<16x128xf32>
    %518 = arith.mulf %513, %517 : vector<16x128xf32>
    %519 = arith.truncf %518 : vector<16x128xf32> to vector<16x128xbf16>
    %c4_i32_197 = arith.constant 4 : i32
    %520 = arith.index_cast %c4_i32_197 : i32 to index
    %c0_198 = arith.constant 0 : index
    %c0_199 = arith.constant 0 : index
    %521 = vector.load %arg9[%520, %c0_198, %c0_199] : memref<8x16x512xbf16, #tpu.memory_space<vmem>>, vector<1x16x512xbf16>
    %522 = vector.shape_cast %521 : vector<1x16x512xbf16> to vector<16x512xbf16>
    %cst_200 = arith.constant dense<0.000000e+00> : vector<16x512xf32>
    %523 = tpu.matmul %519, %365, %cst_200 {dimension_numbers = #tpu.dot_dimension_numbers<[1], [0], [0], [1], [0, 0, 1, 1], [], []>} : vector<16x128xbf16>, vector<128x512xbf16>, vector<16x512xf32> -> vector<16x512xf32>
    %524 = arith.extf %522 : vector<16x512xbf16> to vector<16x512xf32>
    %525 = arith.addf %524, %523 : vector<16x512xf32>
    %526 = vector.extract_strided_slice %525 {offsets = [0, 0], sizes = [16, 128], strides = [1, 1]} : vector<16x512xf32> to vector<16x128xf32>
    %cst_201 = arith.constant 5.000000e-01 : f32
    %527 = vector.broadcast %cst_201 : f32 to vector<16x128xf32>
    %528 = arith.mulf %527, %526 : vector<16x128xf32>
    %529 = math.tanh %528 : vector<16x128xf32>
    %cst_202 = arith.constant 5.000000e-01 : f32
    %530 = vector.broadcast %cst_202 : f32 to vector<16x128xf32>
    %531 = arith.mulf %530, %529 : vector<16x128xf32>
    %cst_203 = arith.constant 5.000000e-01 : f32
    %532 = vector.broadcast %cst_203 : f32 to vector<16x128xf32>
    %533 = arith.addf %531, %532 : vector<16x128xf32>
    %534 = vector.extract_strided_slice %525 {offsets = [0, 128], sizes = [16, 128], strides = [1, 1]} : vector<16x512xf32> to vector<16x128xf32>
    %cst_204 = arith.constant 5.000000e-01 : f32
    %535 = vector.broadcast %cst_204 : f32 to vector<16x128xf32>
    %536 = arith.mulf %535, %534 : vector<16x128xf32>
    %537 = math.tanh %536 : vector<16x128xf32>
    %cst_205 = arith.constant 5.000000e-01 : f32
    %538 = vector.broadcast %cst_205 : f32 to vector<16x128xf32>
    %539 = arith.mulf %538, %537 : vector<16x128xf32>
    %cst_206 = arith.constant 5.000000e-01 : f32
    %540 = vector.broadcast %cst_206 : f32 to vector<16x128xf32>
    %541 = arith.addf %539, %540 : vector<16x128xf32>
    %542 = vector.extract_strided_slice %525 {offsets = [0, 256], sizes = [16, 128], strides = [1, 1]} : vector<16x512xf32> to vector<16x128xf32>
    %543 = math.tanh %542 : vector<16x128xf32>
    %544 = vector.extract_strided_slice %525 {offsets = [0, 384], sizes = [16, 128], strides = [1, 1]} : vector<16x512xf32> to vector<16x128xf32>
    %cst_207 = arith.constant 5.000000e-01 : f32
    %545 = vector.broadcast %cst_207 : f32 to vector<16x128xf32>
    %546 = arith.mulf %545, %544 : vector<16x128xf32>
    %547 = math.tanh %546 : vector<16x128xf32>
    %cst_208 = arith.constant 5.000000e-01 : f32
    %548 = vector.broadcast %cst_208 : f32 to vector<16x128xf32>
    %549 = arith.mulf %548, %547 : vector<16x128xf32>
    %cst_209 = arith.constant 5.000000e-01 : f32
    %550 = vector.broadcast %cst_209 : f32 to vector<16x128xf32>
    %551 = arith.addf %549, %550 : vector<16x128xf32>
    %552 = arith.mulf %541, %516 : vector<16x128xf32>
    %553 = arith.mulf %533, %543 : vector<16x128xf32>
    %554 = arith.addf %552, %553 : vector<16x128xf32>
    %555 = math.tanh %554 : vector<16x128xf32>
    %556 = arith.mulf %551, %555 : vector<16x128xf32>
    %557 = arith.truncf %556 : vector<16x128xf32> to vector<16x128xbf16>
    %c5_i32_210 = arith.constant 5 : i32
    %558 = arith.index_cast %c5_i32_210 : i32 to index
    %c0_211 = arith.constant 0 : index
    %c0_212 = arith.constant 0 : index
    %559 = vector.load %arg9[%558, %c0_211, %c0_212] : memref<8x16x512xbf16, #tpu.memory_space<vmem>>, vector<1x16x512xbf16>
    %560 = vector.shape_cast %559 : vector<1x16x512xbf16> to vector<16x512xbf16>
    %cst_213 = arith.constant dense<0.000000e+00> : vector<16x512xf32>
    %561 = tpu.matmul %557, %365, %cst_213 {dimension_numbers = #tpu.dot_dimension_numbers<[1], [0], [0], [1], [0, 0, 1, 1], [], []>} : vector<16x128xbf16>, vector<128x512xbf16>, vector<16x512xf32> -> vector<16x512xf32>
    %562 = arith.extf %560 : vector<16x512xbf16> to vector<16x512xf32>
    %563 = arith.addf %562, %561 : vector<16x512xf32>
    %564 = vector.extract_strided_slice %563 {offsets = [0, 0], sizes = [16, 128], strides = [1, 1]} : vector<16x512xf32> to vector<16x128xf32>
    %cst_214 = arith.constant 5.000000e-01 : f32
    %565 = vector.broadcast %cst_214 : f32 to vector<16x128xf32>
    %566 = arith.mulf %565, %564 : vector<16x128xf32>
    %567 = math.tanh %566 : vector<16x128xf32>
    %cst_215 = arith.constant 5.000000e-01 : f32
    %568 = vector.broadcast %cst_215 : f32 to vector<16x128xf32>
    %569 = arith.mulf %568, %567 : vector<16x128xf32>
    %cst_216 = arith.constant 5.000000e-01 : f32
    %570 = vector.broadcast %cst_216 : f32 to vector<16x128xf32>
    %571 = arith.addf %569, %570 : vector<16x128xf32>
    %572 = vector.extract_strided_slice %563 {offsets = [0, 128], sizes = [16, 128], strides = [1, 1]} : vector<16x512xf32> to vector<16x128xf32>
    %cst_217 = arith.constant 5.000000e-01 : f32
    %573 = vector.broadcast %cst_217 : f32 to vector<16x128xf32>
    %574 = arith.mulf %573, %572 : vector<16x128xf32>
    %575 = math.tanh %574 : vector<16x128xf32>
    %cst_218 = arith.constant 5.000000e-01 : f32
    %576 = vector.broadcast %cst_218 : f32 to vector<16x128xf32>
    %577 = arith.mulf %576, %575 : vector<16x128xf32>
    %cst_219 = arith.constant 5.000000e-01 : f32
    %578 = vector.broadcast %cst_219 : f32 to vector<16x128xf32>
    %579 = arith.addf %577, %578 : vector<16x128xf32>
    %580 = vector.extract_strided_slice %563 {offsets = [0, 256], sizes = [16, 128], strides = [1, 1]} : vector<16x512xf32> to vector<16x128xf32>
    %581 = math.tanh %580 : vector<16x128xf32>
    %582 = vector.extract_strided_slice %563 {offsets = [0, 384], sizes = [16, 128], strides = [1, 1]} : vector<16x512xf32> to vector<16x128xf32>
    %cst_220 = arith.constant 5.000000e-01 : f32
    %583 = vector.broadcast %cst_220 : f32 to vector<16x128xf32>
    %584 = arith.mulf %583, %582 : vector<16x128xf32>
    %585 = math.tanh %584 : vector<16x128xf32>
    %cst_221 = arith.constant 5.000000e-01 : f32
    %586 = vector.broadcast %cst_221 : f32 to vector<16x128xf32>
    %587 = arith.mulf %586, %585 : vector<16x128xf32>
    %cst_222 = arith.constant 5.000000e-01 : f32
    %588 = vector.broadcast %cst_222 : f32 to vector<16x128xf32>
    %589 = arith.addf %587, %588 : vector<16x128xf32>
    %590 = arith.mulf %579, %554 : vector<16x128xf32>
    %591 = arith.mulf %571, %581 : vector<16x128xf32>
    %592 = arith.addf %590, %591 : vector<16x128xf32>
    %593 = math.tanh %592 : vector<16x128xf32>
    %594 = arith.mulf %589, %593 : vector<16x128xf32>
    %595 = arith.truncf %594 : vector<16x128xf32> to vector<16x128xbf16>
    %c6_i32_223 = arith.constant 6 : i32
    %596 = arith.index_cast %c6_i32_223 : i32 to index
    %c0_224 = arith.constant 0 : index
    %c0_225 = arith.constant 0 : index
    %597 = vector.load %arg9[%596, %c0_224, %c0_225] : memref<8x16x512xbf16, #tpu.memory_space<vmem>>, vector<1x16x512xbf16>
    %598 = vector.shape_cast %597 : vector<1x16x512xbf16> to vector<16x512xbf16>
    %cst_226 = arith.constant dense<0.000000e+00> : vector<16x512xf32>
    %599 = tpu.matmul %595, %365, %cst_226 {dimension_numbers = #tpu.dot_dimension_numbers<[1], [0], [0], [1], [0, 0, 1, 1], [], []>} : vector<16x128xbf16>, vector<128x512xbf16>, vector<16x512xf32> -> vector<16x512xf32>
    %600 = arith.extf %598 : vector<16x512xbf16> to vector<16x512xf32>
    %601 = arith.addf %600, %599 : vector<16x512xf32>
    %602 = vector.extract_strided_slice %601 {offsets = [0, 0], sizes = [16, 128], strides = [1, 1]} : vector<16x512xf32> to vector<16x128xf32>
    %cst_227 = arith.constant 5.000000e-01 : f32
    %603 = vector.broadcast %cst_227 : f32 to vector<16x128xf32>
    %604 = arith.mulf %603, %602 : vector<16x128xf32>
    %605 = math.tanh %604 : vector<16x128xf32>
    %cst_228 = arith.constant 5.000000e-01 : f32
    %606 = vector.broadcast %cst_228 : f32 to vector<16x128xf32>
    %607 = arith.mulf %606, %605 : vector<16x128xf32>
    %cst_229 = arith.constant 5.000000e-01 : f32
    %608 = vector.broadcast %cst_229 : f32 to vector<16x128xf32>
    %609 = arith.addf %607, %608 : vector<16x128xf32>
    %610 = vector.extract_strided_slice %601 {offsets = [0, 128], sizes = [16, 128], strides = [1, 1]} : vector<16x512xf32> to vector<16x128xf32>
    %cst_230 = arith.constant 5.000000e-01 : f32
    %611 = vector.broadcast %cst_230 : f32 to vector<16x128xf32>
    %612 = arith.mulf %611, %610 : vector<16x128xf32>
    %613 = math.tanh %612 : vector<16x128xf32>
    %cst_231 = arith.constant 5.000000e-01 : f32
    %614 = vector.broadcast %cst_231 : f32 to vector<16x128xf32>
    %615 = arith.mulf %614, %613 : vector<16x128xf32>
    %cst_232 = arith.constant 5.000000e-01 : f32
    %616 = vector.broadcast %cst_232 : f32 to vector<16x128xf32>
    %617 = arith.addf %615, %616 : vector<16x128xf32>
    %618 = vector.extract_strided_slice %601 {offsets = [0, 256], sizes = [16, 128], strides = [1, 1]} : vector<16x512xf32> to vector<16x128xf32>
    %619 = math.tanh %618 : vector<16x128xf32>
    %620 = vector.extract_strided_slice %601 {offsets = [0, 384], sizes = [16, 128], strides = [1, 1]} : vector<16x512xf32> to vector<16x128xf32>
    %cst_233 = arith.constant 5.000000e-01 : f32
    %621 = vector.broadcast %cst_233 : f32 to vector<16x128xf32>
    %622 = arith.mulf %621, %620 : vector<16x128xf32>
    %623 = math.tanh %622 : vector<16x128xf32>
    %cst_234 = arith.constant 5.000000e-01 : f32
    %624 = vector.broadcast %cst_234 : f32 to vector<16x128xf32>
    %625 = arith.mulf %624, %623 : vector<16x128xf32>
    %cst_235 = arith.constant 5.000000e-01 : f32
    %626 = vector.broadcast %cst_235 : f32 to vector<16x128xf32>
    %627 = arith.addf %625, %626 : vector<16x128xf32>
    %628 = arith.mulf %617, %592 : vector<16x128xf32>
    %629 = arith.mulf %609, %619 : vector<16x128xf32>
    %630 = arith.addf %628, %629 : vector<16x128xf32>
    %631 = math.tanh %630 : vector<16x128xf32>
    %632 = arith.mulf %627, %631 : vector<16x128xf32>
    %633 = arith.truncf %632 : vector<16x128xf32> to vector<16x128xbf16>
    %c7_i32_236 = arith.constant 7 : i32
    %634 = arith.index_cast %c7_i32_236 : i32 to index
    %c0_237 = arith.constant 0 : index
    %c0_238 = arith.constant 0 : index
    %635 = vector.load %arg9[%634, %c0_237, %c0_238] : memref<8x16x512xbf16, #tpu.memory_space<vmem>>, vector<1x16x512xbf16>
    %636 = vector.shape_cast %635 : vector<1x16x512xbf16> to vector<16x512xbf16>
    %cst_239 = arith.constant dense<0.000000e+00> : vector<16x512xf32>
    %637 = tpu.matmul %633, %365, %cst_239 {dimension_numbers = #tpu.dot_dimension_numbers<[1], [0], [0], [1], [0, 0, 1, 1], [], []>} : vector<16x128xbf16>, vector<128x512xbf16>, vector<16x512xf32> -> vector<16x512xf32>
    %638 = arith.extf %636 : vector<16x512xbf16> to vector<16x512xf32>
    %639 = arith.addf %638, %637 : vector<16x512xf32>
    %640 = vector.extract_strided_slice %639 {offsets = [0, 0], sizes = [16, 128], strides = [1, 1]} : vector<16x512xf32> to vector<16x128xf32>
    %cst_240 = arith.constant 5.000000e-01 : f32
    %641 = vector.broadcast %cst_240 : f32 to vector<16x128xf32>
    %642 = arith.mulf %641, %640 : vector<16x128xf32>
    %643 = math.tanh %642 : vector<16x128xf32>
    %cst_241 = arith.constant 5.000000e-01 : f32
    %644 = vector.broadcast %cst_241 : f32 to vector<16x128xf32>
    %645 = arith.mulf %644, %643 : vector<16x128xf32>
    %cst_242 = arith.constant 5.000000e-01 : f32
    %646 = vector.broadcast %cst_242 : f32 to vector<16x128xf32>
    %647 = arith.addf %645, %646 : vector<16x128xf32>
    %648 = vector.extract_strided_slice %639 {offsets = [0, 128], sizes = [16, 128], strides = [1, 1]} : vector<16x512xf32> to vector<16x128xf32>
    %cst_243 = arith.constant 5.000000e-01 : f32
    %649 = vector.broadcast %cst_243 : f32 to vector<16x128xf32>
    %650 = arith.mulf %649, %648 : vector<16x128xf32>
    %651 = math.tanh %650 : vector<16x128xf32>
    %cst_244 = arith.constant 5.000000e-01 : f32
    %652 = vector.broadcast %cst_244 : f32 to vector<16x128xf32>
    %653 = arith.mulf %652, %651 : vector<16x128xf32>
    %cst_245 = arith.constant 5.000000e-01 : f32
    %654 = vector.broadcast %cst_245 : f32 to vector<16x128xf32>
    %655 = arith.addf %653, %654 : vector<16x128xf32>
    %656 = vector.extract_strided_slice %639 {offsets = [0, 256], sizes = [16, 128], strides = [1, 1]} : vector<16x512xf32> to vector<16x128xf32>
    %657 = math.tanh %656 : vector<16x128xf32>
    %658 = vector.extract_strided_slice %639 {offsets = [0, 384], sizes = [16, 128], strides = [1, 1]} : vector<16x512xf32> to vector<16x128xf32>
    %cst_246 = arith.constant 5.000000e-01 : f32
    %659 = vector.broadcast %cst_246 : f32 to vector<16x128xf32>
    %660 = arith.mulf %659, %658 : vector<16x128xf32>
    %661 = math.tanh %660 : vector<16x128xf32>
    %cst_247 = arith.constant 5.000000e-01 : f32
    %662 = vector.broadcast %cst_247 : f32 to vector<16x128xf32>
    %663 = arith.mulf %662, %661 : vector<16x128xf32>
    %cst_248 = arith.constant 5.000000e-01 : f32
    %664 = vector.broadcast %cst_248 : f32 to vector<16x128xf32>
    %665 = arith.addf %663, %664 : vector<16x128xf32>
    %666 = arith.mulf %655, %630 : vector<16x128xf32>
    %667 = arith.mulf %647, %657 : vector<16x128xf32>
    %668 = arith.addf %666, %667 : vector<16x128xf32>
    %669 = math.tanh %668 : vector<16x128xf32>
    %670 = arith.mulf %665, %669 : vector<16x128xf32>
    %671 = arith.truncf %670 : vector<16x128xf32> to vector<16x128xbf16>
    %c8_i32_249 = arith.constant 8 : i32
    %c0_250 = arith.constant 0 : index
    %c0_251 = arith.constant 0 : index
    %672 = vector.load %arg5[%c0_250, %c0_251] : memref<128x128xbf16, #tpu.memory_space<vmem>>, vector<128x128xbf16>
    %cst_252 = arith.constant dense<0.000000e+00> : vector<16x128xf32>
    %673 = tpu.matmul %671, %672, %cst_252 {dimension_numbers = #tpu.dot_dimension_numbers<[1], [0], [0], [1], [0, 0, 1, 1], [], []>} : vector<16x128xbf16>, vector<128x128xbf16>, vector<16x128xf32> -> vector<16x128xf32>
    %c0_253 = arith.constant 0 : index
    %c0_254 = arith.constant 0 : index
    %674 = vector.load %arg6[%c0_253, %c0_254] : memref<1x128xf32, #tpu.memory_space<vmem>>, vector<1x128xf32>
    %675 = vector.broadcast %674 : vector<1x128xf32> to vector<16x128xf32>
    %676 = arith.addf %673, %675 : vector<16x128xf32>
    %c0_255 = arith.constant 0 : index
    %c0_256 = arith.constant 0 : index
    %677 = vector.load %arg7[%c0_255, %c0_256] : memref<16x128xf32, #tpu.memory_space<vmem>>, vector<16x128xf32>
    tpu.vector_store %arg7[%c0_255, %c0_256], %676 {strides = array<i32>} : memref<16x128xf32, #tpu.memory_space<vmem>>, vector<16x128xf32>,
    return
  }
  func.func @transform_0(%arg0: i32) -> (i32, i32, i32) {
    %c0_i32 = arith.constant 0 : i32
    %c0_i32_0 = arith.constant 0 : i32
    %c0_i32_1 = arith.constant 0 : i32
    return %c0_i32, %arg0, %c0_i32_0 : i32, i32, i32
  }
  func.func @transform_1(%arg0: i32) -> (i32, i32, i32) {
    %c0_i32 = arith.constant 0 : i32
    %c0_i32_0 = arith.constant 0 : i32
    %c0_i32_1 = arith.constant 0 : i32
    %c0_i32_2 = arith.constant 0 : i32
    return %c0_i32, %c0_i32_0, %c0_i32_1 : i32, i32, i32
  }
  func.func @transform_2(%arg0: i32) -> (i32, i32, i32) {
    %c0_i32 = arith.constant 0 : i32
    %c0_i32_0 = arith.constant 0 : i32
    %c0_i32_1 = arith.constant 0 : i32
    %c0_i32_2 = arith.constant 0 : i32
    return %c0_i32, %c0_i32_0, %c0_i32_1 : i32, i32, i32
  }
  func.func @transform_3(%arg0: i32) -> (i32, i32, i32) {
    %c0_i32 = arith.constant 0 : i32
    %c0_i32_0 = arith.constant 0 : i32
    %c0_i32_1 = arith.constant 0 : i32
    %c0_i32_2 = arith.constant 0 : i32
    return %c0_i32, %c0_i32_0, %c0_i32_1 : i32, i32, i32
  }
  func.func @transform_4(%arg0: i32) -> (i32, i32) {
    %c0_i32 = arith.constant 0 : i32
    %c0_i32_0 = arith.constant 0 : i32
    %c0_i32_1 = arith.constant 0 : i32
    return %c0_i32, %c0_i32_0 : i32, i32
  }
  func.func @transform_5(%arg0: i32) -> (i32, i32) {
    %c0_i32 = arith.constant 0 : i32
    %c0_i32_0 = arith.constant 0 : i32
    %c0_i32_1 = arith.constant 0 : i32
    return %c0_i32, %c0_i32_0 : i32, i32
  }
  func.func @transform_6(%arg0: i32) -> (i32, i32) {
    %c0_i32 = arith.constant 0 : i32
    %c0_i32_0 = arith.constant 0 : i32
    return %arg0, %c0_i32 : i32, i32
  }
}

</mosaic_0001>

<llo_original>
// kernel: lotto_lstm_forward.1
$region0: #{lotto_lstm_forward.1}
  #allocation0 [shape = 'u32[]', space=smem, size = 0x4, offset = 0x4, fixed_abs, tag = 'smem constant byte address 0x4 - core index']
  #allocation1 [shape = 'u32[144,128]{1,0:T(1,128)}', space=vmem, size = 0x12000, scoped, tag = 'internal scratch']
  #allocation2 [shape = 'bf16[8,16,128]{2,1,0:T(16,128)(2,1)}', space=vmem, size = 0x8000, scoped, tag = 'scratch operand']
  #allocation3 [shape = 'bf16[8,16,512]{2,1,0:T(16,128)(2,1)}', space=vmem, size = 0x20000, scoped, tag = 'scratch operand']
  %s0 = inlined_call_operand.vmem [shape: bf16[8,16,128], index: 0, kind: input, shape index: {}]
  %s1 = inlined_call_operand.hbm [shape: bf16[2,128,512], index: 1, kind: input, shape index: {}]
  %s2 = inlined_call_operand.hbm [shape: bf16[2,128,512], index: 2, kind: input, shape index: {}]
  %s3 = inlined_call_operand.vmem [shape: f32[2,1,512], index: 3, kind: input, shape index: {}]
  %s4 = inlined_call_operand.vmem [shape: bf16[128,128], index: 4, kind: input, shape index: {}]
  %s5 = inlined_call_operand.vmem [shape: f32[1,128], index: 5, kind: input, shape index: {}]
  %s6 = inlined_call_operand.vmem [shape: f32[16,128], index: 6, kind: output, shape index: {}]
  %s7 = sld [smem:[#allocation0]]
  $region42: #{lotto_lstm_forward.1} parent=0
    _
  %s9 = ssub.s32 1, %s7
  %s10 = scalar_select 0, %s9, %s7
  $region1: #{lotto_lstm_forward.1} parent=0
    #allocation4 [shape = 'u8[262144]{0}', space=vmem, size = 0x40000, scoped, tag = 'input window, operand 1, single buffered']
    #allocation5 [shape = 's32[1]{0}', space=sflag, size = 0x4, scoped, tag = 'scoped memory for lotto_lstm_forward.1']
    #allocation6 [shape = 'u8[262144]{0}', space=vmem, size = 0x40000, scoped, tag = 'input window, operand 2, single buffered']
    #allocation7 [shape = 's32[1]{0}', space=sflag, size = 0x4, scoped, tag = 'scoped memory for lotto_lstm_forward.1']
    %11 = vsyncpa [#allocation5], 0
    %12 = vsyncpa [#allocation7], 0
    // Predicated region
    $region2: #{lotto_lstm_forward.1} parent=1 // pred_check
      _
    $region3: #{lotto_lstm_forward.1} parent=1 // pred_check_branch
      %14 = sbr.rel (0) target = $region5
    $region4: #{lotto_lstm_forward.1} parent=1 // pred_region
      _
    $region5: #{lotto_lstm_forward.1} parent=1 // pred_fallthru
      _
    // Predicated region
    $region6: #{lotto_lstm_forward.1} parent=1 // pred_check
      _
    $region7: #{lotto_lstm_forward.1} parent=1 // pred_check_branch
      %16 = sbr.rel (0) target = $region9
    $region8: #{lotto_lstm_forward.1} parent=1 // pred_region
      %s18 = ssub.s32 8192, 8192
      %19 = vsyncadd [#allocation5], %s18
      %s20 = sshll.u32 [#allocation4], 4
      %s21 = int_to_ptr.vmem [resolvable:$true] %s20
      %26 = dma.hbm_to_vmem [thread:$0]  %s1, 8192, %s21, [#allocation5], 256, 256, 16
    $region9: #{lotto_lstm_forward.1} parent=1 // pred_fallthru
      _
    // Predicated region
    $region10: #{lotto_lstm_forward.1} parent=1 // pred_check
      _
    $region11: #{lotto_lstm_forward.1} parent=1 // pred_check_branch
      %28 = sbr.rel (0) target = $region13
    $region12: #{lotto_lstm_forward.1} parent=1 // pred_region
      %s30 = ssub.s32 8192, 8192
      %31 = vsyncadd [#allocation7], %s30
      %s32 = sshll.u32 [#allocation6], 4
      %s33 = int_to_ptr.vmem [resolvable:$true] %s32
      %38 = dma.hbm_to_vmem [thread:$0]  %s2, 8192, %s33, [#allocation7], 256, 256, 16
    $region13: #{lotto_lstm_forward.1} parent=1 // pred_fallthru
      _
    // Predicated region
    $region14: #{lotto_lstm_forward.1} parent=1 // pred_check
      _
    $region15: #{lotto_lstm_forward.1} parent=1 // pred_check_branch
      %40 = sbr.rel (0) target = $region17
    $region16: #{lotto_lstm_forward.1} parent=1 // pred_region
      _
    $region17: #{lotto_lstm_forward.1} parent=1 // pred_fallthru
      _
    // Predicated region
    $region18: #{lotto_lstm_forward.1} parent=1 // pred_check
      _
    $region19: #{lotto_lstm_forward.1} parent=1 // pred_check_branch
      %42 = sbr.rel (0) target = $region21
    $region20: #{lotto_lstm_forward.1} parent=1 // pred_region
      _
    $region21: #{lotto_lstm_forward.1} parent=1 // pred_fallthru
      _
    // Predicated region
    $region22: #{lotto_lstm_forward.1} parent=1 // pred_check
      _
    $region23: #{lotto_lstm_forward.1} parent=1 // pred_check_branch
      %44 = sbr.rel (0) target = $region25
    $region24: #{lotto_lstm_forward.1} parent=1 // pred_region
      _
    $region25: #{lotto_lstm_forward.1} parent=1 // pred_fallthru
      _
    // Predicated region
    $region26: #{lotto_lstm_forward.1} parent=1 // pred_check
      _
    $region27: #{lotto_lstm_forward.1} parent=1 // pred_check_branch
      %46 = sbr.rel (0) target = $region29
    $region28: #{lotto_lstm_forward.1} parent=1 // pred_region
      %47 = dma.done [#allocation5], 8192
    $region29: #{lotto_lstm_forward.1} parent=1 // pred_fallthru
      _
    // Predicated region
    $region30: #{lotto_lstm_forward.1} parent=1 // pred_check
      _
    $region31: #{lotto_lstm_forward.1} parent=1 // pred_check_branch
      %49 = sbr.rel (0) target = $region33
    $region32: #{lotto_lstm_forward.1} parent=1 // pred_region
      %50 = dma.done [#allocation7], 8192
    $region33: #{lotto_lstm_forward.1} parent=1 // pred_fallthru
      _
    %v52 = vld [vmem:[%s0] sm:$0xf]
    %v53 = vld [vmem:[%s0 + $0x4] sm:$0xf]
    %v54 = vld [vmem:[%s0 + $0x8] sm:$0xf]
    %v55 = vld [vmem:[%s0 + $0xc] sm:$0xf]
    %v56 = vld [vmem:[%s0 + $0x10] sm:$0xf]
    %v57 = vld [vmem:[%s0 + $0x14] sm:$0xf]
    %v58 = vld [vmem:[%s0 + $0x18] sm:$0xf]
    %v59 = vld [vmem:[%s0 + $0x1c] sm:$0xf]
    %v60 = vld [vmem:[%s0 + $0x20] sm:$0xf]
    %v61 = vld [vmem:[%s0 + $0x24] sm:$0xf]
    %v62 = vld [vmem:[%s0 + $0x28] sm:$0xf]
    %v63 = vld [vmem:[%s0 + $0x2c] sm:$0xf]
    %v64 = vld [vmem:[%s0 + $0x30] sm:$0xf]
    %v65 = vld [vmem:[%s0 + $0x34] sm:$0xf]
    %v66 = vld [vmem:[%s0 + $0x38] sm:$0xf]
    %v67 = vld [vmem:[%s0 + $0x3c] sm:$0xf]
    %v68 = vld [vmem:[#allocation4] sm:$0xff]
    %v69 = vld [vmem:[#allocation4 + $0x8] sm:$0xff]
    %v70 = vld [vmem:[#allocation4 + $0x10] sm:$0xff]
    %v71 = vld [vmem:[#allocation4 + $0x18] sm:$0xff]
    %v72 = vld [vmem:[#allocation4 + $0x20] sm:$0xff]
    %v73 = vld [vmem:[#allocation4 + $0x28] sm:$0xff]
    %v74 = vld [vmem:[#allocation4 + $0x30] sm:$0xff]
    %v75 = vld [vmem:[#allocation4 + $0x38] sm:$0xff]
    %v76 = vld [vmem:[#allocation4 + $0x40] sm:$0xff]
    %v77 = vld [vmem:[#allocation4 + $0x48] sm:$0xff]
    %v78 = vld [vmem:[#allocation4 + $0x50] sm:$0xff]
    %v79 = vld [vmem:[#allocation4 + $0x58] sm:$0xff]
    %v80 = vld [vmem:[#allocation4 + $0x60] sm:$0xff]
    %v81 = vld [vmem:[#allocation4 + $0x68] sm:$0xff]
    %v82 = vld [vmem:[#allocation4 + $0x70] sm:$0xff]
    %v83 = vld [vmem:[#allocation4 + $0x78] sm:$0xff]
    %v84 = vld [vmem:[#allocation4 + $0x80] sm:$0xff]
    %v85 = vld [vmem:[#allocation4 + $0x88] sm:$0xff]
    %v86 = vld [vmem:[#allocation4 + $0x90] sm:$0xff]
    %v87 = vld [vmem:[#allocation4 + $0x98] sm:$0xff]
    %v88 = vld [vmem:[#allocation4 + $0xa0] sm:$0xff]
    %v89 = vld [vmem:[#allocation4 + $0xa8] sm:$0xff]
    %v90 = vld [vmem:[#allocation4 + $0xb0] sm:$0xff]
    %v91 = vld [vmem:[#allocation4 + $0xb8] sm:$0xff]
    %v92 = vld [vmem:[#allocation4 + $0xc0] sm:$0xff]
    %v93 = vld [vmem:[#allocation4 + $0xc8] sm:$0xff]
    %v94 = vld [vmem:[#allocation4 + $0xd0] sm:$0xff]
    %v95 = vld [vmem:[#allocation4 + $0xd8] sm:$0xff]
    %v96 = vld [vmem:[#allocation4 + $0xe0] sm:$0xff]
    %v97 = vld [vmem:[#allocation4 + $0xe8] sm:$0xff]
    %v98 = vld [vmem:[#allocation4 + $0xf0] sm:$0xff]
    %v99 = vld [vmem:[#allocation4 + $0xf8] sm:$0xff]
    %v100 = vld [vmem:[%s3] sm:$0xf]
    %v102 = vlaneseq
    %v103 = vshrl.u32 %v102, 7
    %v104 = vsub.s32 0, %v103
    %v105 = vrot.slane %v100, %v104
    %v106 = vlaneseq
    %v107 = vshrl.u32 %v106, 7
    %v108 = vsub.s32 1, %v107
    %v109 = vrot.slane %v100, %v108
    %v110 = vlaneseq
    %v111 = vshrl.u32 %v110, 7
    %v112 = vsub.s32 2, %v111
    %v113 = vrot.slane %v100, %v112
    %v114 = vlaneseq
    %v115 = vshrl.u32 %v114, 7
    %v116 = vsub.s32 3, %v115
    %v117 = vrot.slane %v100, %v116
    %v138 = vunpack.c.l.b16 %v52
    %v139 = vunpack.c.l.b16 %v53
    %v140 = vunpack.c.l.b16 %v54
    %v141 = vunpack.c.l.b16 %v55
    %v142 = vunpack.c.l.b16 %v56
    %v143 = vunpack.c.l.b16 %v57
    %v144 = vunpack.c.l.b16 %v58
    %v145 = vunpack.c.l.b16 %v59
    %v146 = vunpack.c.l.b16 %v60
    %v147 = vunpack.c.l.b16 %v61
    %v148 = vunpack.c.l.b16 %v62
    %v149 = vunpack.c.l.b16 %v63
    %v150 = vunpack.c.l.b16 %v64
    %v151 = vunpack.c.l.b16 %v65
    %v152 = vunpack.c.l.b16 %v66
    %v153 = vunpack.c.l.b16 %v67
    %v154 = vpack.c.b16 %v139, %v138
    %v155 = vpack.c.b16 %v141, %v140
    %v156 = vpack.c.b16 %v143, %v142
    %v157 = vpack.c.b16 %v145, %v144
    %v158 = vpack.c.b16 %v147, %v146
    %v159 = vpack.c.b16 %v149, %v148
    %v160 = vpack.c.b16 %v151, %v150
    %v161 = vpack.c.b16 %v153, %v152
    %v202 = vunpack.c.l.b16 %v68
    %v203 = vunpack.c.h.b16 %v68
    %v204 = vunpack.c.l.b16 %v69
    %v205 = vunpack.c.h.b16 %v69
    %v206 = vunpack.c.l.b16 %v70
    %v207 = vunpack.c.h.b16 %v70
    %v208 = vunpack.c.l.b16 %v71
    %v209 = vunpack.c.h.b16 %v71
    %v210 = vunpack.c.l.b16 %v72
    %v211 = vunpack.c.h.b16 %v72
    %v212 = vunpack.c.l.b16 %v73
    %v213 = vunpack.c.h.b16 %v73
    %v214 = vunpack.c.l.b16 %v74
    %v215 = vunpack.c.h.b16 %v74
    %v216 = vunpack.c.l.b16 %v75
    %v217 = vunpack.c.h.b16 %v75
    %v218 = vunpack.c.l.b16 %v76
    %v219 = vunpack.c.h.b16 %v76
    %v220 = vunpack.c.l.b16 %v77
    %v221 = vunpack.c.h.b16 %v77
    %v222 = vunpack.c.l.b16 %v78
    %v223 = vunpack.c.h.b16 %v78
    %v224 = vunpack.c.l.b16 %v79
    %v225 = vunpack.c.h.b16 %v79
    %v226 = vunpack.c.l.b16 %v80
    %v227 = vunpack.c.h.b16 %v80
    %v228 = vunpack.c.l.b16 %v81
    %v229 = vunpack.c.h.b16 %v81
    %v230 = vunpack.c.l.b16 %v82
    %v231 = vunpack.c.h.b16 %v82
    %v232 = vunpack.c.l.b16 %v83
    %v233 = vunpack.c.h.b16 %v83
    %v234 = vunpack.c.l.b16 %v84
    %v235 = vunpack.c.h.b16 %v84
    %v236 = vunpack.c.l.b16 %v85
    %v237 = vunpack.c.h.b16 %v85
    %v238 = vunpack.c.l.b16 %v86
    %v239 = vunpack.c.h.b16 %v86
    %v240 = vunpack.c.l.b16 %v87
    %v241 = vunpack.c.h.b16 %v87
    %v242 = vunpack.c.l.b16 %v88
    %v243 = vunpack.c.h.b16 %v88
    %v244 = vunpack.c.l.b16 %v89
    %v245 = vunpack.c.h.b16 %v89
    %v246 = vunpack.c.l.b16 %v90
    %v247 = vunpack.c.h.b16 %v90
    %v248 = vunpack.c.l.b16 %v91
    %v249 = vunpack.c.h.b16 %v91
    %v250 = vunpack.c.l.b16 %v92
    %v251 = vunpack.c.h.b16 %v92
    %v252 = vunpack.c.l.b16 %v93
    %v253 = vunpack.c.h.b16 %v93
    %v254 = vunpack.c.l.b16 %v94
    %v255 = vunpack.c.h.b16 %v94
    %v256 = vunpack.c.l.b16 %v95
    %v257 = vunpack.c.h.b16 %v95
    %v258 = vunpack.c.l.b16 %v96
    %v259 = vunpack.c.h.b16 %v96
    %v260 = vunpack.c.l.b16 %v97
    %v261 = vunpack.c.h.b16 %v97
    %v262 = vunpack.c.l.b16 %v98
    %v263 = vunpack.c.h.b16 %v98
    %v264 = vunpack.c.l.b16 %v99
    %v265 = vunpack.c.h.b16 %v99
    %v266 = vpack.c.b16 %v206, %v202
    %v267 = vpack.c.b16 %v207, %v203
    %v268 = vpack.c.b16 %v208, %v204
    %v269 = vpack.c.b16 %v209, %v205
    %v270 = vpack.c.b16 %v214, %v210
    %v271 = vpack.c.b16 %v215, %v211
    %v272 = vpack.c.b16 %v216, %v212
    %v273 = vpack.c.b16 %v217, %v213
    %v274 = vpack.c.b16 %v222, %v218
    %v275 = vpack.c.b16 %v223, %v219
    %v276 = vpack.c.b16 %v224, %v220
    %v277 = vpack.c.b16 %v225, %v221
    %v278 = vpack.c.b16 %v230, %v226
    %v279 = vpack.c.b16 %v231, %v227
    %v280 = vpack.c.b16 %v232, %v228
    %v281 = vpack.c.b16 %v233, %v229
    %v282 = vpack.c.b16 %v238, %v234
    %v283 = vpack.c.b16 %v239, %v235
    %v284 = vpack.c.b16 %v240, %v236
    %v285 = vpack.c.b16 %v241, %v237
    %v286 = vpack.c.b16 %v246, %v242
    %v287 = vpack.c.b16 %v247, %v243
    %v288 = vpack.c.b16 %v248, %v244
    %v289 = vpack.c.b16 %v249, %v245
    %v290 = vpack.c.b16 %v254, %v250
    %v291 = vpack.c.b16 %v255, %v251
    %v292 = vpack.c.b16 %v256, %v252
    %v293 = vpack.c.b16 %v257, %v253
    %v294 = vpack.c.b16 %v262, %v258
    %v295 = vpack.c.b16 %v263, %v259
    %v296 = vpack.c.b16 %v264, %v260
    %v297 = vpack.c.b16 %v265, %v261
    %330 = vmatprep.subr.bf16.mxu0 %v267
    %331 = vmatpush1.bf16.msra.mxu0 %v266
    %332 = vmatprep.subr.bf16.mxu0 %v271
    %333 = vmatpush1.bf16.msra.mxu0 %v270
    %334 = vmatprep.subr.bf16.mxu0 %v275
    %335 = vmatpush1.bf16.msra.mxu0 %v274
    %336 = vmatprep.subr.bf16.mxu0 %v279
    %337 = vmatpush1.bf16.msra.mxu0 %v278
    %338 = vmatprep.subr.bf16.mxu0 %v283
    %339 = vmatpush1.bf16.msra.mxu0 %v282
    %340 = vmatprep.subr.bf16.mxu0 %v287
    %341 = vmatpush1.bf16.msra.mxu0 %v286
    %342 = vmatprep.subr.bf16.mxu0 %v291
    %343 = vmatpush1.bf16.msra.mxu0 %v290
    %344 = vmatprep.subr.bf16.mxu0 %v295
    %345 = vmatpush1.bf16.msra.mxu0 %v294
    %346 = vmatprep.subr.bf16.mxu0 0
    %347 = vmatpush1.bf16.msra.mxu0 0
    %348 = vmatprep.subr.bf16.mxu0 0
    %349 = vmatpush1.bf16.msra.mxu0 0
    %350 = vmatprep.subr.bf16.mxu0 0
    %351 = vmatpush1.bf16.msra.mxu0 0
    %352 = vmatprep.subr.bf16.mxu0 0
    %353 = vmatpush1.bf16.msra.mxu0 0
    %354 = vmatprep.subr.bf16.mxu0 0
    %355 = vmatpush1.bf16.msra.mxu0 0
    %356 = vmatprep.subr.bf16.mxu0 0
    %357 = vmatpush1.bf16.msra.mxu0 0
    %358 = vmatprep.subr.bf16.mxu0 0
    %359 = vmatpush1.bf16.msra.mxu0 0
    %360 = vmatprep.subr.bf16.mxu0 0
    %361 = vmatpush1.bf16.msra.mxu0 0
    %362 = vmatprep.mubr.bf16.mxu0 0
    %363 = vmatmul.mubr.bf16.gmra.mrb[0].mxu0 %v154
    %v364 = vpop.f32.mrb[0].mxu0
    %v365 = vadd.f32 %v105, %v364
    %v366 = vpop.f32.mrb[0].mxu0
    %v367 = vadd.f32 %v109, %v366
    %v368 = vpop.f32.mrb[0].mxu0
    %v369 = vadd.f32 %v105, %v368
    %v370 = vpop.f32.mrb[0].mxu0
    %v371 = vadd.f32 %v109, %v370
    %372 = vmatprep.mubr.bf16.mxu0 0
    %373 = vmatmul.mubr.bf16.gmra.mrb[0].mxu0 %v155
    %v374 = vpop.f32.mrb[0].mxu0
    %v375 = vadd.f32 %v105, %v374
    %v376 = vpop.f32.mrb[0].mxu0
    %v377 = vadd.f32 %v109, %v376
    %v378 = vpop.f32.mrb[0].mxu0
    %v379 = vadd.f32 %v105, %v378
    %v380 = vpop.f32.mrb[0].mxu0
    %v381 = vadd.f32 %v109, %v380
    %382 = vmatprep.mubr.bf16.mxu0 0
    %383 = vmatmul.mubr.bf16.gmra.mrb[0].mxu0 %v156
    %v384 = vpop.f32.mrb[0].mxu0
    %v385 = vadd.f32 %v105, %v384
    %v386 = vpop.f32.mrb[0].mxu0
    %v387 = vadd.f32 %v109, %v386
    %v388 = vpop.f32.mrb[0].mxu0
    %v389 = vadd.f32 %v105, %v388
    %v390 = vpop.f32.mrb[0].mxu0
    %v391 = vadd.f32 %v109, %v390
    %392 = vmatprep.mubr.bf16.mxu0 0
    %393 = vmatmul.mubr.bf16.gmra.mrb[0].mxu0 %v157
    %v394 = vpop.f32.mrb[0].mxu0
    %v395 = vadd.f32 %v105, %v394
    %v396 = vpop.f32.mrb[0].mxu0
    %v397 = vadd.f32 %v109, %v396
    %v398 = vpop.f32.mrb[0].mxu0
    %v399 = vadd.f32 %v105, %v398
    %v400 = vpop.f32.mrb[0].mxu0
    %v401 = vadd.f32 %v109, %v400
    %402 = vmatprep.mubr.bf16.mxu0 0
    %403 = vmatmul.mubr.bf16.gmra.mrb[0].mxu0 %v158
    %v404 = vpop.f32.mrb[0].mxu0
    %v405 = vadd.f32 %v105, %v404
    %v406 = vpop.f32.mrb[0].mxu0
    %v407 = vadd.f32 %v109, %v406
    %v408 = vpop.f32.mrb[0].mxu0
    %v409 = vadd.f32 %v105, %v408
    %v410 = vpop.f32.mrb[0].mxu0
    %v411 = vadd.f32 %v109, %v410
    %412 = vmatprep.mubr.bf16.mxu0 0
    %413 = vmatmul.mubr.bf16.gmra.mrb[0].mxu0 %v159
    %v414 = vpop.f32.mrb[0].mxu0
    %v415 = vadd.f32 %v105, %v414
    %v416 = vpop.f32.mrb[0].mxu0
    %v417 = vadd.f32 %v109, %v416
    %v418 = vpop.f32.mrb[0].mxu0
    %v419 = vadd.f32 %v105, %v418
    %v420 = vpop.f32.mrb[0].mxu0
    %v421 = vadd.f32 %v109, %v420
    %422 = vmatprep.mubr.bf16.mxu0 0
    %423 = vmatmul.mubr.bf16.gmra.mrb[0].mxu0 %v160
    %v424 = vpop.f32.mrb[0].mxu0
    %v425 = vadd.f32 %v105, %v424
    %v426 = vpop.f32.mrb[0].mxu0
    %v427 = vadd.f32 %v109, %v426
    %v428 = vpop.f32.mrb[0].mxu0
    %v429 = vadd.f32 %v105, %v428
    %v430 = vpop.f32.mrb[0].mxu0
    %v431 = vadd.f32 %v109, %v430
    %432 = vmatprep.mubr.bf16.mxu0 0
    %433 = vmatmul.mubr.bf16.gmra.mrb[0].mxu0 %v161
    %v434 = vpop.f32.mrb[0].mxu0
    %v435 = vadd.f32 %v105, %v434
    %v436 = vpop.f32.mrb[0].mxu0
    %v437 = vadd.f32 %v109, %v436
    %v438 = vpop.f32.mrb[0].mxu0
    %v439 = vadd.f32 %v105, %v438
    %v440 = vpop.f32.mrb[0].mxu0
    %v441 = vadd.f32 %v109, %v440
    %442 = vdwg.mxu0
    %443 = vmatprep.subr.bf16.mxu0 %v269
    %444 = vmatpush1.bf16.msra.mxu0 %v268
    %445 = vmatprep.subr.bf16.mxu0 %v273
    %446 = vmatpush1.bf16.msra.mxu0 %v272
    %447 = vmatprep.subr.bf16.mxu0 %v277
    %448 = vmatpush1.bf16.msra.mxu0 %v276
    %449 = vmatprep.subr.bf16.mxu0 %v281
    %450 = vmatpush1.bf16.msra.mxu0 %v280
    %451 = vmatprep.subr.bf16.mxu0 %v285
    %452 = vmatpush1.bf16.msra.mxu0 %v284
    %453 = vmatprep.subr.bf16.mxu0 %v289
    %454 = vmatpush1.bf16.msra.mxu0 %v288
    %455 = vmatprep.subr.bf16.mxu0 %v293
    %456 = vmatpush1.bf16.msra.mxu0 %v292
    %457 = vmatprep.subr.bf16.mxu0 %v297
    %458 = vmatpush1.bf16.msra.mxu0 %v296
    %459 = vmatprep.subr.bf16.mxu0 0
    %460 = vmatpush1.bf16.msra.mxu0 0
    %461 = vmatprep.subr.bf16.mxu0 0
    %462 = vmatpush1.bf16.msra.mxu0 0
    %463 = vmatprep.subr.bf16.mxu0 0
    %464 = vmatpush1.bf16.msra.mxu0 0
    %465 = vmatprep.subr.bf16.mxu0 0
    %466 = vmatpush1.bf16.msra.mxu0 0
    %467 = vmatprep.subr.bf16.mxu0 0
    %468 = vmatpush1.bf16.msra.mxu0 0
    %469 = vmatprep.subr.bf16.mxu0 0
    %470 = vmatpush1.bf16.msra.mxu0 0
    %471 = vmatprep.subr.bf16.mxu0 0
    %472 = vmatpush1.bf16.msra.mxu0 0
    %473 = vmatprep.subr.bf16.mxu0 0
    %474 = vmatpush1.bf16.msra.mxu0 0
    %475 = vmatprep.mubr.bf16.mxu0 0
    %476 = vmatmul.mubr.bf16.gmra.mrb[0].mxu0 %v154
    %v477 = vpop.f32.mrb[0].mxu0
    %v478 = vadd.f32 %v113, %v477
    %v479 = vpop.f32.mrb[0].mxu0
    %v480 = vadd.f32 %v117, %v479
    %v481 = vpop.f32.mrb[0].mxu0
    %v482 = vadd.f32 %v113, %v481
    %v483 = vpop.f32.mrb[0].mxu0
    %v484 = vadd.f32 %v117, %v483
    %485 = vmatprep.mubr.bf16.mxu0 0
    %486 = vmatmul.mubr.bf16.gmra.mrb[0].mxu0 %v155
    %v487 = vpop.f32.mrb[0].mxu0
    %v488 = vadd.f32 %v113, %v487
    %v489 = vpop.f32.mrb[0].mxu0
    %v490 = vadd.f32 %v117, %v489
    %v491 = vpop.f32.mrb[0].mxu0
    %v492 = vadd.f32 %v113, %v491
    %v493 = vpop.f32.mrb[0].mxu0
    %v494 = vadd.f32 %v117, %v493
    %495 = vmatprep.mubr.bf16.mxu0 0
    %496 = vmatmul.mubr.bf16.gmra.mrb[0].mxu0 %v156
    %v497 = vpop.f32.mrb[0].mxu0
    %v498 = vadd.f32 %v113, %v497
    %v499 = vpop.f32.mrb[0].mxu0
    %v500 = vadd.f32 %v117, %v499
    %v501 = vpop.f32.mrb[0].mxu0
    %v502 = vadd.f32 %v113, %v501
    %v503 = vpop.f32.mrb[0].mxu0
    %v504 = vadd.f32 %v117, %v503
    %505 = vmatprep.mubr.bf16.mxu0 0
    %506 = vmatmul.mubr.bf16.gmra.mrb[0].mxu0 %v157
    %v507 = vpop.f32.mrb[0].mxu0
    %v508 = vadd.f32 %v113, %v507
    %v509 = vpop.f32.mrb[0].mxu0
    %v510 = vadd.f32 %v117, %v509
    %v511 = vpop.f32.mrb[0].mxu0
    %v512 = vadd.f32 %v113, %v511
    %v513 = vpop.f32.mrb[0].mxu0
    %v514 = vadd.f32 %v117, %v513
    %515 = vmatprep.mubr.bf16.mxu0 0
    %516 = vmatmul.mubr.bf16.gmra.mrb[0].mxu0 %v158
    %v517 = vpop.f32.mrb[0].mxu0
    %v518 = vadd.f32 %v113, %v517
    %v519 = vpop.f32.mrb[0].mxu0
    %v520 = vadd.f32 %v117, %v519
    %v521 = vpop.f32.mrb[0].mxu0
    %v522 = vadd.f32 %v113, %v521
    %v523 = vpop.f32.mrb[0].mxu0
    %v524 = vadd.f32 %v117, %v523
    %525 = vmatprep.mubr.bf16.mxu0 0
    %526 = vmatmul.mubr.bf16.gmra.mrb[0].mxu0 %v159
    %v527 = vpop.f32.mrb[0].mxu0
    %v528 = vadd.f32 %v113, %v527
    %v529 = vpop.f32.mrb[0].mxu0
    %v530 = vadd.f32 %v117, %v529
    %v531 = vpop.f32.mrb[0].mxu0
    %v532 = vadd.f32 %v113, %v531
    %v533 = vpop.f32.mrb[0].mxu0
    %v534 = vadd.f32 %v117, %v533
    %535 = vmatprep.mubr.bf16.mxu0 0
    %536 = vmatmul.mubr.bf16.gmra.mrb[0].mxu0 %v160
    %v537 = vpop.f32.mrb[0].mxu0
    %v538 = vadd.f32 %v113, %v537
    %v539 = vpop.f32.mrb[0].mxu0
    %v540 = vadd.f32 %v117, %v539
    %v541 = vpop.f32.mrb[0].mxu0
    %v542 = vadd.f32 %v113, %v541
    %v543 = vpop.f32.mrb[0].mxu0
    %v544 = vadd.f32 %v117, %v543
    %545 = vmatprep.mubr.bf16.mxu0 0
    %546 = vmatmul.mubr.bf16.gmra.mrb[0].mxu0 %v161
    %v547 = vpop.f32.mrb[0].mxu0
    %v548 = vadd.f32 %v113, %v547
    %v549 = vpop.f32.mrb[0].mxu0
    %v550 = vadd.f32 %v117, %v549
    %v551 = vpop.f32.mrb[0].mxu0
    %v552 = vadd.f32 %v113, %v551
    %v553 = vpop.f32.mrb[0].mxu0
    %v554 = vadd.f32 %v117, %v553
    %555 = vdwg.mxu0
    %v556 = vpack.c.bf16 %v369, %v365
    %v557 = vpack.c.bf16 %v371, %v367
    %v558 = vpack.c.bf16 %v482, %v478
    %v559 = vpack.c.bf16 %v484, %v480
    %v560 = vpack.c.bf16 %v379, %v375
    %v561 = vpack.c.bf16 %v381, %v377
    %v562 = vpack.c.bf16 %v492, %v488
    %v563 = vpack.c.bf16 %v494, %v490
    %v564 = vpack.c.bf16 %v389, %v385
    %v565 = vpack.c.bf16 %v391, %v387
    %v566 = vpack.c.bf16 %v502, %v498
    %v567 = vpack.c.bf16 %v504, %v500
    %v568 = vpack.c.bf16 %v399, %v395
    %v569 = vpack.c.bf16 %v401, %v397
    %v570 = vpack.c.bf16 %v512, %v508
    %v571 = vpack.c.bf16 %v514, %v510
    %v572 = vpack.c.bf16 %v409, %v405
    %v573 = vpack.c.bf16 %v411, %v407
    %v574 = vpack.c.bf16 %v522, %v518
    %v575 = vpack.c.bf16 %v524, %v520
    %v576 = vpack.c.bf16 %v419, %v415
    %v577 = vpack.c.bf16 %v421, %v417
    %v578 = vpack.c.bf16 %v532, %v528
    %v579 = vpack.c.bf16 %v534, %v530
    %v580 = vpack.c.bf16 %v429, %v425
    %v581 = vpack.c.bf16 %v431, %v427
    %v582 = vpack.c.bf16 %v542, %v538
    %v583 = vpack.c.bf16 %v544, %v540
    %v584 = vpack.c.bf16 %v439, %v435
    %v585 = vpack.c.bf16 %v441, %v437
    %v586 = vpack.c.bf16 %v552, %v548
    %v587 = vpack.c.bf16 %v554, %v550
    %588 = vst [vmem:[#allocation3] sm:$0xff] %v556
    %589 = vst [vmem:[#allocation3 + $0x8] sm:$0xff] %v557
    %590 = vst [vmem:[#allocation3 + $0x10] sm:$0xff] %v558
    %591 = vst [vmem:[#allocation3 + $0x18] sm:$0xff] %v559
    %592 = vst [vmem:[#allocation3 + $0x20] sm:$0xff] %v560
    %593 = vst [vmem:[#allocation3 + $0x28] sm:$0xff] %v561
    %594 = vst [vmem:[#allocation3 + $0x30] sm:$0xff] %v562
    %595 = vst [vmem:[#allocation3 + $0x38] sm:$0xff] %v563
    %596 = vst [vmem:[#allocation3 + $0x40] sm:$0xff] %v564
    %597 = vst [vmem:[#allocation3 + $0x48] sm:$0xff] %v565
    %598 = vst [vmem:[#allocation3 + $0x50] sm:$0xff] %v566
    %599 = vst [vmem:[#allocation3 + $0x58] sm:$0xff] %v567
    %600 = vst [vmem:[#allocation3 + $0x60] sm:$0xff] %v568
    %601 = vst [vmem:[#allocation3 + $0x68] sm:$0xff] %v569
    %602 = vst [vmem:[#allocation3 + $0x70] sm:$0xff] %v570
    %603 = vst [vmem:[#allocation3 + $0x78] sm:$0xff] %v571
    %604 = vst [vmem:[#allocation3 + $0x80] sm:$0xff] %v572
    %605 = vst [vmem:[#allocation3 + $0x88] sm:$0xff] %v573
    %606 = vst [vmem:[#allocation3 + $0x90] sm:$0xff] %v574
    %607 = vst [vmem:[#allocation3 + $0x98] sm:$0xff] %v575
    %608 = vst [vmem:[#allocation3 + $0xa0] sm:$0xff] %v576
    %609 = vst [vmem:[#allocation3 + $0xa8] sm:$0xff] %v577
    %610 = vst [vmem:[#allocation3 + $0xb0] sm:$0xff] %v578
    %611 = vst [vmem:[#allocation3 + $0xb8] sm:$0xff] %v579
    %612 = vst [vmem:[#allocation3 + $0xc0] sm:$0xff] %v580
    %613 = vst [vmem:[#allocation3 + $0xc8] sm:$0xff] %v581
    %614 = vst [vmem:[#allocation3 + $0xd0] sm:$0xff] %v582
    %615 = vst [vmem:[#allocation3 + $0xd8] sm:$0xff] %v583
    %616 = vst [vmem:[#allocation3 + $0xe0] sm:$0xff] %v584
    %617 = vst [vmem:[#allocation3 + $0xe8] sm:$0xff] %v585
    %618 = vst [vmem:[#allocation3 + $0xf0] sm:$0xff] %v586
    %619 = vst [vmem:[#allocation3 + $0xf8] sm:$0xff] %v587
    %v620 = vld [vmem:[#allocation6] sm:$0xff]
    %v621 = vld [vmem:[#allocation6 + $0x8] sm:$0xff]
    %v622 = vld [vmem:[#allocation6 + $0x10] sm:$0xff]
    %v623 = vld [vmem:[#allocation6 + $0x18] sm:$0xff]
    %v624 = vld [vmem:[#allocation6 + $0x20] sm:$0xff]
    %v625 = vld [vmem:[#allocation6 + $0x28] sm:$0xff]
    %v626 = vld [vmem:[#allocation6 + $0x30] sm:$0xff]
    %v627 = vld [vmem:[#allocation6 + $0x38] sm:$0xff]
    %v628 = vld [vmem:[#allocation6 + $0x40] sm:$0xff]
    %v629 = vld [vmem:[#allocation6 + $0x48] sm:$0xff]
    %v630 = vld [vmem:[#allocation6 + $0x50] sm:$0xff]
    %v631 = vld [vmem:[#allocation6 + $0x58] sm:$0xff]
    %v632 = vld [vmem:[#allocation6 + $0x60] sm:$0xff]
    %v633 = vld [vmem:[#allocation6 + $0x68] sm:$0xff]
    %v634 = vld [vmem:[#allocation6 + $0x70] sm:$0xff]
    %v635 = vld [vmem:[#allocation6 + $0x78] sm:$0xff]
    %v636 = vld [vmem:[#allocation6 + $0x80] sm:$0xff]
    %v637 = vld [vmem:[#allocation6 + $0x88] sm:$0xff]
    %v638 = vld [vmem:[#allocation6 + $0x90] sm:$0xff]
    %v639 = vld [vmem:[#allocation6 + $0x98] sm:$0xff]
    %v640 = vld [vmem:[#allocation6 + $0xa0] sm:$0xff]
    %v641 = vld [vmem:[#allocation6 + $0xa8] sm:$0xff]
    %v642 = vld [vmem:[#allocation6 + $0xb0] sm:$0xff]
    %v643 = vld [vmem:[#allocation6 + $0xb8] sm:$0xff]
    %v644 = vld [vmem:[#allocation6 + $0xc0] sm:$0xff]
    %v645 = vld [vmem:[#allocation6 + $0xc8] sm:$0xff]
    %v646 = vld [vmem:[#allocation6 + $0xd0] sm:$0xff]
    %v647 = vld [vmem:[#allocation6 + $0xd8] sm:$0xff]
    %v648 = vld [vmem:[#allocation6 + $0xe0] sm:$0xff]
    %v649 = vld [vmem:[#allocation6 + $0xe8] sm:$0xff]
    %v650 = vld [vmem:[#allocation6 + $0xf0] sm:$0xff]
    %v651 = vld [vmem:[#allocation6 + $0xf8] sm:$0xff]
    %v652 = vld [vmem:[#allocation3] sm:$0xff]
    %v653 = vld [vmem:[#allocation3 + $0x8] sm:$0xff]
    %v654 = vld [vmem:[#allocation3 + $0x10] sm:$0xff]
    %v655 = vld [vmem:[#allocation3 + $0x18] sm:$0xff]
    %v688 = vunpack.c.l.b16 %v620
    %v689 = vunpack.c.h.b16 %v620
    %v690 = vunpack.c.l.b16 %v621
    %v691 = vunpack.c.h.b16 %v621
    %v692 = vunpack.c.l.b16 %v622
    %v693 = vunpack.c.h.b16 %v622
    %v694 = vunpack.c.l.b16 %v623
    %v695 = vunpack.c.h.b16 %v623
    %v696 = vunpack.c.l.b16 %v624
    %v697 = vunpack.c.h.b16 %v624
    %v698 = vunpack.c.l.b16 %v625
    %v699 = vunpack.c.h.b16 %v625
    %v700 = vunpack.c.l.b16 %v626
    %v701 = vunpack.c.h.b16 %v626
    %v702 = vunpack.c.l.b16 %v627
    %v703 = vunpack.c.h.b16 %v627
    %v704 = vunpack.c.l.b16 %v628
    %v705 = vunpack.c.h.b16 %v628
    %v706 = vunpack.c.l.b16 %v629
    %v707 = vunpack.c.h.b16 %v629
    %v708 = vunpack.c.l.b16 %v630
    %v709 = vunpack.c.h.b16 %v630
    %v710 = vunpack.c.l.b16 %v631
    %v711 = vunpack.c.h.b16 %v631
    %v712 = vunpack.c.l.b16 %v632
    %v713 = vunpack.c.h.b16 %v632
    %v714 = vunpack.c.l.b16 %v633
    %v715 = vunpack.c.h.b16 %v633
    %v716 = vunpack.c.l.b16 %v634
    %v717 = vunpack.c.h.b16 %v634
    %v718 = vunpack.c.l.b16 %v635
    %v719 = vunpack.c.h.b16 %v635
    %v720 = vunpack.c.l.b16 %v636
    %v721 = vunpack.c.h.b16 %v636
    %v722 = vunpack.c.l.b16 %v637
    %v723 = vunpack.c.h.b16 %v637
    %v724 = vunpack.c.l.b16 %v638
    %v725 = vunpack.c.h.b16 %v638
    %v726 = vunpack.c.l.b16 %v639
    %v727 = vunpack.c.h.b16 %v639
    %v728 = vunpack.c.l.b16 %v640
    %v729 = vunpack.c.h.b16 %v640
    %v730 = vunpack.c.l.b16 %v641
    %v731 = vunpack.c.h.b16 %v641
    %v732 = vunpack.c.l.b16 %v642
    %v733 = vunpack.c.h.b16 %v642
    %v734 = vunpack.c.l.b16 %v643
    %v735 = vunpack.c.h.b16 %v643
    %v736 = vunpack.c.l.b16 %v644
    %v737 = vunpack.c.h.b16 %v644
    %v738 = vunpack.c.l.b16 %v645
    %v739 = vunpack.c.h.b16 %v645
    %v740 = vunpack.c.l.b16 %v646
    %v741 = vunpack.c.h.b16 %v646
    %v742 = vunpack.c.l.b16 %v647
    %v743 = vunpack.c.h.b16 %v647
    %v744 = vunpack.c.l.b16 %v648
    %v745 = vunpack.c.h.b16 %v648
    %v746 = vunpack.c.l.b16 %v649
    %v747 = vunpack.c.h.b16 %v649
    %v748 = vunpack.c.l.b16 %v650
    %v749 = vunpack.c.h.b16 %v650
    %v750 = vunpack.c.l.b16 %v651
    %v751 = vunpack.c.h.b16 %v651
    %v752 = vpack.c.b16 %v692, %v688
    %v753 = vpack.c.b16 %v693, %v689
    %v754 = vpack.c.b16 %v694, %v690
    %v755 = vpack.c.b16 %v695, %v691
    %v756 = vpack.c.b16 %v700, %v696
    %v757 = vpack.c.b16 %v701, %v697
    %v758 = vpack.c.b16 %v702, %v698
    %v759 = vpack.c.b16 %v703, %v699
    %v760 = vpack.c.b16 %v708, %v704
    %v761 = vpack.c.b16 %v709, %v705
    %v762 = vpack.c.b16 %v710, %v706
    %v763 = vpack.c.b16 %v711, %v707
    %v764 = vpack.c.b16 %v716, %v712
    %v765 = vpack.c.b16 %v717, %v713
    %v766 = vpack.c.b16 %v718, %v714
    %v767 = vpack.c.b16 %v719, %v715
    %v768 = vpack.c.b16 %v724, %v720
    %v769 = vpack.c.b16 %v725, %v721
    %v770 = vpack.c.b16 %v726, %v722
    %v771 = vpack.c.b16 %v727, %v723
    %v772 = vpack.c.b16 %v732, %v728
    %v773 = vpack.c.b16 %v733, %v729
    %v774 = vpack.c.b16 %v734, %v730
    %v775 = vpack.c.b16 %v735, %v731
    %v776 = vpack.c.b16 %v740, %v736
    %v777 = vpack.c.b16 %v741, %v737
    %v778 = vpack.c.b16 %v742, %v738
    %v779 = vpack.c.b16 %v743, %v739
    %v780 = vpack.c.b16 %v748, %v744
    %v781 = vpack.c.b16 %v749, %v745
    %v782 = vpack.c.b16 %v750, %v746
    %v783 = vpack.c.b16 %v751, %v747
    %816 = vmatprep.subr.bf16.mxu0 %v753
    %817 = vmatpush1.bf16.msra.mxu0 %v752
    %818 = vmatprep.subr.bf16.mxu0 %v757
    %819 = vmatpush1.bf16.msra.mxu0 %v756
    %820 = vmatprep.subr.bf16.mxu0 %v761
    %821 = vmatpush1.bf16.msra.mxu0 %v760
    %822 = vmatprep.subr.bf16.mxu0 %v765
    %823 = vmatpush1.bf16.msra.mxu0 %v764
    %824 = vmatprep.subr.bf16.mxu0 %v769
    %825 = vmatpush1.bf16.msra.mxu0 %v768
    %826 = vmatprep.subr.bf16.mxu0 %v773
    %827 = vmatpush1.bf16.msra.mxu0 %v772
    %828 = vmatprep.subr.bf16.mxu0 %v777
    %829 = vmatpush1.bf16.msra.mxu0 %v776
    %830 = vmatprep.subr.bf16.mxu0 %v781
    %831 = vmatpush1.bf16.msra.mxu0 %v780
    %832 = vmatprep.subr.bf16.mxu0 0
    %833 = vmatpush1.bf16.msra.mxu0 0
    %834 = vmatprep.subr.bf16.mxu0 0
    %835 = vmatpush1.bf16.msra.mxu0 0
    %836 = vmatprep.subr.bf16.mxu0 0
    %837 = vmatpush1.bf16.msra.mxu0 0
    %838 = vmatprep.subr.bf16.mxu0 0
    %839 = vmatpush1.bf16.msra.mxu0 0
    %840 = vmatprep.subr.bf16.mxu0 0
    %841 = vmatpush1.bf16.msra.mxu0 0
    %842 = vmatprep.subr.bf16.mxu0 0
    %843 = vmatpush1.bf16.msra.mxu0 0
    %844 = vmatprep.subr.bf16.mxu0 0
    %845 = vmatpush1.bf16.msra.mxu0 0
    %846 = vmatprep.subr.bf16.mxu0 0
    %847 = vmatpush1.bf16.msra.mxu0 0
    %848 = vmatprep.mubr.bf16.mxu0 0
    %849 = vmatmul.mubr.bf16.gmra.mrb[0].mxu0 0
    %v850 = vpop.f32.mrb[0].mxu0
    %v851 = vadd.f32 0.0, %v850
    %v852 = vpop.f32.mrb[0].mxu0
    %v853 = vadd.f32 0.0, %v852
    %v854 = vpop.f32.mrb[0].mxu0
    %v855 = vadd.f32 0.0, %v854
    %v856 = vpop.f32.mrb[0].mxu0
    %v857 = vadd.f32 0.0, %v856
    %858 = vdwg.mxu0
    %859 = vmatprep.subr.bf16.mxu0 %v755
    %860 = vmatpush1.bf16.msra.mxu0 %v754
    %861 = vmatprep.subr.bf16.mxu0 %v759
    %862 = vmatpush1.bf16.msra.mxu0 %v758
    %863 = vmatprep.subr.bf16.mxu0 %v763
    %864 = vmatpush1.bf16.msra.mxu0 %v762
    %865 = vmatprep.subr.bf16.mxu0 %v767
    %866 = vmatpush1.bf16.msra.mxu0 %v766
    %867 = vmatprep.subr.bf16.mxu0 %v771
    %868 = vmatpush1.bf16.msra.mxu0 %v770
    %869 = vmatprep.subr.bf16.mxu0 %v775
    %870 = vmatpush1.bf16.msra.mxu0 %v774
    %871 = vmatprep.subr.bf16.mxu0 %v779
    %872 = vmatpush1.bf16.msra.mxu0 %v778
    %873 = vmatprep.subr.bf16.mxu0 %v783
    %874 = vmatpush1.bf16.msra.mxu0 %v782
    %875 = vmatprep.subr.bf16.mxu0 0
    %876 = vmatpush1.bf16.msra.mxu0 0
    %877 = vmatprep.subr.bf16.mxu0 0
    %878 = vmatpush1.bf16.msra.mxu0 0
    %879 = vmatprep.subr.bf16.mxu0 0
    %880 = vmatpush1.bf16.msra.mxu0 0
    %881 = vmatprep.subr.bf16.mxu0 0
    %882 = vmatpush1.bf16.msra.mxu0 0
    %883 = vmatprep.subr.bf16.mxu0 0
    %884 = vmatpush1.bf16.msra.mxu0 0
    %885 = vmatprep.subr.bf16.mxu0 0
    %886 = vmatpush1.bf16.msra.mxu0 0
    %887 = vmatprep.subr.bf16.mxu0 0
    %888 = vmatpush1.bf16.msra.mxu0 0
    %889 = vmatprep.subr.bf16.mxu0 0
    %890 = vmatpush1.bf16.msra.mxu0 0
    %891 = vmatprep.mubr.bf16.mxu0 0
    %892 = vmatmul.mubr.bf16.gmra.mrb[0].mxu0 0
    %v893 = vpop.f32.mrb[0].mxu0
    %v894 = vadd.f32 0.0, %v893
    %v895 = vpop.f32.mrb[0].mxu0
    %v896 = vadd.f32 0.0, %v895
    %v897 = vpop.f32.mrb[0].mxu0
    %v898 = vadd.f32 0.0, %v897
    %v899 = vpop.f32.mrb[0].mxu0
    %v900 = vadd.f32 0.0, %v899
    %901 = vdwg.mxu0
    %v902 = vunpack.c.l.bf16 %v652
    %v903 = vunpack.c.l.bf16 %v653
    %v904 = vunpack.c.l.bf16 %v654
    %v905 = vunpack.c.l.bf16 %v655
    %v906 = vunpack.c.h.bf16 %v652
    %v907 = vunpack.c.h.bf16 %v653
    %v908 = vunpack.c.h.bf16 %v654
    %v909 = vunpack.c.h.bf16 %v655
    %v910 = vadd.f32 %v902, %v851
    %v911 = vadd.f32 %v903, %v853
    %v912 = vadd.f32 %v904, %v894
    %v913 = vadd.f32 %v905, %v896
    %v914 = vadd.f32 %v906, %v855
    %v915 = vadd.f32 %v907, %v857
    %v916 = vadd.f32 %v908, %v898
    %v917 = vadd.f32 %v909, %v900
    %v918 = vmul.f32 %v910, 0.5
    %v919 = vmul.f32 %v914, 0.5
    %v920 = vtanh.pop %v918
    %v921 = vtanh.pop %v919
    %v922 = vmul.f32 %v920, 0.5
    %v923 = vmul.f32 %v921, 0.5
    %v924 = vadd.f32 %v922, 0.5
    %v925 = vadd.f32 %v923, 0.5
    %v926 = vmul.f32 %v911, 0.5
    %v927 = vmul.f32 %v915, 0.5
    %v928 = vtanh.pop %v926
    %v929 = vtanh.pop %v927
    %v930 = vmul.f32 %v928, 0.5
    %v931 = vmul.f32 %v929, 0.5
    %v932 = vadd.f32 %v930, 0.5
    %v933 = vadd.f32 %v931, 0.5
    %v934 = vtanh.pop %v912
    %v935 = vtanh.pop %v916
    %v936 = vmul.f32 %v913, 0.5
    %v937 = vmul.f32 %v917, 0.5
    %v938 = vtanh.pop %v936
    %v939 = vtanh.pop %v937
    %v940 = vmul.f32 %v938, 0.5
    %v941 = vmul.f32 %v939, 0.5
    %v942 = vadd.f32 %v940, 0.5
    %v943 = vadd.f32 %v941, 0.5
    %v944 = vmul.f32 %v932, 0.0
    %v945 = vmul.f32 %v933, 0.0
    %v946 = vmul.f32 %v924, %v934
    %v947 = vmul.f32 %v925, %v935
    %v948 = vadd.f32 %v944, %v946
    %v949 = vadd.f32 %v945, %v947
    %v950 = vtanh.pop %v948
    %v951 = vtanh.pop %v949
    %v952 = vmul.f32 %v942, %v950
    %v953 = vmul.f32 %v943, %v951
    %v954 = vpack.c.bf16 %v953, %v952
    %955 = vst [vmem:[#allocation2] sm:$0xff] %v954
    %s956 = scalar_lea.vmem [#allocation3], 32
    %v957 = vld [vmem:[%s956] sm:$0xff]
    %v958 = vld [vmem:[%s956 + $0x8] sm:$0xff]
    %v959 = vld [vmem:[%s956 + $0x10] sm:$0xff]
    %v960 = vld [vmem:[%s956 + $0x18] sm:$0xff]
    %961 = vmatprep.subr.bf16.mxu0 %v753
    %962 = vmatpush1.bf16.msra.mxu0 %v752
    %963 = vmatprep.subr.bf16.mxu0 %v757
    %964 = vmatpush1.bf16.msra.mxu0 %v756
    %965 = vmatprep.subr.bf16.mxu0 %v761
    %966 = vmatpush1.bf16.msra.mxu0 %v760
    %967 = vmatprep.subr.bf16.mxu0 %v765
    %968 = vmatpush1.bf16.msra.mxu0 %v764
    %969 = vmatprep.subr.bf16.mxu0 %v769
    %970 = vmatpush1.bf16.msra.mxu0 %v768
    %971 = vmatprep.subr.bf16.mxu0 %v773
    %972 = vmatpush1.bf16.msra.mxu0 %v772
    %973 = vmatprep.subr.bf16.mxu0 %v777
    %974 = vmatpush1.bf16.msra.mxu0 %v776
    %975 = vmatprep.subr.bf16.mxu0 %v781
    %976 = vmatpush1.bf16.msra.mxu0 %v780
    %977 = vmatprep.subr.bf16.mxu0 0
    %978 = vmatpush1.bf16.msra.mxu0 0
    %979 = vmatprep.subr.bf16.mxu0 0
    %980 = vmatpush1.bf16.msra.mxu0 0
    %981 = vmatprep.subr.bf16.mxu0 0
    %982 = vmatpush1.bf16.msra.mxu0 0
    %983 = vmatprep.subr.bf16.mxu0 0
    %984 = vmatpush1.bf16.msra.mxu0 0
    %985 = vmatprep.subr.bf16.mxu0 0
    %986 = vmatpush1.bf16.msra.mxu0 0
    %987 = vmatprep.subr.bf16.mxu0 0
    %988 = vmatpush1.bf16.msra.mxu0 0
    %989 = vmatprep.subr.bf16.mxu0 0
    %990 = vmatpush1.bf16.msra.mxu0 0
    %991 = vmatprep.subr.bf16.mxu0 0
    %992 = vmatpush1.bf16.msra.mxu0 0
    %993 = vmatprep.mubr.bf16.mxu0 0
    %994 = vmatmul.mubr.bf16.gmra.mrb[0].mxu0 %v954
    %v995 = vpop.f32.mrb[0].mxu0
    %v996 = vadd.f32 0.0, %v995
    %v997 = vpop.f32.mrb[0].mxu0
    %v998 = vadd.f32 0.0, %v997
    %v999 = vpop.f32.mrb[0].mxu0
    %v1000 = vadd.f32 0.0, %v999
    %v1001 = vpop.f32.mrb[0].mxu0
    %v1002 = vadd.f32 0.0, %v1001
    %1003 = vdwg.mxu0
    %1004 = vmatprep.subr.bf16.mxu0 %v755
    %1005 = vmatpush1.bf16.msra.mxu0 %v754
    %1006 = vmatprep.subr.bf16.mxu0 %v759
    %1007 = vmatpush1.bf16.msra.mxu0 %v758
    %1008 = vmatprep.subr.bf16.mxu0 %v763
    %1009 = vmatpush1.bf16.msra.mxu0 %v762
    %1010 = vmatprep.subr.bf16.mxu0 %v767
    %1011 = vmatpush1.bf16.msra.mxu0 %v766
    %1012 = vmatprep.subr.bf16.mxu0 %v771
    %1013 = vmatpush1.bf16.msra.mxu0 %v770
    %1014 = vmatprep.subr.bf16.mxu0 %v775
    %1015 = vmatpush1.bf16.msra.mxu0 %v774
    %1016 = vmatprep.subr.bf16.mxu0 %v779
    %1017 = vmatpush1.bf16.msra.mxu0 %v778
    %1018 = vmatprep.subr.bf16.mxu0 %v783
    %1019 = vmatpush1.bf16.msra.mxu0 %v782
    %1020 = vmatprep.subr.bf16.mxu0 0
    %1021 = vmatpush1.bf16.msra.mxu0 0
    %1022 = vmatprep.subr.bf16.mxu0 0
    %1023 = vmatpush1.bf16.msra.mxu0 0
    %1024 = vmatprep.subr.bf16.mxu0 0
    %1025 = vmatpush1.bf16.msra.mxu0 0
    %1026 = vmatprep.subr.bf16.mxu0 0
    %1027 = vmatpush1.bf16.msra.mxu0 0
    %1028 = vmatprep.subr.bf16.mxu0 0
    %1029 = vmatpush1.bf16.msra.mxu0 0
    %1030 = vmatprep.subr.bf16.mxu0 0
    %1031 = vmatpush1.bf16.msra.mxu0 0
    %1032 = vmatprep.subr.bf16.mxu0 0
    %1033 = vmatpush1.bf16.msra.mxu0 0
    %1034 = vmatprep.subr.bf16.mxu0 0
    %1035 = vmatpush1.bf16.msra.mxu0 0
    %1036 = vmatprep.mubr.bf16.mxu0 0
    %1037 = vmatmul.mubr.bf16.gmra.mrb[0].mxu0 %v954
    %v1038 = vpop.f32.mrb[0].mxu0
    %v1039 = vadd.f32 0.0, %v1038
    %v1040 = vpop.f32.mrb[0].mxu0
    %v1041 = vadd.f32 0.0, %v1040
    %v1042 = vpop.f32.mrb[0].mxu0
    %v1043 = vadd.f32 0.0, %v1042
    %v1044 = vpop.f32.mrb[0].mxu0
    %v1045 = vadd.f32 0.0, %v1044
    %1046 = vdwg.mxu0
    %v1047 = vunpack.c.l.bf16 %v957
    %v1048 = vunpack.c.l.bf16 %v958
    %v1049 = vunpack.c.l.bf16 %v959
    %v1050 = vunpack.c.l.bf16 %v960
    %v1051 = vunpack.c.h.bf16 %v957
    %v1052 = vunpack.c.h.bf16 %v958
    %v1053 = vunpack.c.h.bf16 %v959
    %v1054 = vunpack.c.h.bf16 %v960
    %v1055 = vadd.f32 %v1047, %v996
    %v1056 = vadd.f32 %v1048, %v998
    %v1057 = vadd.f32 %v1049, %v1039
    %v1058 = vadd.f32 %v1050, %v1041
    %v1059 = vadd.f32 %v1051, %v1000
    %v1060 = vadd.f32 %v1052, %v1002
    %v1061 = vadd.f32 %v1053, %v1043
    %v1062 = vadd.f32 %v1054, %v1045
    %v1063 = vmul.f32 %v1055, 0.5
    %v1064 = vmul.f32 %v1059, 0.5
    %v1065 = vtanh.pop %v1063
    %v1066 = vtanh.pop %v1064
    %v1067 = vmul.f32 %v1065, 0.5
    %v1068 = vmul.f32 %v1066, 0.5
    %v1069 = vadd.f32 %v1067, 0.5
    %v1070 = vadd.f32 %v1068, 0.5
    %v1071 = vmul.f32 %v1056, 0.5
    %v1072 = vmul.f32 %v1060, 0.5
    %v1073 = vtanh.pop %v1071
    %v1074 = vtanh.pop %v1072
    %v1075 = vmul.f32 %v1073, 0.5
    %v1076 = vmul.f32 %v1074, 0.5
    %v1077 = vadd.f32 %v1075, 0.5
    %v1078 = vadd.f32 %v1076, 0.5
    %v1079 = vtanh.pop %v1057
    %v1080 = vtanh.pop %v1061
    %v1081 = vmul.f32 %v1058, 0.5
    %v1082 = vmul.f32 %v1062, 0.5
    %v1083 = vtanh.pop %v1081
    %v1084 = vtanh.pop %v1082
    %v1085 = vmul.f32 %v1083, 0.5
    %v1086 = vmul.f32 %v1084, 0.5
    %v1087 = vadd.f32 %v1085, 0.5
    %v1088 = vadd.f32 %v1086, 0.5
    %v1089 = vmul.f32 %v1077, %v948
    %v1090 = vmul.f32 %v1078, %v949
    %v1091 = vmul.f32 %v1069, %v1079
    %v1092 = vmul.f32 %v1070, %v1080
    %v1093 = vadd.f32 %v1089, %v1091
    %v1094 = vadd.f32 %v1090, %v1092
    %v1095 = vtanh.pop %v1093
    %v1096 = vtanh.pop %v1094
    %v1097 = vmul.f32 %v1087, %v1095
    %v1098 = vmul.f32 %v1088, %v1096
    %v1099 = vpack.c.bf16 %v1098, %v1097
    %s1100 = scalar_lea.vmem [#allocation2], 8
    %1101 = vst [vmem:[%s1100] sm:$0xff] %v1099
    %s1102 = scalar_lea.vmem [#allocation3], 64
    %v1103 = vld [vmem:[%s1102] sm:$0xff]
    %v1104 = vld [vmem:[%s1102 + $0x8] sm:$0xff]
    %v1105 = vld [vmem:[%s1102 + $0x10] sm:$0xff]
    %v1106 = vld [vmem:[%s1102 + $0x18] sm:$0xff]
    %1107 = vmatprep.subr.bf16.mxu0 %v753
    %1108 = vmatpush1.bf16.msra.mxu0 %v752
    %1109 = vmatprep.subr.bf16.mxu0 %v757
    %1110 = vmatpush1.bf16.msra.mxu0 %v756
    %1111 = vmatprep.subr.bf16.mxu0 %v761
    %1112 = vmatpush1.bf16.msra.mxu0 %v760
    %1113 = vmatprep.subr.bf16.mxu0 %v765
    %1114 = vmatpush1.bf16.msra.mxu0 %v764
    %1115 = vmatprep.subr.bf16.mxu0 %v769
    %1116 = vmatpush1.bf16.msra.mxu0 %v768
    %1117 = vmatprep.subr.bf16.mxu0 %v773
    %1118 = vmatpush1.bf16.msra.mxu0 %v772
    %1119 = vmatprep.subr.bf16.mxu0 %v777
    %1120 = vmatpush1.bf16.msra.mxu0 %v776
    %1121 = vmatprep.subr.bf16.mxu0 %v781
    %1122 = vmatpush1.bf16.msra.mxu0 %v780
    %1123 = vmatprep.subr.bf16.mxu0 0
    %1124 = vmatpush1.bf16.msra.mxu0 0
    %1125 = vmatprep.subr.bf16.mxu0 0
    %1126 = vmatpush1.bf16.msra.mxu0 0
    %1127 = vmatprep.subr.bf16.mxu0 0
    %1128 = vmatpush1.bf16.msra.mxu0 0
    %1129 = vmatprep.subr.bf16.mxu0 0
    %1130 = vmatpush1.bf16.msra.mxu0 0
    %1131 = vmatprep.subr.bf16.mxu0 0
    %1132 = vmatpush1.bf16.msra.mxu0 0
    %1133 = vmatprep.subr.bf16.mxu0 0
    %1134 = vmatpush1.bf16.msra.mxu0 0
    %1135 = vmatprep.subr.bf16.mxu0 0
    %1136 = vmatpush1.bf16.msra.mxu0 0
    %1137 = vmatprep.subr.bf16.mxu0 0
    %1138 = vmatpush1.bf16.msra.mxu0 0
    %1139 = vmatprep.mubr.bf16.mxu0 0
    %1140 = vmatmul.mubr.bf16.gmra.mrb[0].mxu0 %v1099
    %v1141 = vpop.f32.mrb[0].mxu0
    %v1142 = vadd.f32 0.0, %v1141
    %v1143 = vpop.f32.mrb[0].mxu0
    %v1144 = vadd.f32 0.0, %v1143
    %v1145 = vpop.f32.mrb[0].mxu0
    %v1146 = vadd.f32 0.0, %v1145
    %v1147 = vpop.f32.mrb[0].mxu0
    %v1148 = vadd.f32 0.0, %v1147
    %1149 = vdwg.mxu0
    %1150 = vmatprep.subr.bf16.mxu0 %v755
    %1151 = vmatpush1.bf16.msra.mxu0 %v754
    %1152 = vmatprep.subr.bf16.mxu0 %v759
    %1153 = vmatpush1.bf16.msra.mxu0 %v758
    %1154 = vmatprep.subr.bf16.mxu0 %v763
    %1155 = vmatpush1.bf16.msra.mxu0 %v762
    %1156 = vmatprep.subr.bf16.mxu0 %v767
    %1157 = vmatpush1.bf16.msra.mxu0 %v766
    %1158 = vmatprep.subr.bf16.mxu0 %v771
    %1159 = vmatpush1.bf16.msra.mxu0 %v770
    %1160 = vmatprep.subr.bf16.mxu0 %v775
    %1161 = vmatpush1.bf16.msra.mxu0 %v774
    %1162 = vmatprep.subr.bf16.mxu0 %v779
    %1163 = vmatpush1.bf16.msra.mxu0 %v778
    %1164 = vmatprep.subr.bf16.mxu0 %v783
    %1165 = vmatpush1.bf16.msra.mxu0 %v782
    %1166 = vmatprep.subr.bf16.mxu0 0
    %1167 = vmatpush1.bf16.msra.mxu0 0
    %1168 = vmatprep.subr.bf16.mxu0 0
    %1169 = vmatpush1.bf16.msra.mxu0 0
    %1170 = vmatprep.subr.bf16.mxu0 0
    %1171 = vmatpush1.bf16.msra.mxu0 0
    %1172 = vmatprep.subr.bf16.mxu0 0
    %1173 = vmatpush1.bf16.msra.mxu0 0
    %1174 = vmatprep.subr.bf16.mxu0 0
    %1175 = vmatpush1.bf16.msra.mxu0 0
    %1176 = vmatprep.subr.bf16.mxu0 0
    %1177 = vmatpush1.bf16.msra.mxu0 0
    %1178 = vmatprep.subr.bf16.mxu0 0
    %1179 = vmatpush1.bf16.msra.mxu0 0
    %1180 = vmatprep.subr.bf16.mxu0 0
    %1181 = vmatpush1.bf16.msra.mxu0 0
    %1182 = vmatprep.mubr.bf16.mxu0 0
    %1183 = vmatmul.mubr.bf16.gmra.mrb[0].mxu0 %v1099
    %v1184 = vpop.f32.mrb[0].mxu0
    %v1185 = vadd.f32 0.0, %v1184
    %v1186 = vpop.f32.mrb[0].mxu0
    %v1187 = vadd.f32 0.0, %v1186
    %v1188 = vpop.f32.mrb[0].mxu0
    %v1189 = vadd.f32 0.0, %v1188
    %v1190 = vpop.f32.mrb[0].mxu0
    %v1191 = vadd.f32 0.0, %v1190
    %1192 = vdwg.mxu0
    %v1193 = vunpack.c.l.bf16 %v1103
    %v1194 = vunpack.c.l.bf16 %v1104
    %v1195 = vunpack.c.l.bf16 %v1105
    %v1196 = vunpack.c.l.bf16 %v1106
    %v1197 = vunpack.c.h.bf16 %v1103
    %v1198 = vunpack.c.h.bf16 %v1104
    %v1199 = vunpack.c.h.bf16 %v1105
    %v1200 = vunpack.c.h.bf16 %v1106
    %v1201 = vadd.f32 %v1193, %v1142
    %v1202 = vadd.f32 %v1194, %v1144
    %v1203 = vadd.f32 %v1195, %v1185
    %v1204 = vadd.f32 %v1196, %v1187
    %v1205 = vadd.f32 %v1197, %v1146
    %v1206 = vadd.f32 %v1198, %v1148
    %v1207 = vadd.f32 %v1199, %v1189
    %v1208 = vadd.f32 %v1200, %v1191
    %v1209 = vmul.f32 %v1201, 0.5
    %v1210 = vmul.f32 %v1205, 0.5
    %v1211 = vtanh.pop %v1209
    %v1212 = vtanh.pop %v1210
    %v1213 = vmul.f32 %v1211, 0.5
    %v1214 = vmul.f32 %v1212, 0.5
    %v1215 = vadd.f32 %v1213, 0.5
    %v1216 = vadd.f32 %v1214, 0.5
    %v1217 = vmul.f32 %v1202, 0.5
    %v1218 = vmul.f32 %v1206, 0.5
    %v1219 = vtanh.pop %v1217
    %v1220 = vtanh.pop %v1218
    %v1221 = vmul.f32 %v1219, 0.5
    %v1222 = vmul.f32 %v1220, 0.5
    %v1223 = vadd.f32 %v1221, 0.5
    %v1224 = vadd.f32 %v1222, 0.5
    %v1225 = vtanh.pop %v1203
    %v1226 = vtanh.pop %v1207
    %v1227 = vmul.f32 %v1204, 0.5
    %v1228 = vmul.f32 %v1208, 0.5
    %v1229 = vtanh.pop %v1227
    %v1230 = vtanh.pop %v1228
    %v1231 = vmul.f32 %v1229, 0.5
    %v1232 = vmul.f32 %v1230, 0.5
    %v1233 = vadd.f32 %v1231, 0.5
    %v1234 = vadd.f32 %v1232, 0.5
    %v1235 = vmul.f32 %v1223, %v1093
    %v1236 = vmul.f32 %v1224, %v1094
    %v1237 = vmul.f32 %v1215, %v1225
    %v1238 = vmul.f32 %v1216, %v1226
    %v1239 = vadd.f32 %v1235, %v1237
    %v1240 = vadd.f32 %v1236, %v1238
    %v1241 = vtanh.pop %v1239
    %v1242 = vtanh.pop %v1240
    %v1243 = vmul.f32 %v1233, %v1241
    %v1244 = vmul.f32 %v1234, %v1242
    %v1245 = vpack.c.bf16 %v1244, %v1243
    %s1246 = scalar_lea.vmem [#allocation2], 16
    %1247 = vst [vmem:[%s1246] sm:$0xff] %v1245
    %s1248 = scalar_lea.vmem [#allocation3], 96
    %v1249 = vld [vmem:[%s1248] sm:$0xff]
    %v1250 = vld [vmem:[%s1248 + $0x8] sm:$0xff]
    %v1251 = vld [vmem:[%s1248 + $0x10] sm:$0xff]
    %v1252 = vld [vmem:[%s1248 + $0x18] sm:$0xff]
    %1253 = vmatprep.subr.bf16.mxu0 %v753
    %1254 = vmatpush1.bf16.msra.mxu0 %v752
    %1255 = vmatprep.subr.bf16.mxu0 %v757
    %1256 = vmatpush1.bf16.msra.mxu0 %v756
    %1257 = vmatprep.subr.bf16.mxu0 %v761
    %1258 = vmatpush1.bf16.msra.mxu0 %v760
    %1259 = vmatprep.subr.bf16.mxu0 %v765
    %1260 = vmatpush1.bf16.msra.mxu0 %v764
    %1261 = vmatprep.subr.bf16.mxu0 %v769
    %1262 = vmatpush1.bf16.msra.mxu0 %v768
    %1263 = vmatprep.subr.bf16.mxu0 %v773
    %1264 = vmatpush1.bf16.msra.mxu0 %v772
    %1265 = vmatprep.subr.bf16.mxu0 %v777
    %1266 = vmatpush1.bf16.msra.mxu0 %v776
    %1267 = vmatprep.subr.bf16.mxu0 %v781
    %1268 = vmatpush1.bf16.msra.mxu0 %v780
    %1269 = vmatprep.subr.bf16.mxu0 0
    %1270 = vmatpush1.bf16.msra.mxu0 0
    %1271 = vmatprep.subr.bf16.mxu0 0
    %1272 = vmatpush1.bf16.msra.mxu0 0
    %1273 = vmatprep.subr.bf16.mxu0 0
    %1274 = vmatpush1.bf16.msra.mxu0 0
    %1275 = vmatprep.subr.bf16.mxu0 0
    %1276 = vmatpush1.bf16.msra.mxu0 0
    %1277 = vmatprep.subr.bf16.mxu0 0
    %1278 = vmatpush1.bf16.msra.mxu0 0
    %1279 = vmatprep.subr.bf16.mxu0 0
    %1280 = vmatpush1.bf16.msra.mxu0 0
    %1281 = vmatprep.subr.bf16.mxu0 0
    %1282 = vmatpush1.bf16.msra.mxu0 0
    %1283 = vmatprep.subr.bf16.mxu0 0
    %1284 = vmatpush1.bf16.msra.mxu0 0
    %1285 = vmatprep.mubr.bf16.mxu0 0
    %1286 = vmatmul.mubr.bf16.gmra.mrb[0].mxu0 %v1245
    %v1287 = vpop.f32.mrb[0].mxu0
    %v1288 = vadd.f32 0.0, %v1287
    %v1289 = vpop.f32.mrb[0].mxu0
    %v1290 = vadd.f32 0.0, %v1289
    %v1291 = vpop.f32.mrb[0].mxu0
    %v1292 = vadd.f32 0.0, %v1291
    %v1293 = vpop.f32.mrb[0].mxu0
    %v1294 = vadd.f32 0.0, %v1293
    %1295 = vdwg.mxu0
    %1296 = vmatprep.subr.bf16.mxu0 %v755
    %1297 = vmatpush1.bf16.msra.mxu0 %v754
    %1298 = vmatprep.subr.bf16.mxu0 %v759
    %1299 = vmatpush1.bf16.msra.mxu0 %v758
    %1300 = vmatprep.subr.bf16.mxu0 %v763
    %1301 = vmatpush1.bf16.msra.mxu0 %v762
    %1302 = vmatprep.subr.bf16.mxu0 %v767
    %1303 = vmatpush1.bf16.msra.mxu0 %v766
    %1304 = vmatprep.subr.bf16.mxu0 %v771
    %1305 = vmatpush1.bf16.msra.mxu0 %v770
    %1306 = vmatprep.subr.bf16.mxu0 %v775
    %1307 = vmatpush1.bf16.msra.mxu0 %v774
    %1308 = vmatprep.subr.bf16.mxu0 %v779
    %1309 = vmatpush1.bf16.msra.mxu0 %v778
    %1310 = vmatprep.subr.bf16.mxu0 %v783
    %1311 = vmatpush1.bf16.msra.mxu0 %v782
    %1312 = vmatprep.subr.bf16.mxu0 0
    %1313 = vmatpush1.bf16.msra.mxu0 0
    %1314 = vmatprep.subr.bf16.mxu0 0
    %1315 = vmatpush1.bf16.msra.mxu0 0
    %1316 = vmatprep.subr.bf16.mxu0 0
    %1317 = vmatpush1.bf16.msra.mxu0 0
    %1318 = vmatprep.subr.bf16.mxu0 0
    %1319 = vmatpush1.bf16.msra.mxu0 0
    %1320 = vmatprep.subr.bf16.mxu0 0
    %1321 = vmatpush1.bf16.msra.mxu0 0
    %1322 = vmatprep.subr.bf16.mxu0 0
    %1323 = vmatpush1.bf16.msra.mxu0 0
    %1324 = vmatprep.subr.bf16.mxu0 0
    %1325 = vmatpush1.bf16.msra.mxu0 0
    %1326 = vmatprep.subr.bf16.mxu0 0
    %1327 = vmatpush1.bf16.msra.mxu0 0
    %1328 = vmatprep.mubr.bf16.mxu0 0
    %1329 = vmatmul.mubr.bf16.gmra.mrb[0].mxu0 %v1245
    %v1330 = vpop.f32.mrb[0].mxu0
    %v1331 = vadd.f32 0.0, %v1330
    %v1332 = vpop.f32.mrb[0].mxu0
    %v1333 = vadd.f32 0.0, %v1332
    %v1334 = vpop.f32.mrb[0].mxu0
    %v1335 = vadd.f32 0.0, %v1334
    %v1336 = vpop.f32.mrb[0].mxu0
    %v1337 = vadd.f32 0.0, %v1336
    %1338 = vdwg.mxu0
    %v1339 = vunpack.c.l.bf16 %v1249
    %v1340 = vunpack.c.l.bf16 %v1250
    %v1341 = vunpack.c.l.bf16 %v1251
    %v1342 = vunpack.c.l.bf16 %v1252
    %v1343 = vunpack.c.h.bf16 %v1249
    %v1344 = vunpack.c.h.bf16 %v1250
    %v1345 = vunpack.c.h.bf16 %v1251
    %v1346 = vunpack.c.h.bf16 %v1252
    %v1347 = vadd.f32 %v1339, %v1288
    %v1348 = vadd.f32 %v1340, %v1290
    %v1349 = vadd.f32 %v1341, %v1331
    %v1350 = vadd.f32 %v1342, %v1333
    %v1351 = vadd.f32 %v1343, %v1292
    %v1352 = vadd.f32 %v1344, %v1294
    %v1353 = vadd.f32 %v1345, %v1335
    %v1354 = vadd.f32 %v1346, %v1337
    %v1355 = vmul.f32 %v1347, 0.5
    %v1356 = vmul.f32 %v1351, 0.5
    %v1357 = vtanh.pop %v1355
    %v1358 = vtanh.pop %v1356
    %v1359 = vmul.f32 %v1357, 0.5
    %v1360 = vmul.f32 %v1358, 0.5
    %v1361 = vadd.f32 %v1359, 0.5
    %v1362 = vadd.f32 %v1360, 0.5
    %v1363 = vmul.f32 %v1348, 0.5
    %v1364 = vmul.f32 %v1352, 0.5
    %v1365 = vtanh.pop %v1363
    %v1366 = vtanh.pop %v1364
    %v1367 = vmul.f32 %v1365, 0.5
    %v1368 = vmul.f32 %v1366, 0.5
    %v1369 = vadd.f32 %v1367, 0.5
    %v1370 = vadd.f32 %v1368, 0.5
    %v1371 = vtanh.pop %v1349
    %v1372 = vtanh.pop %v1353
    %v1373 = vmul.f32 %v1350, 0.5
    %v1374 = vmul.f32 %v1354, 0.5
    %v1375 = vtanh.pop %v1373
    %v1376 = vtanh.pop %v1374
    %v1377 = vmul.f32 %v1375, 0.5
    %v1378 = vmul.f32 %v1376, 0.5
    %v1379 = vadd.f32 %v1377, 0.5
    %v1380 = vadd.f32 %v1378, 0.5
    %v1381 = vmul.f32 %v1369, %v1239
    %v1382 = vmul.f32 %v1370, %v1240
    %v1383 = vmul.f32 %v1361, %v1371
    %v1384 = vmul.f32 %v1362, %v1372
    %v1385 = vadd.f32 %v1381, %v1383
    %v1386 = vadd.f32 %v1382, %v1384
    %v1387 = vtanh.pop %v1385
    %v1388 = vtanh.pop %v1386
    %v1389 = vmul.f32 %v1379, %v1387
    %v1390 = vmul.f32 %v1380, %v1388
    %v1391 = vpack.c.bf16 %v1390, %v1389
    %s1392 = scalar_lea.vmem [#allocation2], 24
    %1393 = vst [vmem:[%s1392] sm:$0xff] %v1391
    %s1394 = scalar_lea.vmem [#allocation3], 128
    %v1395 = vld [vmem:[%s1394] sm:$0xff]
    %v1396 = vld [vmem:[%s1394 + $0x8] sm:$0xff]
    %v1397 = vld [vmem:[%s1394 + $0x10] sm:$0xff]
    %v1398 = vld [vmem:[%s1394 + $0x18] sm:$0xff]
    %1399 = vmatprep.subr.bf16.mxu0 %v753
    %1400 = vmatpush1.bf16.msra.mxu0 %v752
    %1401 = vmatprep.subr.bf16.mxu0 %v757
    %1402 = vmatpush1.bf16.msra.mxu0 %v756
    %1403 = vmatprep.subr.bf16.mxu0 %v761
    %1404 = vmatpush1.bf16.msra.mxu0 %v760
    %1405 = vmatprep.subr.bf16.mxu0 %v765
    %1406 = vmatpush1.bf16.msra.mxu0 %v764
    %1407 = vmatprep.subr.bf16.mxu0 %v769
    %1408 = vmatpush1.bf16.msra.mxu0 %v768
    %1409 = vmatprep.subr.bf16.mxu0 %v773
    %1410 = vmatpush1.bf16.msra.mxu0 %v772
    %1411 = vmatprep.subr.bf16.mxu0 %v777
    %1412 = vmatpush1.bf16.msra.mxu0 %v776
    %1413 = vmatprep.subr.bf16.mxu0 %v781
    %1414 = vmatpush1.bf16.msra.mxu0 %v780
    %1415 = vmatprep.subr.bf16.mxu0 0
    %1416 = vmatpush1.bf16.msra.mxu0 0
    %1417 = vmatprep.subr.bf16.mxu0 0
    %1418 = vmatpush1.bf16.msra.mxu0 0
    %1419 = vmatprep.subr.bf16.mxu0 0
    %1420 = vmatpush1.bf16.msra.mxu0 0
    %1421 = vmatprep.subr.bf16.mxu0 0
    %1422 = vmatpush1.bf16.msra.mxu0 0
    %1423 = vmatprep.subr.bf16.mxu0 0
    %1424 = vmatpush1.bf16.msra.mxu0 0
    %1425 = vmatprep.subr.bf16.mxu0 0
    %1426 = vmatpush1.bf16.msra.mxu0 0
    %1427 = vmatprep.subr.bf16.mxu0 0
    %1428 = vmatpush1.bf16.msra.mxu0 0
    %1429 = vmatprep.subr.bf16.mxu0 0
    %1430 = vmatpush1.bf16.msra.mxu0 0
    %1431 = vmatprep.mubr.bf16.mxu0 0
    %1432 = vmatmul.mubr.bf16.gmra.mrb[0].mxu0 %v1391
    %v1433 = vpop.f32.mrb[0].mxu0
    %v1434 = vadd.f32 0.0, %v1433
    %v1435 = vpop.f32.mrb[0].mxu0
    %v1436 = vadd.f32 0.0, %v1435
    %v1437 = vpop.f32.mrb[0].mxu0
    %v1438 = vadd.f32 0.0, %v1437
    %v1439 = vpop.f32.mrb[0].mxu0
    %v1440 = vadd.f32 0.0, %v1439
    %1441 = vdwg.mxu0
    %1442 = vmatprep.subr.bf16.mxu0 %v755
    %1443 = vmatpush1.bf16.msra.mxu0 %v754
    %1444 = vmatprep.subr.bf16.mxu0 %v759
    %1445 = vmatpush1.bf16.msra.mxu0 %v758
    %1446 = vmatprep.subr.bf16.mxu0 %v763
    %1447 = vmatpush1.bf16.msra.mxu0 %v762
    %1448 = vmatprep.subr.bf16.mxu0 %v767
    %1449 = vmatpush1.bf16.msra.mxu0 %v766
    %1450 = vmatprep.subr.bf16.mxu0 %v771
    %1451 = vmatpush1.bf16.msra.mxu0 %v770
    %1452 = vmatprep.subr.bf16.mxu0 %v775
    %1453 = vmatpush1.bf16.msra.mxu0 %v774
    %1454 = vmatprep.subr.bf16.mxu0 %v779
    %1455 = vmatpush1.bf16.msra.mxu0 %v778
    %1456 = vmatprep.subr.bf16.mxu0 %v783
    %1457 = vmatpush1.bf16.msra.mxu0 %v782
    %1458 = vmatprep.subr.bf16.mxu0 0
    %1459 = vmatpush1.bf16.msra.mxu0 0
    %1460 = vmatprep.subr.bf16.mxu0 0
    %1461 = vmatpush1.bf16.msra.mxu0 0
    %1462 = vmatprep.subr.bf16.mxu0 0
    %1463 = vmatpush1.bf16.msra.mxu0 0
    %1464 = vmatprep.subr.bf16.mxu0 0
    %1465 = vmatpush1.bf16.msra.mxu0 0
    %1466 = vmatprep.subr.bf16.mxu0 0
    %1467 = vmatpush1.bf16.msra.mxu0 0
    %1468 = vmatprep.subr.bf16.mxu0 0
    %1469 = vmatpush1.bf16.msra.mxu0 0
    %1470 = vmatprep.subr.bf16.mxu0 0
    %1471 = vmatpush1.bf16.msra.mxu0 0
    %1472 = vmatprep.subr.bf16.mxu0 0
    %1473 = vmatpush1.bf16.msra.mxu0 0
    %1474 = vmatprep.mubr.bf16.mxu0 0
    %1475 = vmatmul.mubr.bf16.gmra.mrb[0].mxu0 %v1391
    %v1476 = vpop.f32.mrb[0].mxu0
    %v1477 = vadd.f32 0.0, %v1476
    %v1478 = vpop.f32.mrb[0].mxu0
    %v1479 = vadd.f32 0.0, %v1478
    %v1480 = vpop.f32.mrb[0].mxu0
    %v1481 = vadd.f32 0.0, %v1480
    %v1482 = vpop.f32.mrb[0].mxu0
    %v1483 = vadd.f32 0.0, %v1482
    %1484 = vdwg.mxu0
    %v1485 = vunpack.c.l.bf16 %v1395
    %v1486 = vunpack.c.l.bf16 %v1396
    %v1487 = vunpack.c.l.bf16 %v1397
    %v1488 = vunpack.c.l.bf16 %v1398
    %v1489 = vunpack.c.h.bf16 %v1395
    %v1490 = vunpack.c.h.bf16 %v1396
    %v1491 = vunpack.c.h.bf16 %v1397
    %v1492 = vunpack.c.h.bf16 %v1398
    %v1493 = vadd.f32 %v1485, %v1434
    %v1494 = vadd.f32 %v1486, %v1436
    %v1495 = vadd.f32 %v1487, %v1477
    %v1496 = vadd.f32 %v1488, %v1479
    %v1497 = vadd.f32 %v1489, %v1438
    %v1498 = vadd.f32 %v1490, %v1440
    %v1499 = vadd.f32 %v1491, %v1481
    %v1500 = vadd.f32 %v1492, %v1483
    %v1501 = vmul.f32 %v1493, 0.5
    %v1502 = vmul.f32 %v1497, 0.5
    %v1503 = vtanh.pop %v1501
    %v1504 = vtanh.pop %v1502
    %v1505 = vmul.f32 %v1503, 0.5
    %v1506 = vmul.f32 %v1504, 0.5
    %v1507 = vadd.f32 %v1505, 0.5
    %v1508 = vadd.f32 %v1506, 0.5
    %v1509 = vmul.f32 %v1494, 0.5
    %v1510 = vmul.f32 %v1498, 0.5
    %v1511 = vtanh.pop %v1509
    %v1512 = vtanh.pop %v1510
    %v1513 = vmul.f32 %v1511, 0.5
    %v1514 = vmul.f32 %v1512, 0.5
    %v1515 = vadd.f32 %v1513, 0.5
    %v1516 = vadd.f32 %v1514, 0.5
    %v1517 = vtanh.pop %v1495
    %v1518 = vtanh.pop %v1499
    %v1519 = vmul.f32 %v1496, 0.5
    %v1520 = vmul.f32 %v1500, 0.5
    %v1521 = vtanh.pop %v1519
    %v1522 = vtanh.pop %v1520
    %v1523 = vmul.f32 %v1521, 0.5
    %v1524 = vmul.f32 %v1522, 0.5
    %v1525 = vadd.f32 %v1523, 0.5
    %v1526 = vadd.f32 %v1524, 0.5
    %v1527 = vmul.f32 %v1515, %v1385
    %v1528 = vmul.f32 %v1516, %v1386
    %v1529 = vmul.f32 %v1507, %v1517
    %v1530 = vmul.f32 %v1508, %v1518
    %v1531 = vadd.f32 %v1527, %v1529
    %v1532 = vadd.f32 %v1528, %v1530
    %v1533 = vtanh.pop %v1531
    %v1534 = vtanh.pop %v1532
    %v1535 = vmul.f32 %v1525, %v1533
    %v1536 = vmul.f32 %v1526, %v1534
    %v1537 = vpack.c.bf16 %v1536, %v1535
    %s1538 = scalar_lea.vmem [#allocation2], 32
    %1539 = vst [vmem:[%s1538] sm:$0xff] %v1537
    %s1540 = scalar_lea.vmem [#allocation3], 160
    %v1541 = vld [vmem:[%s1540] sm:$0xff]
    %v1542 = vld [vmem:[%s1540 + $0x8] sm:$0xff]
    %v1543 = vld [vmem:[%s1540 + $0x10] sm:$0xff]
    %v1544 = vld [vmem:[%s1540 + $0x18] sm:$0xff]
    %1545 = vmatprep.subr.bf16.mxu0 %v753
    %1546 = vmatpush1.bf16.msra.mxu0 %v752
    %1547 = vmatprep.subr.bf16.mxu0 %v757
    %1548 = vmatpush1.bf16.msra.mxu0 %v756
    %1549 = vmatprep.subr.bf16.mxu0 %v761
    %1550 = vmatpush1.bf16.msra.mxu0 %v760
    %1551 = vmatprep.subr.bf16.mxu0 %v765
    %1552 = vmatpush1.bf16.msra.mxu0 %v764
    %1553 = vmatprep.subr.bf16.mxu0 %v769
    %1554 = vmatpush1.bf16.msra.mxu0 %v768
    %1555 = vmatprep.subr.bf16.mxu0 %v773
    %1556 = vmatpush1.bf16.msra.mxu0 %v772
    %1557 = vmatprep.subr.bf16.mxu0 %v777
    %1558 = vmatpush1.bf16.msra.mxu0 %v776
    %1559 = vmatprep.subr.bf16.mxu0 %v781
    %1560 = vmatpush1.bf16.msra.mxu0 %v780
    %1561 = vmatprep.subr.bf16.mxu0 0
    %1562 = vmatpush1.bf16.msra.mxu0 0
    %1563 = vmatprep.subr.bf16.mxu0 0
    %1564 = vmatpush1.bf16.msra.mxu0 0
    %1565 = vmatprep.subr.bf16.mxu0 0
    %1566 = vmatpush1.bf16.msra.mxu0 0
    %1567 = vmatprep.subr.bf16.mxu0 0
    %1568 = vmatpush1.bf16.msra.mxu0 0
    %1569 = vmatprep.subr.bf16.mxu0 0
    %1570 = vmatpush1.bf16.msra.mxu0 0
    %1571 = vmatprep.subr.bf16.mxu0 0
    %1572 = vmatpush1.bf16.msra.mxu0 0
    %1573 = vmatprep.subr.bf16.mxu0 0
    %1574 = vmatpush1.bf16.msra.mxu0 0
    %1575 = vmatprep.subr.bf16.mxu0 0
    %1576 = vmatpush1.bf16.msra.mxu0 0
    %1577 = vmatprep.mubr.bf16.mxu0 0
    %1578 = vmatmul.mubr.bf16.gmra.mrb[0].mxu0 %v1537
    %v1579 = vpop.f32.mrb[0].mxu0
    %v1580 = vadd.f32 0.0, %v1579
    %v1581 = vpop.f32.mrb[0].mxu0
    %v1582 = vadd.f32 0.0, %v1581
    %v1583 = vpop.f32.mrb[0].mxu0
    %v1584 = vadd.f32 0.0, %v1583
    %v1585 = vpop.f32.mrb[0].mxu0
    %v1586 = vadd.f32 0.0, %v1585
    %1587 = vdwg.mxu0
    %1588 = vmatprep.subr.bf16.mxu0 %v755
    %1589 = vmatpush1.bf16.msra.mxu0 %v754
    %1590 = vmatprep.subr.bf16.mxu0 %v759
    %1591 = vmatpush1.bf16.msra.mxu0 %v758
    %1592 = vmatprep.subr.bf16.mxu0 %v763
    %1593 = vmatpush1.bf16.msra.mxu0 %v762
    %1594 = vmatprep.subr.bf16.mxu0 %v767
    %1595 = vmatpush1.bf16.msra.mxu0 %v766
    %1596 = vmatprep.subr.bf16.mxu0 %v771
    %1597 = vmatpush1.bf16.msra.mxu0 %v770
    %1598 = vmatprep.subr.bf16.mxu0 %v775
    %1599 = vmatpush1.bf16.msra.mxu0 %v774
    %1600 = vmatprep.subr.bf16.mxu0 %v779
    %1601 = vmatpush1.bf16.msra.mxu0 %v778
    %1602 = vmatprep.subr.bf16.mxu0 %v783
    %1603 = vmatpush1.bf16.msra.mxu0 %v782
    %1604 = vmatprep.subr.bf16.mxu0 0
    %1605 = vmatpush1.bf16.msra.mxu0 0
    %1606 = vmatprep.subr.bf16.mxu0 0
    %1607 = vmatpush1.bf16.msra.mxu0 0
    %1608 = vmatprep.subr.bf16.mxu0 0
    %1609 = vmatpush1.bf16.msra.mxu0 0
    %1610 = vmatprep.subr.bf16.mxu0 0
    %1611 = vmatpush1.bf16.msra.mxu0 0
    %1612 = vmatprep.subr.bf16.mxu0 0
    %1613 = vmatpush1.bf16.msra.mxu0 0
    %1614 = vmatprep.subr.bf16.mxu0 0
    %1615 = vmatpush1.bf16.msra.mxu0 0
    %1616 = vmatprep.subr.bf16.mxu0 0
    %1617 = vmatpush1.bf16.msra.mxu0 0
    %1618 = vmatprep.subr.bf16.mxu0 0
    %1619 = vmatpush1.bf16.msra.mxu0 0
    %1620 = vmatprep.mubr.bf16.mxu0 0
    %1621 = vmatmul.mubr.bf16.gmra.mrb[0].mxu0 %v1537
    %v1622 = vpop.f32.mrb[0].mxu0
    %v1623 = vadd.f32 0.0, %v1622
    %v1624 = vpop.f32.mrb[0].mxu0
    %v1625 = vadd.f32 0.0, %v1624
    %v1626 = vpop.f32.mrb[0].mxu0
    %v1627 = vadd.f32 0.0, %v1626
    %v1628 = vpop.f32.mrb[0].mxu0
    %v1629 = vadd.f32 0.0, %v1628
    %1630 = vdwg.mxu0
    %v1631 = vunpack.c.l.bf16 %v1541
    %v1632 = vunpack.c.l.bf16 %v1542
    %v1633 = vunpack.c.l.bf16 %v1543
    %v1634 = vunpack.c.l.bf16 %v1544
    %v1635 = vunpack.c.h.bf16 %v1541
    %v1636 = vunpack.c.h.bf16 %v1542
    %v1637 = vunpack.c.h.bf16 %v1543
    %v1638 = vunpack.c.h.bf16 %v1544
    %v1639 = vadd.f32 %v1631, %v1580
    %v1640 = vadd.f32 %v1632, %v1582
    %v1641 = vadd.f32 %v1633, %v1623
    %v1642 = vadd.f32 %v1634, %v1625
    %v1643 = vadd.f32 %v1635, %v1584
    %v1644 = vadd.f32 %v1636, %v1586
    %v1645 = vadd.f32 %v1637, %v1627
    %v1646 = vadd.f32 %v1638, %v1629
    %v1647 = vmul.f32 %v1639, 0.5
    %v1648 = vmul.f32 %v1643, 0.5
    %v1649 = vtanh.pop %v1647
    %v1650 = vtanh.pop %v1648
    %v1651 = vmul.f32 %v1649, 0.5
    %v1652 = vmul.f32 %v1650, 0.5
    %v1653 = vadd.f32 %v1651, 0.5
    %v1654 = vadd.f32 %v1652, 0.5
    %v1655 = vmul.f32 %v1640, 0.5
    %v1656 = vmul.f32 %v1644, 0.5
    %v1657 = vtanh.pop %v1655
    %v1658 = vtanh.pop %v1656
    %v1659 = vmul.f32 %v1657, 0.5
    %v1660 = vmul.f32 %v1658, 0.5
    %v1661 = vadd.f32 %v1659, 0.5
    %v1662 = vadd.f32 %v1660, 0.5
    %v1663 = vtanh.pop %v1641
    %v1664 = vtanh.pop %v1645
    %v1665 = vmul.f32 %v1642, 0.5
    %v1666 = vmul.f32 %v1646, 0.5
    %v1667 = vtanh.pop %v1665
    %v1668 = vtanh.pop %v1666
    %v1669 = vmul.f32 %v1667, 0.5
    %v1670 = vmul.f32 %v1668, 0.5
    %v1671 = vadd.f32 %v1669, 0.5
    %v1672 = vadd.f32 %v1670, 0.5
    %v1673 = vmul.f32 %v1661, %v1531
    %v1674 = vmul.f32 %v1662, %v1532
    %v1675 = vmul.f32 %v1653, %v1663
    %v1676 = vmul.f32 %v1654, %v1664
    %v1677 = vadd.f32 %v1673, %v1675
    %v1678 = vadd.f32 %v1674, %v1676
    %v1679 = vtanh.pop %v1677
    %v1680 = vtanh.pop %v1678
    %v1681 = vmul.f32 %v1671, %v1679
    %v1682 = vmul.f32 %v1672, %v1680
    %v1683 = vpack.c.bf16 %v1682, %v1681
    %s1684 = scalar_lea.vmem [#allocation2], 40
    %1685 = vst [vmem:[%s1684] sm:$0xff] %v1683
    %s1686 = scalar_lea.vmem [#allocation3], 192
    %v1687 = vld [vmem:[%s1686] sm:$0xff]
    %v1688 = vld [vmem:[%s1686 + $0x8] sm:$0xff]
    %v1689 = vld [vmem:[%s1686 + $0x10] sm:$0xff]
    %v1690 = vld [vmem:[%s1686 + $0x18] sm:$0xff]
    %1691 = vmatprep.subr.bf16.mxu0 %v753
    %1692 = vmatpush1.bf16.msra.mxu0 %v752
    %1693 = vmatprep.subr.bf16.mxu0 %v757
    %1694 = vmatpush1.bf16.msra.mxu0 %v756
    %1695 = vmatprep.subr.bf16.mxu0 %v761
    %1696 = vmatpush1.bf16.msra.mxu0 %v760
    %1697 = vmatprep.subr.bf16.mxu0 %v765
    %1698 = vmatpush1.bf16.msra.mxu0 %v764
    %1699 = vmatprep.subr.bf16.mxu0 %v769
    %1700 = vmatpush1.bf16.msra.mxu0 %v768
    %1701 = vmatprep.subr.bf16.mxu0 %v773
    %1702 = vmatpush1.bf16.msra.mxu0 %v772
    %1703 = vmatprep.subr.bf16.mxu0 %v777
    %1704 = vmatpush1.bf16.msra.mxu0 %v776
    %1705 = vmatprep.subr.bf16.mxu0 %v781
    %1706 = vmatpush1.bf16.msra.mxu0 %v780
    %1707 = vmatprep.subr.bf16.mxu0 0
    %1708 = vmatpush1.bf16.msra.mxu0 0
    %1709 = vmatprep.subr.bf16.mxu0 0
    %1710 = vmatpush1.bf16.msra.mxu0 0
    %1711 = vmatprep.subr.bf16.mxu0 0
    %1712 = vmatpush1.bf16.msra.mxu0 0
    %1713 = vmatprep.subr.bf16.mxu0 0
    %1714 = vmatpush1.bf16.msra.mxu0 0
    %1715 = vmatprep.subr.bf16.mxu0 0
    %1716 = vmatpush1.bf16.msra.mxu0 0
    %1717 = vmatprep.subr.bf16.mxu0 0
    %1718 = vmatpush1.bf16.msra.mxu0 0
    %1719 = vmatprep.subr.bf16.mxu0 0
    %1720 = vmatpush1.bf16.msra.mxu0 0
    %1721 = vmatprep.subr.bf16.mxu0 0
    %1722 = vmatpush1.bf16.msra.mxu0 0
    %1723 = vmatprep.mubr.bf16.mxu0 0
    %1724 = vmatmul.mubr.bf16.gmra.mrb[0].mxu0 %v1683
    %v1725 = vpop.f32.mrb[0].mxu0
    %v1726 = vadd.f32 0.0, %v1725
    %v1727 = vpop.f32.mrb[0].mxu0
    %v1728 = vadd.f32 0.0, %v1727
    %v1729 = vpop.f32.mrb[0].mxu0
    %v1730 = vadd.f32 0.0, %v1729
    %v1731 = vpop.f32.mrb[0].mxu0
    %v1732 = vadd.f32 0.0, %v1731
    %1733 = vdwg.mxu0
    %1734 = vmatprep.subr.bf16.mxu0 %v755
    %1735 = vmatpush1.bf16.msra.mxu0 %v754
    %1736 = vmatprep.subr.bf16.mxu0 %v759
    %1737 = vmatpush1.bf16.msra.mxu0 %v758
    %1738 = vmatprep.subr.bf16.mxu0 %v763
    %1739 = vmatpush1.bf16.msra.mxu0 %v762
    %1740 = vmatprep.subr.bf16.mxu0 %v767
    %1741 = vmatpush1.bf16.msra.mxu0 %v766
    %1742 = vmatprep.subr.bf16.mxu0 %v771
    %1743 = vmatpush1.bf16.msra.mxu0 %v770
    %1744 = vmatprep.subr.bf16.mxu0 %v775
    %1745 = vmatpush1.bf16.msra.mxu0 %v774
    %1746 = vmatprep.subr.bf16.mxu0 %v779
    %1747 = vmatpush1.bf16.msra.mxu0 %v778
    %1748 = vmatprep.subr.bf16.mxu0 %v783
    %1749 = vmatpush1.bf16.msra.mxu0 %v782
    %1750 = vmatprep.subr.bf16.mxu0 0
    %1751 = vmatpush1.bf16.msra.mxu0 0
    %1752 = vmatprep.subr.bf16.mxu0 0
    %1753 = vmatpush1.bf16.msra.mxu0 0
    %1754 = vmatprep.subr.bf16.mxu0 0
    %1755 = vmatpush1.bf16.msra.mxu0 0
    %1756 = vmatprep.subr.bf16.mxu0 0
    %1757 = vmatpush1.bf16.msra.mxu0 0
    %1758 = vmatprep.subr.bf16.mxu0 0
    %1759 = vmatpush1.bf16.msra.mxu0 0
    %1760 = vmatprep.subr.bf16.mxu0 0
    %1761 = vmatpush1.bf16.msra.mxu0 0
    %1762 = vmatprep.subr.bf16.mxu0 0
    %1763 = vmatpush1.bf16.msra.mxu0 0
    %1764 = vmatprep.subr.bf16.mxu0 0
    %1765 = vmatpush1.bf16.msra.mxu0 0
    %1766 = vmatprep.mubr.bf16.mxu0 0
    %1767 = vmatmul.mubr.bf16.gmra.mrb[0].mxu0 %v1683
    %v1768 = vpop.f32.mrb[0].mxu0
    %v1769 = vadd.f32 0.0, %v1768
    %v1770 = vpop.f32.mrb[0].mxu0
    %v1771 = vadd.f32 0.0, %v1770
    %v1772 = vpop.f32.mrb[0].mxu0
    %v1773 = vadd.f32 0.0, %v1772
    %v1774 = vpop.f32.mrb[0].mxu0
    %v1775 = vadd.f32 0.0, %v1774
    %1776 = vdwg.mxu0
    %v1777 = vunpack.c.l.bf16 %v1687
    %v1778 = vunpack.c.l.bf16 %v1688
    %v1779 = vunpack.c.l.bf16 %v1689
    %v1780 = vunpack.c.l.bf16 %v1690
    %v1781 = vunpack.c.h.bf16 %v1687
    %v1782 = vunpack.c.h.bf16 %v1688
    %v1783 = vunpack.c.h.bf16 %v1689
    %v1784 = vunpack.c.h.bf16 %v1690
    %v1785 = vadd.f32 %v1777, %v1726
    %v1786 = vadd.f32 %v1778, %v1728
    %v1787 = vadd.f32 %v1779, %v1769
    %v1788 = vadd.f32 %v1780, %v1771
    %v1789 = vadd.f32 %v1781, %v1730
    %v1790 = vadd.f32 %v1782, %v1732
    %v1791 = vadd.f32 %v1783, %v1773
    %v1792 = vadd.f32 %v1784, %v1775
    %v1793 = vmul.f32 %v1785, 0.5
    %v1794 = vmul.f32 %v1789, 0.5
    %v1795 = vtanh.pop %v1793
    %v1796 = vtanh.pop %v1794
    %v1797 = vmul.f32 %v1795, 0.5
    %v1798 = vmul.f32 %v1796, 0.5
    %v1799 = vadd.f32 %v1797, 0.5
    %v1800 = vadd.f32 %v1798, 0.5
    %v1801 = vmul.f32 %v1786, 0.5
    %v1802 = vmul.f32 %v1790, 0.5
    %v1803 = vtanh.pop %v1801
    %v1804 = vtanh.pop %v1802
    %v1805 = vmul.f32 %v1803, 0.5
    %v1806 = vmul.f32 %v1804, 0.5
    %v1807 = vadd.f32 %v1805, 0.5
    %v1808 = vadd.f32 %v1806, 0.5
    %v1809 = vtanh.pop %v1787
    %v1810 = vtanh.pop %v1791
    %v1811 = vmul.f32 %v1788, 0.5
    %v1812 = vmul.f32 %v1792, 0.5
    %v1813 = vtanh.pop %v1811
    %v1814 = vtanh.pop %v1812
    %v1815 = vmul.f32 %v1813, 0.5
    %v1816 = vmul.f32 %v1814, 0.5
    %v1817 = vadd.f32 %v1815, 0.5
    %v1818 = vadd.f32 %v1816, 0.5
    %v1819 = vmul.f32 %v1807, %v1677
    %v1820 = vmul.f32 %v1808, %v1678
    %v1821 = vmul.f32 %v1799, %v1809
    %v1822 = vmul.f32 %v1800, %v1810
    %v1823 = vadd.f32 %v1819, %v1821
    %v1824 = vadd.f32 %v1820, %v1822
    %v1825 = vtanh.pop %v1823
    %v1826 = vtanh.pop %v1824
    %v1827 = vmul.f32 %v1817, %v1825
    %v1828 = vmul.f32 %v1818, %v1826
    %v1829 = vpack.c.bf16 %v1828, %v1827
    %s1830 = scalar_lea.vmem [#allocation2], 48
    %1831 = vst [vmem:[%s1830] sm:$0xff] %v1829
    %s1832 = scalar_lea.vmem [#allocation3], 224
    %v1833 = vld [vmem:[%s1832] sm:$0xff]
    %v1834 = vld [vmem:[%s1832 + $0x8] sm:$0xff]
    %v1835 = vld [vmem:[%s1832 + $0x10] sm:$0xff]
    %v1836 = vld [vmem:[%s1832 + $0x18] sm:$0xff]
    %1837 = vmatprep.subr.bf16.mxu0 %v753
    %1838 = vmatpush1.bf16.msra.mxu0 %v752
    %1839 = vmatprep.subr.bf16.mxu0 %v757
    %1840 = vmatpush1.bf16.msra.mxu0 %v756
    %1841 = vmatprep.subr.bf16.mxu0 %v761
    %1842 = vmatpush1.bf16.msra.mxu0 %v760
    %1843 = vmatprep.subr.bf16.mxu0 %v765
    %1844 = vmatpush1.bf16.msra.mxu0 %v764
    %1845 = vmatprep.subr.bf16.mxu0 %v769
    %1846 = vmatpush1.bf16.msra.mxu0 %v768
    %1847 = vmatprep.subr.bf16.mxu0 %v773
    %1848 = vmatpush1.bf16.msra.mxu0 %v772
    %1849 = vmatprep.subr.bf16.mxu0 %v777
    %1850 = vmatpush1.bf16.msra.mxu0 %v776
    %1851 = vmatprep.subr.bf16.mxu0 %v781
    %1852 = vmatpush1.bf16.msra.mxu0 %v780
    %1853 = vmatprep.subr.bf16.mxu0 0
    %1854 = vmatpush1.bf16.msra.mxu0 0
    %1855 = vmatprep.subr.bf16.mxu0 0
    %1856 = vmatpush1.bf16.msra.mxu0 0
    %1857 = vmatprep.subr.bf16.mxu0 0
    %1858 = vmatpush1.bf16.msra.mxu0 0
    %1859 = vmatprep.subr.bf16.mxu0 0
    %1860 = vmatpush1.bf16.msra.mxu0 0
    %1861 = vmatprep.subr.bf16.mxu0 0
    %1862 = vmatpush1.bf16.msra.mxu0 0
    %1863 = vmatprep.subr.bf16.mxu0 0
    %1864 = vmatpush1.bf16.msra.mxu0 0
    %1865 = vmatprep.subr.bf16.mxu0 0
    %1866 = vmatpush1.bf16.msra.mxu0 0
    %1867 = vmatprep.subr.bf16.mxu0 0
    %1868 = vmatpush1.bf16.msra.mxu0 0
    %1869 = vmatprep.mubr.bf16.mxu0 0
    %1870 = vmatmul.mubr.bf16.gmra.mrb[0].mxu0 %v1829
    %v1871 = vpop.f32.mrb[0].mxu0
    %v1872 = vadd.f32 0.0, %v1871
    %v1873 = vpop.f32.mrb[0].mxu0
    %v1874 = vadd.f32 0.0, %v1873
    %v1875 = vpop.f32.mrb[0].mxu0
    %v1876 = vadd.f32 0.0, %v1875
    %v1877 = vpop.f32.mrb[0].mxu0
    %v1878 = vadd.f32 0.0, %v1877
    %1879 = vdwg.mxu0
    %1880 = vmatprep.subr.bf16.mxu0 %v755
    %1881 = vmatpush1.bf16.msra.mxu0 %v754
    %1882 = vmatprep.subr.bf16.mxu0 %v759
    %1883 = vmatpush1.bf16.msra.mxu0 %v758
    %1884 = vmatprep.subr.bf16.mxu0 %v763
    %1885 = vmatpush1.bf16.msra.mxu0 %v762
    %1886 = vmatprep.subr.bf16.mxu0 %v767
    %1887 = vmatpush1.bf16.msra.mxu0 %v766
    %1888 = vmatprep.subr.bf16.mxu0 %v771
    %1889 = vmatpush1.bf16.msra.mxu0 %v770
    %1890 = vmatprep.subr.bf16.mxu0 %v775
    %1891 = vmatpush1.bf16.msra.mxu0 %v774
    %1892 = vmatprep.subr.bf16.mxu0 %v779
    %1893 = vmatpush1.bf16.msra.mxu0 %v778
    %1894 = vmatprep.subr.bf16.mxu0 %v783
    %1895 = vmatpush1.bf16.msra.mxu0 %v782
    %1896 = vmatprep.subr.bf16.mxu0 0
    %1897 = vmatpush1.bf16.msra.mxu0 0
    %1898 = vmatprep.subr.bf16.mxu0 0
    %1899 = vmatpush1.bf16.msra.mxu0 0
    %1900 = vmatprep.subr.bf16.mxu0 0
    %1901 = vmatpush1.bf16.msra.mxu0 0
    %1902 = vmatprep.subr.bf16.mxu0 0
    %1903 = vmatpush1.bf16.msra.mxu0 0
    %1904 = vmatprep.subr.bf16.mxu0 0
    %1905 = vmatpush1.bf16.msra.mxu0 0
    %1906 = vmatprep.subr.bf16.mxu0 0
    %1907 = vmatpush1.bf16.msra.mxu0 0
    %1908 = vmatprep.subr.bf16.mxu0 0
    %1909 = vmatpush1.bf16.msra.mxu0 0
    %1910 = vmatprep.subr.bf16.mxu0 0
    %1911 = vmatpush1.bf16.msra.mxu0 0
    %1912 = vmatprep.mubr.bf16.mxu0 0
    %1913 = vmatmul.mubr.bf16.gmra.mrb[0].mxu0 %v1829
    %v1914 = vpop.f32.mrb[0].mxu0
    %v1915 = vadd.f32 0.0, %v1914
    %v1916 = vpop.f32.mrb[0].mxu0
    %v1917 = vadd.f32 0.0, %v1916
    %v1918 = vpop.f32.mrb[0].mxu0
    %v1919 = vadd.f32 0.0, %v1918
    %v1920 = vpop.f32.mrb[0].mxu0
    %v1921 = vadd.f32 0.0, %v1920
    %1922 = vdwg.mxu0
    %v1923 = vunpack.c.l.bf16 %v1833
    %v1924 = vunpack.c.l.bf16 %v1834
    %v1925 = vunpack.c.l.bf16 %v1835
    %v1926 = vunpack.c.l.bf16 %v1836
    %v1927 = vunpack.c.h.bf16 %v1833
    %v1928 = vunpack.c.h.bf16 %v1834
    %v1929 = vunpack.c.h.bf16 %v1835
    %v1930 = vunpack.c.h.bf16 %v1836
    %v1931 = vadd.f32 %v1923, %v1872
    %v1932 = vadd.f32 %v1924, %v1874
    %v1933 = vadd.f32 %v1925, %v1915
    %v1934 = vadd.f32 %v1926, %v1917
    %v1935 = vadd.f32 %v1927, %v1876
    %v1936 = vadd.f32 %v1928, %v1878
    %v1937 = vadd.f32 %v1929, %v1919
    %v1938 = vadd.f32 %v1930, %v1921
    %v1939 = vmul.f32 %v1931, 0.5
    %v1940 = vmul.f32 %v1935, 0.5
    %v1941 = vtanh.pop %v1939
    %v1942 = vtanh.pop %v1940
    %v1943 = vmul.f32 %v1941, 0.5
    %v1944 = vmul.f32 %v1942, 0.5
    %v1945 = vadd.f32 %v1943, 0.5
    %v1946 = vadd.f32 %v1944, 0.5
    %v1947 = vmul.f32 %v1932, 0.5
    %v1948 = vmul.f32 %v1936, 0.5
    %v1949 = vtanh.pop %v1947
    %v1950 = vtanh.pop %v1948
    %v1951 = vmul.f32 %v1949, 0.5
    %v1952 = vmul.f32 %v1950, 0.5
    %v1953 = vadd.f32 %v1951, 0.5
    %v1954 = vadd.f32 %v1952, 0.5
    %v1955 = vtanh.pop %v1933
    %v1956 = vtanh.pop %v1937
    %v1957 = vmul.f32 %v1934, 0.5
    %v1958 = vmul.f32 %v1938, 0.5
    %v1959 = vtanh.pop %v1957
    %v1960 = vtanh.pop %v1958
    %v1961 = vmul.f32 %v1959, 0.5
    %v1962 = vmul.f32 %v1960, 0.5
    %v1963 = vadd.f32 %v1961, 0.5
    %v1964 = vadd.f32 %v1962, 0.5
    %v1965 = vmul.f32 %v1953, %v1823
    %v1966 = vmul.f32 %v1954, %v1824
    %v1967 = vmul.f32 %v1945, %v1955
    %v1968 = vmul.f32 %v1946, %v1956
    %v1969 = vadd.f32 %v1965, %v1967
    %v1970 = vadd.f32 %v1966, %v1968
    %v1971 = vtanh.pop %v1969
    %v1972 = vtanh.pop %v1970
    %v1973 = vmul.f32 %v1963, %v1971
    %v1974 = vmul.f32 %v1964, %v1972
    %v1975 = vpack.c.bf16 %v1974, %v1973
    %s1976 = scalar_lea.vmem [#allocation2], 56
    %1977 = vst [vmem:[%s1976] sm:$0xff] %v1975
    %v1978 = vld [vmem:[#allocation2] sm:$0xff]
    %v1979 = vld [vmem:[#allocation2 + $0x8] sm:$0xff]
    %v1980 = vld [vmem:[#allocation2 + $0x10] sm:$0xff]
    %v1981 = vld [vmem:[#allocation2 + $0x18] sm:$0xff]
    %v1982 = vld [vmem:[#allocation2 + $0x20] sm:$0xff]
    %v1983 = vld [vmem:[#allocation2 + $0x28] sm:$0xff]
    %v1984 = vld [vmem:[#allocation2 + $0x30] sm:$0xff]
    %v1985 = vld [vmem:[#allocation2 + $0x38] sm:$0xff]
    %s1986 = scalar_lea.vmem [#allocation4], 256
    %v1987 = vld [vmem:[%s1986] sm:$0xff]
    %v1988 = vld [vmem:[%s1986 + $0x8] sm:$0xff]
    %v1989 = vld [vmem:[%s1986 + $0x10] sm:$0xff]
    %v1990 = vld [vmem:[%s1986 + $0x18] sm:$0xff]
    %v1991 = vld [vmem:[%s1986 + $0x20] sm:$0xff]
    %v1992 = vld [vmem:[%s1986 + $0x28] sm:$0xff]
    %v1993 = vld [vmem:[%s1986 + $0x30] sm:$0xff]
    %v1994 = vld [vmem:[%s1986 + $0x38] sm:$0xff]
    %v1995 = vld [vmem:[%s1986 + $0x40] sm:$0xff]
    %v1996 = vld [vmem:[%s1986 + $0x48] sm:$0xff]
    %v1997 = vld [vmem:[%s1986 + $0x50] sm:$0xff]
    %v1998 = vld [vmem:[%s1986 + $0x58] sm:$0xff]
    %v1999 = vld [vmem:[%s1986 + $0x60] sm:$0xff]
    %v2000 = vld [vmem:[%s1986 + $0x68] sm:$0xff]
    %v2001 = vld [vmem:[%s1986 + $0x70] sm:$0xff]
    %v2002 = vld [vmem:[%s1986 + $0x78] sm:$0xff]
    %v2003 = vld [vmem:[%s1986 + $0x80] sm:$0xff]
    %v2004 = vld [vmem:[%s1986 + $0x88] sm:$0xff]
    %v2005 = vld [vmem:[%s1986 + $0x90] sm:$0xff]
    %v2006 = vld [vmem:[%s1986 + $0x98] sm:$0xff]
    %v2007 = vld [vmem:[%s1986 + $0xa0] sm:$0xff]
    %v2008 = vld [vmem:[%s1986 + $0xa8] sm:$0xff]
    %v2009 = vld [vmem:[%s1986 + $0xb0] sm:$0xff]
    %v2010 = vld [vmem:[%s1986 + $0xb8] sm:$0xff]
    %v2011 = vld [vmem:[%s1986 + $0xc0] sm:$0xff]
    %v2012 = vld [vmem:[%s1986 + $0xc8] sm:$0xff]
    %v2013 = vld [vmem:[%s1986 + $0xd0] sm:$0xff]
    %v2014 = vld [vmem:[%s1986 + $0xd8] sm:$0xff]
    %v2015 = vld [vmem:[%s1986 + $0xe0] sm:$0xff]
    %v2016 = vld [vmem:[%s1986 + $0xe8] sm:$0xff]
    %v2017 = vld [vmem:[%s1986 + $0xf0] sm:$0xff]
    %v2018 = vld [vmem:[%s1986 + $0xf8] sm:$0xff]
    %s2019 = scalar_lea.vmem %s3, 4
    %v2020 = vld [vmem:[%s2019] sm:$0xf]
    %v2022 = vlaneseq
    %v2023 = vshrl.u32 %v2022, 7
    %v2024 = vsub.s32 0, %v2023
    %v2025 = vrot.slane %v2020, %v2024
    %v2026 = vlaneseq
    %v2027 = vshrl.u32 %v2026, 7
    %v2028 = vsub.s32 1, %v2027
    %v2029 = vrot.slane %v2020, %v2028
    %v2030 = vlaneseq
    %v2031 = vshrl.u32 %v2030, 7
    %v2032 = vsub.s32 2, %v2031
    %v2033 = vrot.slane %v2020, %v2032
    %v2034 = vlaneseq
    %v2035 = vshrl.u32 %v2034, 7
    %v2036 = vsub.s32 3, %v2035
    %v2037 = vrot.slane %v2020, %v2036
    %v2074 = vunpack.c.l.b16 %v1987
    %v2075 = vunpack.c.h.b16 %v1987
    %v2076 = vunpack.c.l.b16 %v1988
    %v2077 = vunpack.c.h.b16 %v1988
    %v2078 = vunpack.c.l.b16 %v1989
    %v2079 = vunpack.c.h.b16 %v1989
    %v2080 = vunpack.c.l.b16 %v1990
    %v2081 = vunpack.c.h.b16 %v1990
    %v2082 = vunpack.c.l.b16 %v1991
    %v2083 = vunpack.c.h.b16 %v1991
    %v2084 = vunpack.c.l.b16 %v1992
    %v2085 = vunpack.c.h.b16 %v1992
    %v2086 = vunpack.c.l.b16 %v1993
    %v2087 = vunpack.c.h.b16 %v1993
    %v2088 = vunpack.c.l.b16 %v1994
    %v2089 = vunpack.c.h.b16 %v1994
    %v2090 = vunpack.c.l.b16 %v1995
    %v2091 = vunpack.c.h.b16 %v1995
    %v2092 = vunpack.c.l.b16 %v1996
    %v2093 = vunpack.c.h.b16 %v1996
    %v2094 = vunpack.c.l.b16 %v1997
    %v2095 = vunpack.c.h.b16 %v1997
    %v2096 = vunpack.c.l.b16 %v1998
    %v2097 = vunpack.c.h.b16 %v1998
    %v2098 = vunpack.c.l.b16 %v1999
    %v2099 = vunpack.c.h.b16 %v1999
    %v2100 = vunpack.c.l.b16 %v2000
    %v2101 = vunpack.c.h.b16 %v2000
    %v2102 = vunpack.c.l.b16 %v2001
    %v2103 = vunpack.c.h.b16 %v2001
    %v2104 = vunpack.c.l.b16 %v2002
    %v2105 = vunpack.c.h.b16 %v2002
    %v2106 = vunpack.c.l.b16 %v2003
    %v2107 = vunpack.c.h.b16 %v2003
    %v2108 = vunpack.c.l.b16 %v2004
    %v2109 = vunpack.c.h.b16 %v2004
    %v2110 = vunpack.c.l.b16 %v2005
    %v2111 = vunpack.c.h.b16 %v2005
    %v2112 = vunpack.c.l.b16 %v2006
    %v2113 = vunpack.c.h.b16 %v2006
    %v2114 = vunpack.c.l.b16 %v2007
    %v2115 = vunpack.c.h.b16 %v2007
    %v2116 = vunpack.c.l.b16 %v2008
    %v2117 = vunpack.c.h.b16 %v2008
    %v2118 = vunpack.c.l.b16 %v2009
    %v2119 = vunpack.c.h.b16 %v2009
    %v2120 = vunpack.c.l.b16 %v2010
    %v2121 = vunpack.c.h.b16 %v2010
    %v2122 = vunpack.c.l.b16 %v2011
    %v2123 = vunpack.c.h.b16 %v2011
    %v2124 = vunpack.c.l.b16 %v2012
    %v2125 = vunpack.c.h.b16 %v2012
    %v2126 = vunpack.c.l.b16 %v2013
    %v2127 = vunpack.c.h.b16 %v2013
    %v2128 = vunpack.c.l.b16 %v2014
    %v2129 = vunpack.c.h.b16 %v2014
    %v2130 = vunpack.c.l.b16 %v2015
    %v2131 = vunpack.c.h.b16 %v2015
    %v2132 = vunpack.c.l.b16 %v2016
    %v2133 = vunpack.c.h.b16 %v2016
    %v2134 = vunpack.c.l.b16 %v2017
    %v2135 = vunpack.c.h.b16 %v2017
    %v2136 = vunpack.c.l.b16 %v2018
    %v2137 = vunpack.c.h.b16 %v2018
    %v2138 = vpack.c.b16 %v2078, %v2074
    %v2139 = vpack.c.b16 %v2079, %v2075
    %v2140 = vpack.c.b16 %v2080, %v2076
    %v2141 = vpack.c.b16 %v2081, %v2077
    %v2142 = vpack.c.b16 %v2086, %v2082
    %v2143 = vpack.c.b16 %v2087, %v2083
    %v2144 = vpack.c.b16 %v2088, %v2084
    %v2145 = vpack.c.b16 %v2089, %v2085
    %v2146 = vpack.c.b16 %v2094, %v2090
    %v2147 = vpack.c.b16 %v2095, %v2091
    %v2148 = vpack.c.b16 %v2096, %v2092
    %v2149 = vpack.c.b16 %v2097, %v2093
    %v2150 = vpack.c.b16 %v2102, %v2098
    %v2151 = vpack.c.b16 %v2103, %v2099
    %v2152 = vpack.c.b16 %v2104, %v2100
    %v2153 = vpack.c.b16 %v2105, %v2101
    %v2154 = vpack.c.b16 %v2110, %v2106
    %v2155 = vpack.c.b16 %v2111, %v2107
    %v2156 = vpack.c.b16 %v2112, %v2108
    %v2157 = vpack.c.b16 %v2113, %v2109
    %v2158 = vpack.c.b16 %v2118, %v2114
    %v2159 = vpack.c.b16 %v2119, %v2115
    %v2160 = vpack.c.b16 %v2120, %v2116
    %v2161 = vpack.c.b16 %v2121, %v2117
    %v2162 = vpack.c.b16 %v2126, %v2122
    %v2163 = vpack.c.b16 %v2127, %v2123
    %v2164 = vpack.c.b16 %v2128, %v2124
    %v2165 = vpack.c.b16 %v2129, %v2125
    %v2166 = vpack.c.b16 %v2134, %v2130
    %v2167 = vpack.c.b16 %v2135, %v2131
    %v2168 = vpack.c.b16 %v2136, %v2132
    %v2169 = vpack.c.b16 %v2137, %v2133
    %2202 = vmatprep.subr.bf16.mxu0 %v2139
    %2203 = vmatpush1.bf16.msra.mxu0 %v2138
    %2204 = vmatprep.subr.bf16.mxu0 %v2143
    %2205 = vmatpush1.bf16.msra.mxu0 %v2142
    %2206 = vmatprep.subr.bf16.mxu0 %v2147
    %2207 = vmatpush1.bf16.msra.mxu0 %v2146
    %2208 = vmatprep.subr.bf16.mxu0 %v2151
    %2209 = vmatpush1.bf16.msra.mxu0 %v2150
    %2210 = vmatprep.subr.bf16.mxu0 %v2155
    %2211 = vmatpush1.bf16.msra.mxu0 %v2154
    %2212 = vmatprep.subr.bf16.mxu0 %v2159
    %2213 = vmatpush1.bf16.msra.mxu0 %v2158
    %2214 = vmatprep.subr.bf16.mxu0 %v2163
    %2215 = vmatpush1.bf16.msra.mxu0 %v2162
    %2216 = vmatprep.subr.bf16.mxu0 %v2167
    %2217 = vmatpush1.bf16.msra.mxu0 %v2166
    %2218 = vmatprep.subr.bf16.mxu0 0
    %2219 = vmatpush1.bf16.msra.mxu0 0
    %2220 = vmatprep.subr.bf16.mxu0 0
    %2221 = vmatpush1.bf16.msra.mxu0 0
    %2222 = vmatprep.subr.bf16.mxu0 0
    %2223 = vmatpush1.bf16.msra.mxu0 0
    %2224 = vmatprep.subr.bf16.mxu0 0
    %2225 = vmatpush1.bf16.msra.mxu0 0
    %2226 = vmatprep.subr.bf16.mxu0 0
    %2227 = vmatpush1.bf16.msra.mxu0 0
    %2228 = vmatprep.subr.bf16.mxu0 0
    %2229 = vmatpush1.bf16.msra.mxu0 0
    %2230 = vmatprep.subr.bf16.mxu0 0
    %2231 = vmatpush1.bf16.msra.mxu0 0
    %2232 = vmatprep.subr.bf16.mxu0 0
    %2233 = vmatpush1.bf16.msra.mxu0 0
    %2234 = vmatprep.mubr.bf16.mxu0 0
    %2235 = vmatmul.mubr.bf16.gmra.mrb[0].mxu0 %v1978
    %v2236 = vpop.f32.mrb[0].mxu0
    %v2237 = vadd.f32 %v2025, %v2236
    %v2238 = vpop.f32.mrb[0].mxu0
    %v2239 = vadd.f32 %v2029, %v2238
    %v2240 = vpop.f32.mrb[0].mxu0
    %v2241 = vadd.f32 %v2025, %v2240
    %v2242 = vpop.f32.mrb[0].mxu0
    %v2243 = vadd.f32 %v2029, %v2242
    %2244 = vmatprep.mubr.bf16.mxu0 0
    %2245 = vmatmul.mubr.bf16.gmra.mrb[0].mxu0 %v1979
    %v2246 = vpop.f32.mrb[0].mxu0
    %v2247 = vadd.f32 %v2025, %v2246
    %v2248 = vpop.f32.mrb[0].mxu0
    %v2249 = vadd.f32 %v2029, %v2248
    %v2250 = vpop.f32.mrb[0].mxu0
    %v2251 = vadd.f32 %v2025, %v2250
    %v2252 = vpop.f32.mrb[0].mxu0
    %v2253 = vadd.f32 %v2029, %v2252
    %2254 = vmatprep.mubr.bf16.mxu0 0
    %2255 = vmatmul.mubr.bf16.gmra.mrb[0].mxu0 %v1980
    %v2256 = vpop.f32.mrb[0].mxu0
    %v2257 = vadd.f32 %v2025, %v2256
    %v2258 = vpop.f32.mrb[0].mxu0
    %v2259 = vadd.f32 %v2029, %v2258
    %v2260 = vpop.f32.mrb[0].mxu0
    %v2261 = vadd.f32 %v2025, %v2260
    %v2262 = vpop.f32.mrb[0].mxu0
    %v2263 = vadd.f32 %v2029, %v2262
    %2264 = vmatprep.mubr.bf16.mxu0 0
    %2265 = vmatmul.mubr.bf16.gmra.mrb[0].mxu0 %v1981
    %v2266 = vpop.f32.mrb[0].mxu0
    %v2267 = vadd.f32 %v2025, %v2266
    %v2268 = vpop.f32.mrb[0].mxu0
    %v2269 = vadd.f32 %v2029, %v2268
    %v2270 = vpop.f32.mrb[0].mxu0
    %v2271 = vadd.f32 %v2025, %v2270
    %v2272 = vpop.f32.mrb[0].mxu0
    %v2273 = vadd.f32 %v2029, %v2272
    %2274 = vmatprep.mubr.bf16.mxu0 0
    %2275 = vmatmul.mubr.bf16.gmra.mrb[0].mxu0 %v1982
    %v2276 = vpop.f32.mrb[0].mxu0
    %v2277 = vadd.f32 %v2025, %v2276
    %v2278 = vpop.f32.mrb[0].mxu0
    %v2279 = vadd.f32 %v2029, %v2278
    %v2280 = vpop.f32.mrb[0].mxu0
    %v2281 = vadd.f32 %v2025, %v2280
    %v2282 = vpop.f32.mrb[0].mxu0
    %v2283 = vadd.f32 %v2029, %v2282
    %2284 = vmatprep.mubr.bf16.mxu0 0
    %2285 = vmatmul.mubr.bf16.gmra.mrb[0].mxu0 %v1983
    %v2286 = vpop.f32.mrb[0].mxu0
    %v2287 = vadd.f32 %v2025, %v2286
    %v2288 = vpop.f32.mrb[0].mxu0
    %v2289 = vadd.f32 %v2029, %v2288
    %v2290 = vpop.f32.mrb[0].mxu0
    %v2291 = vadd.f32 %v2025, %v2290
    %v2292 = vpop.f32.mrb[0].mxu0
    %v2293 = vadd.f32 %v2029, %v2292
    %2294 = vmatprep.mubr.bf16.mxu0 0
    %2295 = vmatmul.mubr.bf16.gmra.mrb[0].mxu0 %v1984
    %v2296 = vpop.f32.mrb[0].mxu0
    %v2297 = vadd.f32 %v2025, %v2296
    %v2298 = vpop.f32.mrb[0].mxu0
    %v2299 = vadd.f32 %v2029, %v2298
    %v2300 = vpop.f32.mrb[0].mxu0
    %v2301 = vadd.f32 %v2025, %v2300
    %v2302 = vpop.f32.mrb[0].mxu0
    %v2303 = vadd.f32 %v2029, %v2302
    %2304 = vmatprep.mubr.bf16.mxu0 0
    %2305 = vmatmul.mubr.bf16.gmra.mrb[0].mxu0 %v1985
    %v2306 = vpop.f32.mrb[0].mxu0
    %v2307 = vadd.f32 %v2025, %v2306
    %v2308 = vpop.f32.mrb[0].mxu0
    %v2309 = vadd.f32 %v2029, %v2308
    %v2310 = vpop.f32.mrb[0].mxu0
    %v2311 = vadd.f32 %v2025, %v2310
    %v2312 = vpop.f32.mrb[0].mxu0
    %v2313 = vadd.f32 %v2029, %v2312
    %2314 = vdwg.mxu0
    %2315 = vmatprep.subr.bf16.mxu0 %v2141
    %2316 = vmatpush1.bf16.msra.mxu0 %v2140
    %2317 = vmatprep.subr.bf16.mxu0 %v2145
    %2318 = vmatpush1.bf16.msra.mxu0 %v2144
    %2319 = vmatprep.subr.bf16.mxu0 %v2149
    %2320 = vmatpush1.bf16.msra.mxu0 %v2148
    %2321 = vmatprep.subr.bf16.mxu0 %v2153
    %2322 = vmatpush1.bf16.msra.mxu0 %v2152
    %2323 = vmatprep.subr.bf16.mxu0 %v2157
    %2324 = vmatpush1.bf16.msra.mxu0 %v2156
    %2325 = vmatprep.subr.bf16.mxu0 %v2161
    %2326 = vmatpush1.bf16.msra.mxu0 %v2160
    %2327 = vmatprep.subr.bf16.mxu0 %v2165
    %2328 = vmatpush1.bf16.msra.mxu0 %v2164
    %2329 = vmatprep.subr.bf16.mxu0 %v2169
    %2330 = vmatpush1.bf16.msra.mxu0 %v2168
    %2331 = vmatprep.subr.bf16.mxu0 0
    %2332 = vmatpush1.bf16.msra.mxu0 0
    %2333 = vmatprep.subr.bf16.mxu0 0
    %2334 = vmatpush1.bf16.msra.mxu0 0
    %2335 = vmatprep.subr.bf16.mxu0 0
    %2336 = vmatpush1.bf16.msra.mxu0 0
    %2337 = vmatprep.subr.bf16.mxu0 0
    %2338 = vmatpush1.bf16.msra.mxu0 0
    %2339 = vmatprep.subr.bf16.mxu0 0
    %2340 = vmatpush1.bf16.msra.mxu0 0
    %2341 = vmatprep.subr.bf16.mxu0 0
    %2342 = vmatpush1.bf16.msra.mxu0 0
    %2343 = vmatprep.subr.bf16.mxu0 0
    %2344 = vmatpush1.bf16.msra.mxu0 0
    %2345 = vmatprep.subr.bf16.mxu0 0
    %2346 = vmatpush1.bf16.msra.mxu0 0
    %2347 = vmatprep.mubr.bf16.mxu0 0
    %2348 = vmatmul.mubr.bf16.gmra.mrb[0].mxu0 %v1978
    %v2349 = vpop.f32.mrb[0].mxu0
    %v2350 = vadd.f32 %v2033, %v2349
    %v2351 = vpop.f32.mrb[0].mxu0
    %v2352 = vadd.f32 %v2037, %v2351
    %v2353 = vpop.f32.mrb[0].mxu0
    %v2354 = vadd.f32 %v2033, %v2353
    %v2355 = vpop.f32.mrb[0].mxu0
    %v2356 = vadd.f32 %v2037, %v2355
    %2357 = vmatprep.mubr.bf16.mxu0 0
    %2358 = vmatmul.mubr.bf16.gmra.mrb[0].mxu0 %v1979
    %v2359 = vpop.f32.mrb[0].mxu0
    %v2360 = vadd.f32 %v2033, %v2359
    %v2361 = vpop.f32.mrb[0].mxu0
    %v2362 = vadd.f32 %v2037, %v2361
    %v2363 = vpop.f32.mrb[0].mxu0
    %v2364 = vadd.f32 %v2033, %v2363
    %v2365 = vpop.f32.mrb[0].mxu0
    %v2366 = vadd.f32 %v2037, %v2365
    %2367 = vmatprep.mubr.bf16.mxu0 0
    %2368 = vmatmul.mubr.bf16.gmra.mrb[0].mxu0 %v1980
    %v2369 = vpop.f32.mrb[0].mxu0
    %v2370 = vadd.f32 %v2033, %v2369
    %v2371 = vpop.f32.mrb[0].mxu0
    %v2372 = vadd.f32 %v2037, %v2371
    %v2373 = vpop.f32.mrb[0].mxu0
    %v2374 = vadd.f32 %v2033, %v2373
    %v2375 = vpop.f32.mrb[0].mxu0
    %v2376 = vadd.f32 %v2037, %v2375
    %2377 = vmatprep.mubr.bf16.mxu0 0
    %2378 = vmatmul.mubr.bf16.gmra.mrb[0].mxu0 %v1981
    %v2379 = vpop.f32.mrb[0].mxu0
    %v2380 = vadd.f32 %v2033, %v2379
    %v2381 = vpop.f32.mrb[0].mxu0
    %v2382 = vadd.f32 %v2037, %v2381
    %v2383 = vpop.f32.mrb[0].mxu0
    %v2384 = vadd.f32 %v2033, %v2383
    %v2385 = vpop.f32.mrb[0].mxu0
    %v2386 = vadd.f32 %v2037, %v2385
    %2387 = vmatprep.mubr.bf16.mxu0 0
    %2388 = vmatmul.mubr.bf16.gmra.mrb[0].mxu0 %v1982
    %v2389 = vpop.f32.mrb[0].mxu0
    %v2390 = vadd.f32 %v2033, %v2389
    %v2391 = vpop.f32.mrb[0].mxu0
    %v2392 = vadd.f32 %v2037, %v2391
    %v2393 = vpop.f32.mrb[0].mxu0
    %v2394 = vadd.f32 %v2033, %v2393
    %v2395 = vpop.f32.mrb[0].mxu0
    %v2396 = vadd.f32 %v2037, %v2395
    %2397 = vmatprep.mubr.bf16.mxu0 0
    %2398 = vmatmul.mubr.bf16.gmra.mrb[0].mxu0 %v1983
    %v2399 = vpop.f32.mrb[0].mxu0
    %v2400 = vadd.f32 %v2033, %v2399
    %v2401 = vpop.f32.mrb[0].mxu0
    %v2402 = vadd.f32 %v2037, %v2401
    %v2403 = vpop.f32.mrb[0].mxu0
    %v2404 = vadd.f32 %v2033, %v2403
    %v2405 = vpop.f32.mrb[0].mxu0
    %v2406 = vadd.f32 %v2037, %v2405
    %2407 = vmatprep.mubr.bf16.mxu0 0
    %2408 = vmatmul.mubr.bf16.gmra.mrb[0].mxu0 %v1984
    %v2409 = vpop.f32.mrb[0].mxu0
    %v2410 = vadd.f32 %v2033, %v2409
    %v2411 = vpop.f32.mrb[0].mxu0
    %v2412 = vadd.f32 %v2037, %v2411
    %v2413 = vpop.f32.mrb[0].mxu0
    %v2414 = vadd.f32 %v2033, %v2413
    %v2415 = vpop.f32.mrb[0].mxu0
    %v2416 = vadd.f32 %v2037, %v2415
    %2417 = vmatprep.mubr.bf16.mxu0 0
    %2418 = vmatmul.mubr.bf16.gmra.mrb[0].mxu0 %v1985
    %v2419 = vpop.f32.mrb[0].mxu0
    %v2420 = vadd.f32 %v2033, %v2419
    %v2421 = vpop.f32.mrb[0].mxu0
    %v2422 = vadd.f32 %v2037, %v2421
    %v2423 = vpop.f32.mrb[0].mxu0
    %v2424 = vadd.f32 %v2033, %v2423
    %v2425 = vpop.f32.mrb[0].mxu0
    %v2426 = vadd.f32 %v2037, %v2425
    %2427 = vdwg.mxu0
    %v2428 = vpack.c.bf16 %v2241, %v2237
    %v2429 = vpack.c.bf16 %v2243, %v2239
    %v2430 = vpack.c.bf16 %v2354, %v2350
    %v2431 = vpack.c.bf16 %v2356, %v2352
    %v2432 = vpack.c.bf16 %v2251, %v2247
    %v2433 = vpack.c.bf16 %v2253, %v2249
    %v2434 = vpack.c.bf16 %v2364, %v2360
    %v2435 = vpack.c.bf16 %v2366, %v2362
    %v2436 = vpack.c.bf16 %v2261, %v2257
    %v2437 = vpack.c.bf16 %v2263, %v2259
    %v2438 = vpack.c.bf16 %v2374, %v2370
    %v2439 = vpack.c.bf16 %v2376, %v2372
    %v2440 = vpack.c.bf16 %v2271, %v2267
    %v2441 = vpack.c.bf16 %v2273, %v2269
    %v2442 = vpack.c.bf16 %v2384, %v2380
    %v2443 = vpack.c.bf16 %v2386, %v2382
    %v2444 = vpack.c.bf16 %v2281, %v2277
    %v2445 = vpack.c.bf16 %v2283, %v2279
    %v2446 = vpack.c.bf16 %v2394, %v2390
    %v2447 = vpack.c.bf16 %v2396, %v2392
    %v2448 = vpack.c.bf16 %v2291, %v2287
    %v2449 = vpack.c.bf16 %v2293, %v2289
    %v2450 = vpack.c.bf16 %v2404, %v2400
    %v2451 = vpack.c.bf16 %v2406, %v2402
    %v2452 = vpack.c.bf16 %v2301, %v2297
    %v2453 = vpack.c.bf16 %v2303, %v2299
    %v2454 = vpack.c.bf16 %v2414, %v2410
    %v2455 = vpack.c.bf16 %v2416, %v2412
    %v2456 = vpack.c.bf16 %v2311, %v2307
    %v2457 = vpack.c.bf16 %v2313, %v2309
    %v2458 = vpack.c.bf16 %v2424, %v2420
    %v2459 = vpack.c.bf16 %v2426, %v2422
    %2460 = vst [vmem:[#allocation3] sm:$0xff] %v2428
    %2461 = vst [vmem:[#allocation3 + $0x8] sm:$0xff] %v2429
    %2462 = vst [vmem:[#allocation3 + $0x10] sm:$0xff] %v2430
    %2463 = vst [vmem:[#allocation3 + $0x18] sm:$0xff] %v2431
    %2464 = vst [vmem:[#allocation3 + $0x20] sm:$0xff] %v2432
    %2465 = vst [vmem:[#allocation3 + $0x28] sm:$0xff] %v2433
    %2466 = vst [vmem:[#allocation3 + $0x30] sm:$0xff] %v2434
    %2467 = vst [vmem:[#allocation3 + $0x38] sm:$0xff] %v2435
    %2468 = vst [vmem:[#allocation3 + $0x40] sm:$0xff] %v2436
    %2469 = vst [vmem:[#allocation3 + $0x48] sm:$0xff] %v2437
    %2470 = vst [vmem:[#allocation3 + $0x50] sm:$0xff] %v2438
    %2471 = vst [vmem:[#allocation3 + $0x58] sm:$0xff] %v2439
    %2472 = vst [vmem:[#allocation3 + $0x60] sm:$0xff] %v2440
    %2473 = vst [vmem:[#allocation3 + $0x68] sm:$0xff] %v2441
    %2474 = vst [vmem:[#allocation3 + $0x70] sm:$0xff] %v2442
    %2475 = vst [vmem:[#allocation3 + $0x78] sm:$0xff] %v2443
    %2476 = vst [vmem:[#allocation3 + $0x80] sm:$0xff] %v2444
    %2477 = vst [vmem:[#allocation3 + $0x88] sm:$0xff] %v2445
    %2478 = vst [vmem:[#allocation3 + $0x90] sm:$0xff] %v2446
    %2479 = vst [vmem:[#allocation3 + $0x98] sm:$0xff] %v2447
    %2480 = vst [vmem:[#allocation3 + $0xa0] sm:$0xff] %v2448
    %2481 = vst [vmem:[#allocation3 + $0xa8] sm:$0xff] %v2449
    %2482 = vst [vmem:[#allocation3 + $0xb0] sm:$0xff] %v2450
    %2483 = vst [vmem:[#allocation3 + $0xb8] sm:$0xff] %v2451
    %2484 = vst [vmem:[#allocation3 + $0xc0] sm:$0xff] %v2452
    %2485 = vst [vmem:[#allocation3 + $0xc8] sm:$0xff] %v2453
    %2486 = vst [vmem:[#allocation3 + $0xd0] sm:$0xff] %v2454
    %2487 = vst [vmem:[#allocation3 + $0xd8] sm:$0xff] %v2455
    %2488 = vst [vmem:[#allocation3 + $0xe0] sm:$0xff] %v2456
    %2489 = vst [vmem:[#allocation3 + $0xe8] sm:$0xff] %v2457
    %2490 = vst [vmem:[#allocation3 + $0xf0] sm:$0xff] %v2458
    %2491 = vst [vmem:[#allocation3 + $0xf8] sm:$0xff] %v2459
    %s2492 = scalar_lea.vmem [#allocation6], 256
    %v2493 = vld [vmem:[%s2492] sm:$0xff]
    %v2494 = vld [vmem:[%s2492 + $0x8] sm:$0xff]
    %v2495 = vld [vmem:[%s2492 + $0x10] sm:$0xff]
    %v2496 = vld [vmem:[%s2492 + $0x18] sm:$0xff]
    %v2497 = vld [vmem:[%s2492 + $0x20] sm:$0xff]
    %v2498 = vld [vmem:[%s2492 + $0x28] sm:$0xff]
    %v2499 = vld [vmem:[%s2492 + $0x30] sm:$0xff]
    %v2500 = vld [vmem:[%s2492 + $0x38] sm:$0xff]
    %v2501 = vld [vmem:[%s2492 + $0x40] sm:$0xff]
    %v2502 = vld [vmem:[%s2492 + $0x48] sm:$0xff]
    %v2503 = vld [vmem:[%s2492 + $0x50] sm:$0xff]
    %v2504 = vld [vmem:[%s2492 + $0x58] sm:$0xff]
    %v2505 = vld [vmem:[%s2492 + $0x60] sm:$0xff]
    %v2506 = vld [vmem:[%s2492 + $0x68] sm:$0xff]
    %v2507 = vld [vmem:[%s2492 + $0x70] sm:$0xff]
    %v2508 = vld [vmem:[%s2492 + $0x78] sm:$0xff]
    %v2509 = vld [vmem:[%s2492 + $0x80] sm:$0xff]
    %v2510 = vld [vmem:[%s2492 + $0x88] sm:$0xff]
    %v2511 = vld [vmem:[%s2492 + $0x90] sm:$0xff]
    %v2512 = vld [vmem:[%s2492 + $0x98] sm:$0xff]
    %v2513 = vld [vmem:[%s2492 + $0xa0] sm:$0xff]
    %v2514 = vld [vmem:[%s2492 + $0xa8] sm:$0xff]
    %v2515 = vld [vmem:[%s2492 + $0xb0] sm:$0xff]
    %v2516 = vld [vmem:[%s2492 + $0xb8] sm:$0xff]
    %v2517 = vld [vmem:[%s2492 + $0xc0] sm:$0xff]
    %v2518 = vld [vmem:[%s2492 + $0xc8] sm:$0xff]
    %v2519 = vld [vmem:[%s2492 + $0xd0] sm:$0xff]
    %v2520 = vld [vmem:[%s2492 + $0xd8] sm:$0xff]
    %v2521 = vld [vmem:[%s2492 + $0xe0] sm:$0xff]
    %v2522 = vld [vmem:[%s2492 + $0xe8] sm:$0xff]
    %v2523 = vld [vmem:[%s2492 + $0xf0] sm:$0xff]
    %v2524 = vld [vmem:[%s2492 + $0xf8] sm:$0xff]
    %v2525 = vld [vmem:[#allocation3] sm:$0xff]
    %v2526 = vld [vmem:[#allocation3 + $0x8] sm:$0xff]
    %v2527 = vld [vmem:[#allocation3 + $0x10] sm:$0xff]
    %v2528 = vld [vmem:[#allocation3 + $0x18] sm:$0xff]
    %v2561 = vunpack.c.l.b16 %v2493
    %v2562 = vunpack.c.h.b16 %v2493
    %v2563 = vunpack.c.l.b16 %v2494
    %v2564 = vunpack.c.h.b16 %v2494
    %v2565 = vunpack.c.l.b16 %v2495
    %v2566 = vunpack.c.h.b16 %v2495
    %v2567 = vunpack.c.l.b16 %v2496
    %v2568 = vunpack.c.h.b16 %v2496
    %v2569 = vunpack.c.l.b16 %v2497
    %v2570 = vunpack.c.h.b16 %v2497
    %v2571 = vunpack.c.l.b16 %v2498
    %v2572 = vunpack.c.h.b16 %v2498
    %v2573 = vunpack.c.l.b16 %v2499
    %v2574 = vunpack.c.h.b16 %v2499
    %v2575 = vunpack.c.l.b16 %v2500
    %v2576 = vunpack.c.h.b16 %v2500
    %v2577 = vunpack.c.l.b16 %v2501
    %v2578 = vunpack.c.h.b16 %v2501
    %v2579 = vunpack.c.l.b16 %v2502
    %v2580 = vunpack.c.h.b16 %v2502
    %v2581 = vunpack.c.l.b16 %v2503
    %v2582 = vunpack.c.h.b16 %v2503
    %v2583 = vunpack.c.l.b16 %v2504
    %v2584 = vunpack.c.h.b16 %v2504
    %v2585 = vunpack.c.l.b16 %v2505
    %v2586 = vunpack.c.h.b16 %v2505
    %v2587 = vunpack.c.l.b16 %v2506
    %v2588 = vunpack.c.h.b16 %v2506
    %v2589 = vunpack.c.l.b16 %v2507
    %v2590 = vunpack.c.h.b16 %v2507
    %v2591 = vunpack.c.l.b16 %v2508
    %v2592 = vunpack.c.h.b16 %v2508
    %v2593 = vunpack.c.l.b16 %v2509
    %v2594 = vunpack.c.h.b16 %v2509
    %v2595 = vunpack.c.l.b16 %v2510
    %v2596 = vunpack.c.h.b16 %v2510
    %v2597 = vunpack.c.l.b16 %v2511
    %v2598 = vunpack.c.h.b16 %v2511
    %v2599 = vunpack.c.l.b16 %v2512
    %v2600 = vunpack.c.h.b16 %v2512
    %v2601 = vunpack.c.l.b16 %v2513
    %v2602 = vunpack.c.h.b16 %v2513
    %v2603 = vunpack.c.l.b16 %v2514
    %v2604 = vunpack.c.h.b16 %v2514
    %v2605 = vunpack.c.l.b16 %v2515
    %v2606 = vunpack.c.h.b16 %v2515
    %v2607 = vunpack.c.l.b16 %v2516
    %v2608 = vunpack.c.h.b16 %v2516
    %v2609 = vunpack.c.l.b16 %v2517
    %v2610 = vunpack.c.h.b16 %v2517
    %v2611 = vunpack.c.l.b16 %v2518
    %v2612 = vunpack.c.h.b16 %v2518
    %v2613 = vunpack.c.l.b16 %v2519
    %v2614 = vunpack.c.h.b16 %v2519
    %v2615 = vunpack.c.l.b16 %v2520
    %v2616 = vunpack.c.h.b16 %v2520
    %v2617 = vunpack.c.l.b16 %v2521
    %v2618 = vunpack.c.h.b16 %v2521
    %v2619 = vunpack.c.l.b16 %v2522
    %v2620 = vunpack.c.h.b16 %v2522
    %v2621 = vunpack.c.l.b16 %v2523
    %v2622 = vunpack.c.h.b16 %v2523
    %v2623 = vunpack.c.l.b16 %v2524
    %v2624 = vunpack.c.h.b16 %v2524
    %v2625 = vpack.c.b16 %v2565, %v2561
    %v2626 = vpack.c.b16 %v2566, %v2562
    %v2627 = vpack.c.b16 %v2567, %v2563
    %v2628 = vpack.c.b16 %v2568, %v2564
    %v2629 = vpack.c.b16 %v2573, %v2569
    %v2630 = vpack.c.b16 %v2574, %v2570
    %v2631 = vpack.c.b16 %v2575, %v2571
    %v2632 = vpack.c.b16 %v2576, %v2572
    %v2633 = vpack.c.b16 %v2581, %v2577
    %v2634 = vpack.c.b16 %v2582, %v2578
    %v2635 = vpack.c.b16 %v2583, %v2579
    %v2636 = vpack.c.b16 %v2584, %v2580
    %v2637 = vpack.c.b16 %v2589, %v2585
    %v2638 = vpack.c.b16 %v2590, %v2586
    %v2639 = vpack.c.b16 %v2591, %v2587
    %v2640 = vpack.c.b16 %v2592, %v2588
    %v2641 = vpack.c.b16 %v2597, %v2593
    %v2642 = vpack.c.b16 %v2598, %v2594
    %v2643 = vpack.c.b16 %v2599, %v2595
    %v2644 = vpack.c.b16 %v2600, %v2596
    %v2645 = vpack.c.b16 %v2605, %v2601
    %v2646 = vpack.c.b16 %v2606, %v2602
    %v2647 = vpack.c.b16 %v2607, %v2603
    %v2648 = vpack.c.b16 %v2608, %v2604
    %v2649 = vpack.c.b16 %v2613, %v2609
    %v2650 = vpack.c.b16 %v2614, %v2610
    %v2651 = vpack.c.b16 %v2615, %v2611
    %v2652 = vpack.c.b16 %v2616, %v2612
    %v2653 = vpack.c.b16 %v2621, %v2617
    %v2654 = vpack.c.b16 %v2622, %v2618
    %v2655 = vpack.c.b16 %v2623, %v2619
    %v2656 = vpack.c.b16 %v2624, %v2620
    %2689 = vmatprep.subr.bf16.mxu0 %v2626
    %2690 = vmatpush1.bf16.msra.mxu0 %v2625
    %2691 = vmatprep.subr.bf16.mxu0 %v2630
    %2692 = vmatpush1.bf16.msra.mxu0 %v2629
    %2693 = vmatprep.subr.bf16.mxu0 %v2634
    %2694 = vmatpush1.bf16.msra.mxu0 %v2633
    %2695 = vmatprep.subr.bf16.mxu0 %v2638
    %2696 = vmatpush1.bf16.msra.mxu0 %v2637
    %2697 = vmatprep.subr.bf16.mxu0 %v2642
    %2698 = vmatpush1.bf16.msra.mxu0 %v2641
    %2699 = vmatprep.subr.bf16.mxu0 %v2646
    %2700 = vmatpush1.bf16.msra.mxu0 %v2645
    %2701 = vmatprep.subr.bf16.mxu0 %v2650
    %2702 = vmatpush1.bf16.msra.mxu0 %v2649
    %2703 = vmatprep.subr.bf16.mxu0 %v2654
    %2704 = vmatpush1.bf16.msra.mxu0 %v2653
    %2705 = vmatprep.subr.bf16.mxu0 0
    %2706 = vmatpush1.bf16.msra.mxu0 0
    %2707 = vmatprep.subr.bf16.mxu0 0
    %2708 = vmatpush1.bf16.msra.mxu0 0
    %2709 = vmatprep.subr.bf16.mxu0 0
    %2710 = vmatpush1.bf16.msra.mxu0 0
    %2711 = vmatprep.subr.bf16.mxu0 0
    %2712 = vmatpush1.bf16.msra.mxu0 0
    %2713 = vmatprep.subr.bf16.mxu0 0
    %2714 = vmatpush1.bf16.msra.mxu0 0
    %2715 = vmatprep.subr.bf16.mxu0 0
    %2716 = vmatpush1.bf16.msra.mxu0 0
    %2717 = vmatprep.subr.bf16.mxu0 0
    %2718 = vmatpush1.bf16.msra.mxu0 0
    %2719 = vmatprep.subr.bf16.mxu0 0
    %2720 = vmatpush1.bf16.msra.mxu0 0
    %2721 = vmatprep.mubr.bf16.mxu0 0
    %2722 = vmatmul.mubr.bf16.gmra.mrb[0].mxu0 0
    %v2723 = vpop.f32.mrb[0].mxu0
    %v2724 = vadd.f32 0.0, %v2723
    %v2725 = vpop.f32.mrb[0].mxu0
    %v2726 = vadd.f32 0.0, %v2725
    %v2727 = vpop.f32.mrb[0].mxu0
    %v2728 = vadd.f32 0.0, %v2727
    %v2729 = vpop.f32.mrb[0].mxu0
    %v2730 = vadd.f32 0.0, %v2729
    %2731 = vdwg.mxu0
    %2732 = vmatprep.subr.bf16.mxu0 %v2628
    %2733 = vmatpush1.bf16.msra.mxu0 %v2627
    %2734 = vmatprep.subr.bf16.mxu0 %v2632
    %2735 = vmatpush1.bf16.msra.mxu0 %v2631
    %2736 = vmatprep.subr.bf16.mxu0 %v2636
    %2737 = vmatpush1.bf16.msra.mxu0 %v2635
    %2738 = vmatprep.subr.bf16.mxu0 %v2640
    %2739 = vmatpush1.bf16.msra.mxu0 %v2639
    %2740 = vmatprep.subr.bf16.mxu0 %v2644
    %2741 = vmatpush1.bf16.msra.mxu0 %v2643
    %2742 = vmatprep.subr.bf16.mxu0 %v2648
    %2743 = vmatpush1.bf16.msra.mxu0 %v2647
    %2744 = vmatprep.subr.bf16.mxu0 %v2652
    %2745 = vmatpush1.bf16.msra.mxu0 %v2651
    %2746 = vmatprep.subr.bf16.mxu0 %v2656
    %2747 = vmatpush1.bf16.msra.mxu0 %v2655
    %2748 = vmatprep.subr.bf16.mxu0 0
    %2749 = vmatpush1.bf16.msra.mxu0 0
    %2750 = vmatprep.subr.bf16.mxu0 0
    %2751 = vmatpush1.bf16.msra.mxu0 0
    %2752 = vmatprep.subr.bf16.mxu0 0
    %2753 = vmatpush1.bf16.msra.mxu0 0
    %2754 = vmatprep.subr.bf16.mxu0 0
    %2755 = vmatpush1.bf16.msra.mxu0 0
    %2756 = vmatprep.subr.bf16.mxu0 0
    %2757 = vmatpush1.bf16.msra.mxu0 0
    %2758 = vmatprep.subr.bf16.mxu0 0
    %2759 = vmatpush1.bf16.msra.mxu0 0
    %2760 = vmatprep.subr.bf16.mxu0 0
    %2761 = vmatpush1.bf16.msra.mxu0 0
    %2762 = vmatprep.subr.bf16.mxu0 0
    %2763 = vmatpush1.bf16.msra.mxu0 0
    %2764 = vmatprep.mubr.bf16.mxu0 0
    %2765 = vmatmul.mubr.bf16.gmra.mrb[0].mxu0 0
    %v2766 = vpop.f32.mrb[0].mxu0
    %v2767 = vadd.f32 0.0, %v2766
    %v2768 = vpop.f32.mrb[0].mxu0
    %v2769 = vadd.f32 0.0, %v2768
    %v2770 = vpop.f32.mrb[0].mxu0
    %v2771 = vadd.f32 0.0, %v2770
    %v2772 = vpop.f32.mrb[0].mxu0
    %v2773 = vadd.f32 0.0, %v2772
    %2774 = vdwg.mxu0
    %v2775 = vunpack.c.l.bf16 %v2525
    %v2776 = vunpack.c.l.bf16 %v2526
    %v2777 = vunpack.c.l.bf16 %v2527
    %v2778 = vunpack.c.l.bf16 %v2528
    %v2779 = vunpack.c.h.bf16 %v2525
    %v2780 = vunpack.c.h.bf16 %v2526
    %v2781 = vunpack.c.h.bf16 %v2527
    %v2782 = vunpack.c.h.bf16 %v2528
    %v2783 = vadd.f32 %v2775, %v2724
    %v2784 = vadd.f32 %v2776, %v2726
    %v2785 = vadd.f32 %v2777, %v2767
    %v2786 = vadd.f32 %v2778, %v2769
    %v2787 = vadd.f32 %v2779, %v2728
    %v2788 = vadd.f32 %v2780, %v2730
    %v2789 = vadd.f32 %v2781, %v2771
    %v2790 = vadd.f32 %v2782, %v2773
    %v2791 = vmul.f32 %v2783, 0.5
    %v2792 = vmul.f32 %v2787, 0.5
    %v2793 = vtanh.pop %v2791
    %v2794 = vtanh.pop %v2792
    %v2795 = vmul.f32 %v2793, 0.5
    %v2796 = vmul.f32 %v2794, 0.5
    %v2797 = vadd.f32 %v2795, 0.5
    %v2798 = vadd.f32 %v2796, 0.5
    %v2799 = vmul.f32 %v2784, 0.5
    %v2800 = vmul.f32 %v2788, 0.5
    %v2801 = vtanh.pop %v2799
    %v2802 = vtanh.pop %v2800
    %v2803 = vmul.f32 %v2801, 0.5
    %v2804 = vmul.f32 %v2802, 0.5
    %v2805 = vadd.f32 %v2803, 0.5
    %v2806 = vadd.f32 %v2804, 0.5
    %v2807 = vtanh.pop %v2785
    %v2808 = vtanh.pop %v2789
    %v2809 = vmul.f32 %v2786, 0.5
    %v2810 = vmul.f32 %v2790, 0.5
    %v2811 = vtanh.pop %v2809
    %v2812 = vtanh.pop %v2810
    %v2813 = vmul.f32 %v2811, 0.5
    %v2814 = vmul.f32 %v2812, 0.5
    %v2815 = vadd.f32 %v2813, 0.5
    %v2816 = vadd.f32 %v2814, 0.5
    %v2817 = vmul.f32 %v2805, 0.0
    %v2818 = vmul.f32 %v2806, 0.0
    %v2819 = vmul.f32 %v2797, %v2807
    %v2820 = vmul.f32 %v2798, %v2808
    %v2821 = vadd.f32 %v2817, %v2819
    %v2822 = vadd.f32 %v2818, %v2820
    %v2823 = vtanh.pop %v2821
    %v2824 = vtanh.pop %v2822
    %v2825 = vmul.f32 %v2815, %v2823
    %v2826 = vmul.f32 %v2816, %v2824
    %v2827 = vpack.c.bf16 %v2826, %v2825
    %v2828 = vld [vmem:[%s956] sm:$0xff]
    %v2829 = vld [vmem:[%s956 + $0x8] sm:$0xff]
    %v2830 = vld [vmem:[%s956 + $0x10] sm:$0xff]
    %v2831 = vld [vmem:[%s956 + $0x18] sm:$0xff]
    %2832 = vmatprep.subr.bf16.mxu0 %v2626
    %2833 = vmatpush1.bf16.msra.mxu0 %v2625
    %2834 = vmatprep.subr.bf16.mxu0 %v2630
    %2835 = vmatpush1.bf16.msra.mxu0 %v2629
    %2836 = vmatprep.subr.bf16.mxu0 %v2634
    %2837 = vmatpush1.bf16.msra.mxu0 %v2633
    %2838 = vmatprep.subr.bf16.mxu0 %v2638
    %2839 = vmatpush1.bf16.msra.mxu0 %v2637
    %2840 = vmatprep.subr.bf16.mxu0 %v2642
    %2841 = vmatpush1.bf16.msra.mxu0 %v2641
    %2842 = vmatprep.subr.bf16.mxu0 %v2646
    %2843 = vmatpush1.bf16.msra.mxu0 %v2645
    %2844 = vmatprep.subr.bf16.mxu0 %v2650
    %2845 = vmatpush1.bf16.msra.mxu0 %v2649
    %2846 = vmatprep.subr.bf16.mxu0 %v2654
    %2847 = vmatpush1.bf16.msra.mxu0 %v2653
    %2848 = vmatprep.subr.bf16.mxu0 0
    %2849 = vmatpush1.bf16.msra.mxu0 0
    %2850 = vmatprep.subr.bf16.mxu0 0
    %2851 = vmatpush1.bf16.msra.mxu0 0
    %2852 = vmatprep.subr.bf16.mxu0 0
    %2853 = vmatpush1.bf16.msra.mxu0 0
    %2854 = vmatprep.subr.bf16.mxu0 0
    %2855 = vmatpush1.bf16.msra.mxu0 0
    %2856 = vmatprep.subr.bf16.mxu0 0
    %2857 = vmatpush1.bf16.msra.mxu0 0
    %2858 = vmatprep.subr.bf16.mxu0 0
    %2859 = vmatpush1.bf16.msra.mxu0 0
    %2860 = vmatprep.subr.bf16.mxu0 0
    %2861 = vmatpush1.bf16.msra.mxu0 0
    %2862 = vmatprep.subr.bf16.mxu0 0
    %2863 = vmatpush1.bf16.msra.mxu0 0
    %2864 = vmatprep.mubr.bf16.mxu0 0
    %2865 = vmatmul.mubr.bf16.gmra.mrb[0].mxu0 %v2827
    %v2866 = vpop.f32.mrb[0].mxu0
    %v2867 = vadd.f32 0.0, %v2866
    %v2868 = vpop.f32.mrb[0].mxu0
    %v2869 = vadd.f32 0.0, %v2868
    %v2870 = vpop.f32.mrb[0].mxu0
    %v2871 = vadd.f32 0.0, %v2870
    %v2872 = vpop.f32.mrb[0].mxu0
    %v2873 = vadd.f32 0.0, %v2872
    %2874 = vdwg.mxu0
    %2875 = vmatprep.subr.bf16.mxu0 %v2628
    %2876 = vmatpush1.bf16.msra.mxu0 %v2627
    %2877 = vmatprep.subr.bf16.mxu0 %v2632
    %2878 = vmatpush1.bf16.msra.mxu0 %v2631
    %2879 = vmatprep.subr.bf16.mxu0 %v2636
    %2880 = vmatpush1.bf16.msra.mxu0 %v2635
    %2881 = vmatprep.subr.bf16.mxu0 %v2640
    %2882 = vmatpush1.bf16.msra.mxu0 %v2639
    %2883 = vmatprep.subr.bf16.mxu0 %v2644
    %2884 = vmatpush1.bf16.msra.mxu0 %v2643
    %2885 = vmatprep.subr.bf16.mxu0 %v2648
    %2886 = vmatpush1.bf16.msra.mxu0 %v2647
    %2887 = vmatprep.subr.bf16.mxu0 %v2652
    %2888 = vmatpush1.bf16.msra.mxu0 %v2651
    %2889 = vmatprep.subr.bf16.mxu0 %v2656
    %2890 = vmatpush1.bf16.msra.mxu0 %v2655
    %2891 = vmatprep.subr.bf16.mxu0 0
    %2892 = vmatpush1.bf16.msra.mxu0 0
    %2893 = vmatprep.subr.bf16.mxu0 0
    %2894 = vmatpush1.bf16.msra.mxu0 0
    %2895 = vmatprep.subr.bf16.mxu0 0
    %2896 = vmatpush1.bf16.msra.mxu0 0
    %2897 = vmatprep.subr.bf16.mxu0 0
    %2898 = vmatpush1.bf16.msra.mxu0 0
    %2899 = vmatprep.subr.bf16.mxu0 0
    %2900 = vmatpush1.bf16.msra.mxu0 0
    %2901 = vmatprep.subr.bf16.mxu0 0
    %2902 = vmatpush1.bf16.msra.mxu0 0
    %2903 = vmatprep.subr.bf16.mxu0 0
    %2904 = vmatpush1.bf16.msra.mxu0 0
    %2905 = vmatprep.subr.bf16.mxu0 0
    %2906 = vmatpush1.bf16.msra.mxu0 0
    %2907 = vmatprep.mubr.bf16.mxu0 0
    %2908 = vmatmul.mubr.bf16.gmra.mrb[0].mxu0 %v2827
    %v2909 = vpop.f32.mrb[0].mxu0
    %v2910 = vadd.f32 0.0, %v2909
    %v2911 = vpop.f32.mrb[0].mxu0
    %v2912 = vadd.f32 0.0, %v2911
    %v2913 = vpop.f32.mrb[0].mxu0
    %v2914 = vadd.f32 0.0, %v2913
    %v2915 = vpop.f32.mrb[0].mxu0
    %v2916 = vadd.f32 0.0, %v2915
    %2917 = vdwg.mxu0
    %v2918 = vunpack.c.l.bf16 %v2828
    %v2919 = vunpack.c.l.bf16 %v2829
    %v2920 = vunpack.c.l.bf16 %v2830
    %v2921 = vunpack.c.l.bf16 %v2831
    %v2922 = vunpack.c.h.bf16 %v2828
    %v2923 = vunpack.c.h.bf16 %v2829
    %v2924 = vunpack.c.h.bf16 %v2830
    %v2925 = vunpack.c.h.bf16 %v2831
    %v2926 = vadd.f32 %v2918, %v2867
    %v2927 = vadd.f32 %v2919, %v2869
    %v2928 = vadd.f32 %v2920, %v2910
    %v2929 = vadd.f32 %v2921, %v2912
    %v2930 = vadd.f32 %v2922, %v2871
    %v2931 = vadd.f32 %v2923, %v2873
    %v2932 = vadd.f32 %v2924, %v2914
    %v2933 = vadd.f32 %v2925, %v2916
    %v2934 = vmul.f32 %v2926, 0.5
    %v2935 = vmul.f32 %v2930, 0.5
    %v2936 = vtanh.pop %v2934
    %v2937 = vtanh.pop %v2935
    %v2938 = vmul.f32 %v2936, 0.5
    %v2939 = vmul.f32 %v2937, 0.5
    %v2940 = vadd.f32 %v2938, 0.5
    %v2941 = vadd.f32 %v2939, 0.5
    %v2942 = vmul.f32 %v2927, 0.5
    %v2943 = vmul.f32 %v2931, 0.5
    %v2944 = vtanh.pop %v2942
    %v2945 = vtanh.pop %v2943
    %v2946 = vmul.f32 %v2944, 0.5
    %v2947 = vmul.f32 %v2945, 0.5
    %v2948 = vadd.f32 %v2946, 0.5
    %v2949 = vadd.f32 %v2947, 0.5
    %v2950 = vtanh.pop %v2928
    %v2951 = vtanh.pop %v2932
    %v2952 = vmul.f32 %v2929, 0.5
    %v2953 = vmul.f32 %v2933, 0.5
    %v2954 = vtanh.pop %v2952
    %v2955 = vtanh.pop %v2953
    %v2956 = vmul.f32 %v2954, 0.5
    %v2957 = vmul.f32 %v2955, 0.5
    %v2958 = vadd.f32 %v2956, 0.5
    %v2959 = vadd.f32 %v2957, 0.5
    %v2960 = vmul.f32 %v2948, %v2821
    %v2961 = vmul.f32 %v2949, %v2822
    %v2962 = vmul.f32 %v2940, %v2950
    %v2963 = vmul.f32 %v2941, %v2951
    %v2964 = vadd.f32 %v2960, %v2962
    %v2965 = vadd.f32 %v2961, %v2963
    %v2966 = vtanh.pop %v2964
    %v2967 = vtanh.pop %v2965
    %v2968 = vmul.f32 %v2958, %v2966
    %v2969 = vmul.f32 %v2959, %v2967
    %v2970 = vpack.c.bf16 %v2969, %v2968
    %v2971 = vld [vmem:[%s1102] sm:$0xff]
    %v2972 = vld [vmem:[%s1102 + $0x8] sm:$0xff]
    %v2973 = vld [vmem:[%s1102 + $0x10] sm:$0xff]
    %v2974 = vld [vmem:[%s1102 + $0x18] sm:$0xff]
    %2975 = vmatprep.subr.bf16.mxu0 %v2626
    %2976 = vmatpush1.bf16.msra.mxu0 %v2625
    %2977 = vmatprep.subr.bf16.mxu0 %v2630
    %2978 = vmatpush1.bf16.msra.mxu0 %v2629
    %2979 = vmatprep.subr.bf16.mxu0 %v2634
    %2980 = vmatpush1.bf16.msra.mxu0 %v2633
    %2981 = vmatprep.subr.bf16.mxu0 %v2638
    %2982 = vmatpush1.bf16.msra.mxu0 %v2637
    %2983 = vmatprep.subr.bf16.mxu0 %v2642
    %2984 = vmatpush1.bf16.msra.mxu0 %v2641
    %2985 = vmatprep.subr.bf16.mxu0 %v2646
    %2986 = vmatpush1.bf16.msra.mxu0 %v2645
    %2987 = vmatprep.subr.bf16.mxu0 %v2650
    %2988 = vmatpush1.bf16.msra.mxu0 %v2649
    %2989 = vmatprep.subr.bf16.mxu0 %v2654
    %2990 = vmatpush1.bf16.msra.mxu0 %v2653
    %2991 = vmatprep.subr.bf16.mxu0 0
    %2992 = vmatpush1.bf16.msra.mxu0 0
    %2993 = vmatprep.subr.bf16.mxu0 0
    %2994 = vmatpush1.bf16.msra.mxu0 0
    %2995 = vmatprep.subr.bf16.mxu0 0
    %2996 = vmatpush1.bf16.msra.mxu0 0
    %2997 = vmatprep.subr.bf16.mxu0 0
    %2998 = vmatpush1.bf16.msra.mxu0 0
    %2999 = vmatprep.subr.bf16.mxu0 0
    %3000 = vmatpush1.bf16.msra.mxu0 0
    %3001 = vmatprep.subr.bf16.mxu0 0
    %3002 = vmatpush1.bf16.msra.mxu0 0
    %3003 = vmatprep.subr.bf16.mxu0 0
    %3004 = vmatpush1.bf16.msra.mxu0 0
    %3005 = vmatprep.subr.bf16.mxu0 0
    %3006 = vmatpush1.bf16.msra.mxu0 0
    %3007 = vmatprep.mubr.bf16.mxu0 0
    %3008 = vmatmul.mubr.bf16.gmra.mrb[0].mxu0 %v2970
    %v3009 = vpop.f32.mrb[0].mxu0
    %v3010 = vadd.f32 0.0, %v3009
    %v3011 = vpop.f32.mrb[0].mxu0
    %v3012 = vadd.f32 0.0, %v3011
    %v3013 = vpop.f32.mrb[0].mxu0
    %v3014 = vadd.f32 0.0, %v3013
    %v3015 = vpop.f32.mrb[0].mxu0
    %v3016 = vadd.f32 0.0, %v3015
    %3017 = vdwg.mxu0
    %3018 = vmatprep.subr.bf16.mxu0 %v2628
    %3019 = vmatpush1.bf16.msra.mxu0 %v2627
    %3020 = vmatprep.subr.bf16.mxu0 %v2632
    %3021 = vmatpush1.bf16.msra.mxu0 %v2631
    %3022 = vmatprep.subr.bf16.mxu0 %v2636
    %3023 = vmatpush1.bf16.msra.mxu0 %v2635
    %3024 = vmatprep.subr.bf16.mxu0 %v2640
    %3025 = vmatpush1.bf16.msra.mxu0 %v2639
    %3026 = vmatprep.subr.bf16.mxu0 %v2644
    %3027 = vmatpush1.bf16.msra.mxu0 %v2643
    %3028 = vmatprep.subr.bf16.mxu0 %v2648
    %3029 = vmatpush1.bf16.msra.mxu0 %v2647
    %3030 = vmatprep.subr.bf16.mxu0 %v2652
    %3031 = vmatpush1.bf16.msra.mxu0 %v2651
    %3032 = vmatprep.subr.bf16.mxu0 %v2656
    %3033 = vmatpush1.bf16.msra.mxu0 %v2655
    %3034 = vmatprep.subr.bf16.mxu0 0
    %3035 = vmatpush1.bf16.msra.mxu0 0
    %3036 = vmatprep.subr.bf16.mxu0 0
    %3037 = vmatpush1.bf16.msra.mxu0 0
    %3038 = vmatprep.subr.bf16.mxu0 0
    %3039 = vmatpush1.bf16.msra.mxu0 0
    %3040 = vmatprep.subr.bf16.mxu0 0
    %3041 = vmatpush1.bf16.msra.mxu0 0
    %3042 = vmatprep.subr.bf16.mxu0 0
    %3043 = vmatpush1.bf16.msra.mxu0 0
    %3044 = vmatprep.subr.bf16.mxu0 0
    %3045 = vmatpush1.bf16.msra.mxu0 0
    %3046 = vmatprep.subr.bf16.mxu0 0
    %3047 = vmatpush1.bf16.msra.mxu0 0
    %3048 = vmatprep.subr.bf16.mxu0 0
    %3049 = vmatpush1.bf16.msra.mxu0 0
    %3050 = vmatprep.mubr.bf16.mxu0 0
    %3051 = vmatmul.mubr.bf16.gmra.mrb[0].mxu0 %v2970
    %v3052 = vpop.f32.mrb[0].mxu0
    %v3053 = vadd.f32 0.0, %v3052
    %v3054 = vpop.f32.mrb[0].mxu0
    %v3055 = vadd.f32 0.0, %v3054
    %v3056 = vpop.f32.mrb[0].mxu0
    %v3057 = vadd.f32 0.0, %v3056
    %v3058 = vpop.f32.mrb[0].mxu0
    %v3059 = vadd.f32 0.0, %v3058
    %3060 = vdwg.mxu0
    %v3061 = vunpack.c.l.bf16 %v2971
    %v3062 = vunpack.c.l.bf16 %v2972
    %v3063 = vunpack.c.l.bf16 %v2973
    %v3064 = vunpack.c.l.bf16 %v2974
    %v3065 = vunpack.c.h.bf16 %v2971
    %v3066 = vunpack.c.h.bf16 %v2972
    %v3067 = vunpack.c.h.bf16 %v2973
    %v3068 = vunpack.c.h.bf16 %v2974
    %v3069 = vadd.f32 %v3061, %v3010
    %v3070 = vadd.f32 %v3062, %v3012
    %v3071 = vadd.f32 %v3063, %v3053
    %v3072 = vadd.f32 %v3064, %v3055
    %v3073 = vadd.f32 %v3065, %v3014
    %v3074 = vadd.f32 %v3066, %v3016
    %v3075 = vadd.f32 %v3067, %v3057
    %v3076 = vadd.f32 %v3068, %v3059
    %v3077 = vmul.f32 %v3069, 0.5
    %v3078 = vmul.f32 %v3073, 0.5
    %v3079 = vtanh.pop %v3077
    %v3080 = vtanh.pop %v3078
    %v3081 = vmul.f32 %v3079, 0.5
    %v3082 = vmul.f32 %v3080, 0.5
    %v3083 = vadd.f32 %v3081, 0.5
    %v3084 = vadd.f32 %v3082, 0.5
    %v3085 = vmul.f32 %v3070, 0.5
    %v3086 = vmul.f32 %v3074, 0.5
    %v3087 = vtanh.pop %v3085
    %v3088 = vtanh.pop %v3086
    %v3089 = vmul.f32 %v3087, 0.5
    %v3090 = vmul.f32 %v3088, 0.5
    %v3091 = vadd.f32 %v3089, 0.5
    %v3092 = vadd.f32 %v3090, 0.5
    %v3093 = vtanh.pop %v3071
    %v3094 = vtanh.pop %v3075
    %v3095 = vmul.f32 %v3072, 0.5
    %v3096 = vmul.f32 %v3076, 0.5
    %v3097 = vtanh.pop %v3095
    %v3098 = vtanh.pop %v3096
    %v3099 = vmul.f32 %v3097, 0.5
    %v3100 = vmul.f32 %v3098, 0.5
    %v3101 = vadd.f32 %v3099, 0.5
    %v3102 = vadd.f32 %v3100, 0.5
    %v3103 = vmul.f32 %v3091, %v2964
    %v3104 = vmul.f32 %v3092, %v2965
    %v3105 = vmul.f32 %v3083, %v3093
    %v3106 = vmul.f32 %v3084, %v3094
    %v3107 = vadd.f32 %v3103, %v3105
    %v3108 = vadd.f32 %v3104, %v3106
    %v3109 = vtanh.pop %v3107
    %v3110 = vtanh.pop %v3108
    %v3111 = vmul.f32 %v3101, %v3109
    %v3112 = vmul.f32 %v3102, %v3110
    %v3113 = vpack.c.bf16 %v3112, %v3111
    %v3114 = vld [vmem:[%s1248] sm:$0xff]
    %v3115 = vld [vmem:[%s1248 + $0x8] sm:$0xff]
    %v3116 = vld [vmem:[%s1248 + $0x10] sm:$0xff]
    %v3117 = vld [vmem:[%s1248 + $0x18] sm:$0xff]
    %3118 = vmatprep.subr.bf16.mxu0 %v2626
    %3119 = vmatpush1.bf16.msra.mxu0 %v2625
    %3120 = vmatprep.subr.bf16.mxu0 %v2630
    %3121 = vmatpush1.bf16.msra.mxu0 %v2629
    %3122 = vmatprep.subr.bf16.mxu0 %v2634
    %3123 = vmatpush1.bf16.msra.mxu0 %v2633
    %3124 = vmatprep.subr.bf16.mxu0 %v2638
    %3125 = vmatpush1.bf16.msra.mxu0 %v2637
    %3126 = vmatprep.subr.bf16.mxu0 %v2642
    %3127 = vmatpush1.bf16.msra.mxu0 %v2641
    %3128 = vmatprep.subr.bf16.mxu0 %v2646
    %3129 = vmatpush1.bf16.msra.mxu0 %v2645
    %3130 = vmatprep.subr.bf16.mxu0 %v2650
    %3131 = vmatpush1.bf16.msra.mxu0 %v2649
    %3132 = vmatprep.subr.bf16.mxu0 %v2654
    %3133 = vmatpush1.bf16.msra.mxu0 %v2653
    %3134 = vmatprep.subr.bf16.mxu0 0
    %3135 = vmatpush1.bf16.msra.mxu0 0
    %3136 = vmatprep.subr.bf16.mxu0 0
    %3137 = vmatpush1.bf16.msra.mxu0 0
    %3138 = vmatprep.subr.bf16.mxu0 0
    %3139 = vmatpush1.bf16.msra.mxu0 0
    %3140 = vmatprep.subr.bf16.mxu0 0
    %3141 = vmatpush1.bf16.msra.mxu0 0
    %3142 = vmatprep.subr.bf16.mxu0 0
    %3143 = vmatpush1.bf16.msra.mxu0 0
    %3144 = vmatprep.subr.bf16.mxu0 0
    %3145 = vmatpush1.bf16.msra.mxu0 0
    %3146 = vmatprep.subr.bf16.mxu0 0
    %3147 = vmatpush1.bf16.msra.mxu0 0
    %3148 = vmatprep.subr.bf16.mxu0 0
    %3149 = vmatpush1.bf16.msra.mxu0 0
    %3150 = vmatprep.mubr.bf16.mxu0 0
    %3151 = vmatmul.mubr.bf16.gmra.mrb[0].mxu0 %v3113
    %v3152 = vpop.f32.mrb[0].mxu0
    %v3153 = vadd.f32 0.0, %v3152
    %v3154 = vpop.f32.mrb[0].mxu0
    %v3155 = vadd.f32 0.0, %v3154
    %v3156 = vpop.f32.mrb[0].mxu0
    %v3157 = vadd.f32 0.0, %v3156
    %v3158 = vpop.f32.mrb[0].mxu0
    %v3159 = vadd.f32 0.0, %v3158
    %3160 = vdwg.mxu0
    %3161 = vmatprep.subr.bf16.mxu0 %v2628
    %3162 = vmatpush1.bf16.msra.mxu0 %v2627
    %3163 = vmatprep.subr.bf16.mxu0 %v2632
    %3164 = vmatpush1.bf16.msra.mxu0 %v2631
    %3165 = vmatprep.subr.bf16.mxu0 %v2636
    %3166 = vmatpush1.bf16.msra.mxu0 %v2635
    %3167 = vmatprep.subr.bf16.mxu0 %v2640
    %3168 = vmatpush1.bf16.msra.mxu0 %v2639
    %3169 = vmatprep.subr.bf16.mxu0 %v2644
    %3170 = vmatpush1.bf16.msra.mxu0 %v2643
    %3171 = vmatprep.subr.bf16.mxu0 %v2648
    %3172 = vmatpush1.bf16.msra.mxu0 %v2647
    %3173 = vmatprep.subr.bf16.mxu0 %v2652
    %3174 = vmatpush1.bf16.msra.mxu0 %v2651
    %3175 = vmatprep.subr.bf16.mxu0 %v2656
    %3176 = vmatpush1.bf16.msra.mxu0 %v2655
    %3177 = vmatprep.subr.bf16.mxu0 0
    %3178 = vmatpush1.bf16.msra.mxu0 0
    %3179 = vmatprep.subr.bf16.mxu0 0
    %3180 = vmatpush1.bf16.msra.mxu0 0
    %3181 = vmatprep.subr.bf16.mxu0 0
    %3182 = vmatpush1.bf16.msra.mxu0 0
    %3183 = vmatprep.subr.bf16.mxu0 0
    %3184 = vmatpush1.bf16.msra.mxu0 0
    %3185 = vmatprep.subr.bf16.mxu0 0
    %3186 = vmatpush1.bf16.msra.mxu0 0
    %3187 = vmatprep.subr.bf16.mxu0 0
    %3188 = vmatpush1.bf16.msra.mxu0 0
    %3189 = vmatprep.subr.bf16.mxu0 0
    %3190 = vmatpush1.bf16.msra.mxu0 0
    %3191 = vmatprep.subr.bf16.mxu0 0
    %3192 = vmatpush1.bf16.msra.mxu0 0
    %3193 = vmatprep.mubr.bf16.mxu0 0
    %3194 = vmatmul.mubr.bf16.gmra.mrb[0].mxu0 %v3113
    %v3195 = vpop.f32.mrb[0].mxu0
    %v3196 = vadd.f32 0.0, %v3195
    %v3197 = vpop.f32.mrb[0].mxu0
    %v3198 = vadd.f32 0.0, %v3197
    %v3199 = vpop.f32.mrb[0].mxu0
    %v3200 = vadd.f32 0.0, %v3199
    %v3201 = vpop.f32.mrb[0].mxu0
    %v3202 = vadd.f32 0.0, %v3201
    %3203 = vdwg.mxu0
    %v3204 = vunpack.c.l.bf16 %v3114
    %v3205 = vunpack.c.l.bf16 %v3115
    %v3206 = vunpack.c.l.bf16 %v3116
    %v3207 = vunpack.c.l.bf16 %v3117
    %v3208 = vunpack.c.h.bf16 %v3114
    %v3209 = vunpack.c.h.bf16 %v3115
    %v3210 = vunpack.c.h.bf16 %v3116
    %v3211 = vunpack.c.h.bf16 %v3117
    %v3212 = vadd.f32 %v3204, %v3153
    %v3213 = vadd.f32 %v3205, %v3155
    %v3214 = vadd.f32 %v3206, %v3196
    %v3215 = vadd.f32 %v3207, %v3198
    %v3216 = vadd.f32 %v3208, %v3157
    %v3217 = vadd.f32 %v3209, %v3159
    %v3218 = vadd.f32 %v3210, %v3200
    %v3219 = vadd.f32 %v3211, %v3202
    %v3220 = vmul.f32 %v3212, 0.5
    %v3221 = vmul.f32 %v3216, 0.5
    %v3222 = vtanh.pop %v3220
    %v3223 = vtanh.pop %v3221
    %v3224 = vmul.f32 %v3222, 0.5
    %v3225 = vmul.f32 %v3223, 0.5
    %v3226 = vadd.f32 %v3224, 0.5
    %v3227 = vadd.f32 %v3225, 0.5
    %v3228 = vmul.f32 %v3213, 0.5
    %v3229 = vmul.f32 %v3217, 0.5
    %v3230 = vtanh.pop %v3228
    %v3231 = vtanh.pop %v3229
    %v3232 = vmul.f32 %v3230, 0.5
    %v3233 = vmul.f32 %v3231, 0.5
    %v3234 = vadd.f32 %v3232, 0.5
    %v3235 = vadd.f32 %v3233, 0.5
    %v3236 = vtanh.pop %v3214
    %v3237 = vtanh.pop %v3218
    %v3238 = vmul.f32 %v3215, 0.5
    %v3239 = vmul.f32 %v3219, 0.5
    %v3240 = vtanh.pop %v3238
    %v3241 = vtanh.pop %v3239
    %v3242 = vmul.f32 %v3240, 0.5
    %v3243 = vmul.f32 %v3241, 0.5
    %v3244 = vadd.f32 %v3242, 0.5
    %v3245 = vadd.f32 %v3243, 0.5
    %v3246 = vmul.f32 %v3234, %v3107
    %v3247 = vmul.f32 %v3235, %v3108
    %v3248 = vmul.f32 %v3226, %v3236
    %v3249 = vmul.f32 %v3227, %v3237
    %v3250 = vadd.f32 %v3246, %v3248
    %v3251 = vadd.f32 %v3247, %v3249
    %v3252 = vtanh.pop %v3250
    %v3253 = vtanh.pop %v3251
    %v3254 = vmul.f32 %v3244, %v3252
    %v3255 = vmul.f32 %v3245, %v3253
    %v3256 = vpack.c.bf16 %v3255, %v3254
    %v3257 = vld [vmem:[%s1394] sm:$0xff]
    %v3258 = vld [vmem:[%s1394 + $0x8] sm:$0xff]
    %v3259 = vld [vmem:[%s1394 + $0x10] sm:$0xff]
    %v3260 = vld [vmem:[%s1394 + $0x18] sm:$0xff]
    %3261 = vmatprep.subr.bf16.mxu0 %v2626
    %3262 = vmatpush1.bf16.msra.mxu0 %v2625
    %3263 = vmatprep.subr.bf16.mxu0 %v2630
    %3264 = vmatpush1.bf16.msra.mxu0 %v2629
    %3265 = vmatprep.subr.bf16.mxu0 %v2634
    %3266 = vmatpush1.bf16.msra.mxu0 %v2633
    %3267 = vmatprep.subr.bf16.mxu0 %v2638
    %3268 = vmatpush1.bf16.msra.mxu0 %v2637
    %3269 = vmatprep.subr.bf16.mxu0 %v2642
    %3270 = vmatpush1.bf16.msra.mxu0 %v2641
    %3271 = vmatprep.subr.bf16.mxu0 %v2646
    %3272 = vmatpush1.bf16.msra.mxu0 %v2645
    %3273 = vmatprep.subr.bf16.mxu0 %v2650
    %3274 = vmatpush1.bf16.msra.mxu0 %v2649
    %3275 = vmatprep.subr.bf16.mxu0 %v2654
    %3276 = vmatpush1.bf16.msra.mxu0 %v2653
    %3277 = vmatprep.subr.bf16.mxu0 0
    %3278 = vmatpush1.bf16.msra.mxu0 0
    %3279 = vmatprep.subr.bf16.mxu0 0
    %3280 = vmatpush1.bf16.msra.mxu0 0
    %3281 = vmatprep.subr.bf16.mxu0 0
    %3282 = vmatpush1.bf16.msra.mxu0 0
    %3283 = vmatprep.subr.bf16.mxu0 0
    %3284 = vmatpush1.bf16.msra.mxu0 0
    %3285 = vmatprep.subr.bf16.mxu0 0
    %3286 = vmatpush1.bf16.msra.mxu0 0
    %3287 = vmatprep.subr.bf16.mxu0 0
    %3288 = vmatpush1.bf16.msra.mxu0 0
    %3289 = vmatprep.subr.bf16.mxu0 0
    %3290 = vmatpush1.bf16.msra.mxu0 0
    %3291 = vmatprep.subr.bf16.mxu0 0
    %3292 = vmatpush1.bf16.msra.mxu0 0
    %3293 = vmatprep.mubr.bf16.mxu0 0
    %3294 = vmatmul.mubr.bf16.gmra.mrb[0].mxu0 %v3256
    %v3295 = vpop.f32.mrb[0].mxu0
    %v3296 = vadd.f32 0.0, %v3295
    %v3297 = vpop.f32.mrb[0].mxu0
    %v3298 = vadd.f32 0.0, %v3297
    %v3299 = vpop.f32.mrb[0].mxu0
    %v3300 = vadd.f32 0.0, %v3299
    %v3301 = vpop.f32.mrb[0].mxu0
    %v3302 = vadd.f32 0.0, %v3301
    %3303 = vdwg.mxu0
    %3304 = vmatprep.subr.bf16.mxu0 %v2628
    %3305 = vmatpush1.bf16.msra.mxu0 %v2627
    %3306 = vmatprep.subr.bf16.mxu0 %v2632
    %3307 = vmatpush1.bf16.msra.mxu0 %v2631
    %3308 = vmatprep.subr.bf16.mxu0 %v2636
    %3309 = vmatpush1.bf16.msra.mxu0 %v2635
    %3310 = vmatprep.subr.bf16.mxu0 %v2640
    %3311 = vmatpush1.bf16.msra.mxu0 %v2639
    %3312 = vmatprep.subr.bf16.mxu0 %v2644
    %3313 = vmatpush1.bf16.msra.mxu0 %v2643
    %3314 = vmatprep.subr.bf16.mxu0 %v2648
    %3315 = vmatpush1.bf16.msra.mxu0 %v2647
    %3316 = vmatprep.subr.bf16.mxu0 %v2652
    %3317 = vmatpush1.bf16.msra.mxu0 %v2651
    %3318 = vmatprep.subr.bf16.mxu0 %v2656
    %3319 = vmatpush1.bf16.msra.mxu0 %v2655
    %3320 = vmatprep.subr.bf16.mxu0 0
    %3321 = vmatpush1.bf16.msra.mxu0 0
    %3322 = vmatprep.subr.bf16.mxu0 0
    %3323 = vmatpush1.bf16.msra.mxu0 0
    %3324 = vmatprep.subr.bf16.mxu0 0
    %3325 = vmatpush1.bf16.msra.mxu0 0
    %3326 = vmatprep.subr.bf16.mxu0 0
    %3327 = vmatpush1.bf16.msra.mxu0 0
    %3328 = vmatprep.subr.bf16.mxu0 0
    %3329 = vmatpush1.bf16.msra.mxu0 0
    %3330 = vmatprep.subr.bf16.mxu0 0
    %3331 = vmatpush1.bf16.msra.mxu0 0
    %3332 = vmatprep.subr.bf16.mxu0 0
    %3333 = vmatpush1.bf16.msra.mxu0 0
    %3334 = vmatprep.subr.bf16.mxu0 0
    %3335 = vmatpush1.bf16.msra.mxu0 0
    %3336 = vmatprep.mubr.bf16.mxu0 0
    %3337 = vmatmul.mubr.bf16.gmra.mrb[0].mxu0 %v3256
    %v3338 = vpop.f32.mrb[0].mxu0
    %v3339 = vadd.f32 0.0, %v3338
    %v3340 = vpop.f32.mrb[0].mxu0
    %v3341 = vadd.f32 0.0, %v3340
    %v3342 = vpop.f32.mrb[0].mxu0
    %v3343 = vadd.f32 0.0, %v3342
    %v3344 = vpop.f32.mrb[0].mxu0
    %v3345 = vadd.f32 0.0, %v3344
    %3346 = vdwg.mxu0
    %v3347 = vunpack.c.l.bf16 %v3257
    %v3348 = vunpack.c.l.bf16 %v3258
    %v3349 = vunpack.c.l.bf16 %v3259
    %v3350 = vunpack.c.l.bf16 %v3260
    %v3351 = vunpack.c.h.bf16 %v3257
    %v3352 = vunpack.c.h.bf16 %v3258
    %v3353 = vunpack.c.h.bf16 %v3259
    %v3354 = vunpack.c.h.bf16 %v3260
    %v3355 = vadd.f32 %v3347, %v3296
    %v3356 = vadd.f32 %v3348, %v3298
    %v3357 = vadd.f32 %v3349, %v3339
    %v3358 = vadd.f32 %v3350, %v3341
    %v3359 = vadd.f32 %v3351, %v3300
    %v3360 = vadd.f32 %v3352, %v3302
    %v3361 = vadd.f32 %v3353, %v3343
    %v3362 = vadd.f32 %v3354, %v3345
    %v3363 = vmul.f32 %v3355, 0.5
    %v3364 = vmul.f32 %v3359, 0.5
    %v3365 = vtanh.pop %v3363
    %v3366 = vtanh.pop %v3364
    %v3367 = vmul.f32 %v3365, 0.5
    %v3368 = vmul.f32 %v3366, 0.5
    %v3369 = vadd.f32 %v3367, 0.5
    %v3370 = vadd.f32 %v3368, 0.5
    %v3371 = vmul.f32 %v3356, 0.5
    %v3372 = vmul.f32 %v3360, 0.5
    %v3373 = vtanh.pop %v3371
    %v3374 = vtanh.pop %v3372
    %v3375 = vmul.f32 %v3373, 0.5
    %v3376 = vmul.f32 %v3374, 0.5
    %v3377 = vadd.f32 %v3375, 0.5
    %v3378 = vadd.f32 %v3376, 0.5
    %v3379 = vtanh.pop %v3357
    %v3380 = vtanh.pop %v3361
    %v3381 = vmul.f32 %v3358, 0.5
    %v3382 = vmul.f32 %v3362, 0.5
    %v3383 = vtanh.pop %v3381
    %v3384 = vtanh.pop %v3382
    %v3385 = vmul.f32 %v3383, 0.5
    %v3386 = vmul.f32 %v3384, 0.5
    %v3387 = vadd.f32 %v3385, 0.5
    %v3388 = vadd.f32 %v3386, 0.5
    %v3389 = vmul.f32 %v3377, %v3250
    %v3390 = vmul.f32 %v3378, %v3251
    %v3391 = vmul.f32 %v3369, %v3379
    %v3392 = vmul.f32 %v3370, %v3380
    %v3393 = vadd.f32 %v3389, %v3391
    %v3394 = vadd.f32 %v3390, %v3392
    %v3395 = vtanh.pop %v3393
    %v3396 = vtanh.pop %v3394
    %v3397 = vmul.f32 %v3387, %v3395
    %v3398 = vmul.f32 %v3388, %v3396
    %v3399 = vpack.c.bf16 %v3398, %v3397
    %v3400 = vld [vmem:[%s1540] sm:$0xff]
    %v3401 = vld [vmem:[%s1540 + $0x8] sm:$0xff]
    %v3402 = vld [vmem:[%s1540 + $0x10] sm:$0xff]
    %v3403 = vld [vmem:[%s1540 + $0x18] sm:$0xff]
    %3404 = vmatprep.subr.bf16.mxu0 %v2626
    %3405 = vmatpush1.bf16.msra.mxu0 %v2625
    %3406 = vmatprep.subr.bf16.mxu0 %v2630
    %3407 = vmatpush1.bf16.msra.mxu0 %v2629
    %3408 = vmatprep.subr.bf16.mxu0 %v2634
    %3409 = vmatpush1.bf16.msra.mxu0 %v2633
    %3410 = vmatprep.subr.bf16.mxu0 %v2638
    %3411 = vmatpush1.bf16.msra.mxu0 %v2637
    %3412 = vmatprep.subr.bf16.mxu0 %v2642
    %3413 = vmatpush1.bf16.msra.mxu0 %v2641
    %3414 = vmatprep.subr.bf16.mxu0 %v2646
    %3415 = vmatpush1.bf16.msra.mxu0 %v2645
    %3416 = vmatprep.subr.bf16.mxu0 %v2650
    %3417 = vmatpush1.bf16.msra.mxu0 %v2649
    %3418 = vmatprep.subr.bf16.mxu0 %v2654
    %3419 = vmatpush1.bf16.msra.mxu0 %v2653
    %3420 = vmatprep.subr.bf16.mxu0 0
    %3421 = vmatpush1.bf16.msra.mxu0 0
    %3422 = vmatprep.subr.bf16.mxu0 0
    %3423 = vmatpush1.bf16.msra.mxu0 0
    %3424 = vmatprep.subr.bf16.mxu0 0
    %3425 = vmatpush1.bf16.msra.mxu0 0
    %3426 = vmatprep.subr.bf16.mxu0 0
    %3427 = vmatpush1.bf16.msra.mxu0 0
    %3428 = vmatprep.subr.bf16.mxu0 0
    %3429 = vmatpush1.bf16.msra.mxu0 0
    %3430 = vmatprep.subr.bf16.mxu0 0
    %3431 = vmatpush1.bf16.msra.mxu0 0
    %3432 = vmatprep.subr.bf16.mxu0 0
    %3433 = vmatpush1.bf16.msra.mxu0 0
    %3434 = vmatprep.subr.bf16.mxu0 0
    %3435 = vmatpush1.bf16.msra.mxu0 0
    %3436 = vmatprep.mubr.bf16.mxu0 0
    %3437 = vmatmul.mubr.bf16.gmra.mrb[0].mxu0 %v3399
    %v3438 = vpop.f32.mrb[0].mxu0
    %v3439 = vadd.f32 0.0, %v3438
    %v3440 = vpop.f32.mrb[0].mxu0
    %v3441 = vadd.f32 0.0, %v3440
    %v3442 = vpop.f32.mrb[0].mxu0
    %v3443 = vadd.f32 0.0, %v3442
    %v3444 = vpop.f32.mrb[0].mxu0
    %v3445 = vadd.f32 0.0, %v3444
    %3446 = vdwg.mxu0
    %3447 = vmatprep.subr.bf16.mxu0 %v2628
    %3448 = vmatpush1.bf16.msra.mxu0 %v2627
    %3449 = vmatprep.subr.bf16.mxu0 %v2632
    %3450 = vmatpush1.bf16.msra.mxu0 %v2631
    %3451 = vmatprep.subr.bf16.mxu0 %v2636
    %3452 = vmatpush1.bf16.msra.mxu0 %v2635
    %3453 = vmatprep.subr.bf16.mxu0 %v2640
    %3454 = vmatpush1.bf16.msra.mxu0 %v2639
    %3455 = vmatprep.subr.bf16.mxu0 %v2644
    %3456 = vmatpush1.bf16.msra.mxu0 %v2643
    %3457 = vmatprep.subr.bf16.mxu0 %v2648
    %3458 = vmatpush1.bf16.msra.mxu0 %v2647
    %3459 = vmatprep.subr.bf16.mxu0 %v2652
    %3460 = vmatpush1.bf16.msra.mxu0 %v2651
    %3461 = vmatprep.subr.bf16.mxu0 %v2656
    %3462 = vmatpush1.bf16.msra.mxu0 %v2655
    %3463 = vmatprep.subr.bf16.mxu0 0
    %3464 = vmatpush1.bf16.msra.mxu0 0
    %3465 = vmatprep.subr.bf16.mxu0 0
    %3466 = vmatpush1.bf16.msra.mxu0 0
    %3467 = vmatprep.subr.bf16.mxu0 0
    %3468 = vmatpush1.bf16.msra.mxu0 0
    %3469 = vmatprep.subr.bf16.mxu0 0
    %3470 = vmatpush1.bf16.msra.mxu0 0
    %3471 = vmatprep.subr.bf16.mxu0 0
    %3472 = vmatpush1.bf16.msra.mxu0 0
    %3473 = vmatprep.subr.bf16.mxu0 0
    %3474 = vmatpush1.bf16.msra.mxu0 0
    %3475 = vmatprep.subr.bf16.mxu0 0
    %3476 = vmatpush1.bf16.msra.mxu0 0
    %3477 = vmatprep.subr.bf16.mxu0 0
    %3478 = vmatpush1.bf16.msra.mxu0 0
    %3479 = vmatprep.mubr.bf16.mxu0 0
    %3480 = vmatmul.mubr.bf16.gmra.mrb[0].mxu0 %v3399
    %v3481 = vpop.f32.mrb[0].mxu0
    %v3482 = vadd.f32 0.0, %v3481
    %v3483 = vpop.f32.mrb[0].mxu0
    %v3484 = vadd.f32 0.0, %v3483
    %v3485 = vpop.f32.mrb[0].mxu0
    %v3486 = vadd.f32 0.0, %v3485
    %v3487 = vpop.f32.mrb[0].mxu0
    %v3488 = vadd.f32 0.0, %v3487
    %3489 = vdwg.mxu0
    %v3490 = vunpack.c.l.bf16 %v3400
    %v3491 = vunpack.c.l.bf16 %v3401
    %v3492 = vunpack.c.l.bf16 %v3402
    %v3493 = vunpack.c.l.bf16 %v3403
    %v3494 = vunpack.c.h.bf16 %v3400
    %v3495 = vunpack.c.h.bf16 %v3401
    %v3496 = vunpack.c.h.bf16 %v3402
    %v3497 = vunpack.c.h.bf16 %v3403
    %v3498 = vadd.f32 %v3490, %v3439
    %v3499 = vadd.f32 %v3491, %v3441
    %v3500 = vadd.f32 %v3492, %v3482
    %v3501 = vadd.f32 %v3493, %v3484
    %v3502 = vadd.f32 %v3494, %v3443
    %v3503 = vadd.f32 %v3495, %v3445
    %v3504 = vadd.f32 %v3496, %v3486
    %v3505 = vadd.f32 %v3497, %v3488
    %v3506 = vmul.f32 %v3498, 0.5
    %v3507 = vmul.f32 %v3502, 0.5
    %v3508 = vtanh.pop %v3506
    %v3509 = vtanh.pop %v3507
    %v3510 = vmul.f32 %v3508, 0.5
    %v3511 = vmul.f32 %v3509, 0.5
    %v3512 = vadd.f32 %v3510, 0.5
    %v3513 = vadd.f32 %v3511, 0.5
    %v3514 = vmul.f32 %v3499, 0.5
    %v3515 = vmul.f32 %v3503, 0.5
    %v3516 = vtanh.pop %v3514
    %v3517 = vtanh.pop %v3515
    %v3518 = vmul.f32 %v3516, 0.5
    %v3519 = vmul.f32 %v3517, 0.5
    %v3520 = vadd.f32 %v3518, 0.5
    %v3521 = vadd.f32 %v3519, 0.5
    %v3522 = vtanh.pop %v3500
    %v3523 = vtanh.pop %v3504
    %v3524 = vmul.f32 %v3501, 0.5
    %v3525 = vmul.f32 %v3505, 0.5
    %v3526 = vtanh.pop %v3524
    %v3527 = vtanh.pop %v3525
    %v3528 = vmul.f32 %v3526, 0.5
    %v3529 = vmul.f32 %v3527, 0.5
    %v3530 = vadd.f32 %v3528, 0.5
    %v3531 = vadd.f32 %v3529, 0.5
    %v3532 = vmul.f32 %v3520, %v3393
    %v3533 = vmul.f32 %v3521, %v3394
    %v3534 = vmul.f32 %v3512, %v3522
    %v3535 = vmul.f32 %v3513, %v3523
    %v3536 = vadd.f32 %v3532, %v3534
    %v3537 = vadd.f32 %v3533, %v3535
    %v3538 = vtanh.pop %v3536
    %v3539 = vtanh.pop %v3537
    %v3540 = vmul.f32 %v3530, %v3538
    %v3541 = vmul.f32 %v3531, %v3539
    %v3542 = vpack.c.bf16 %v3541, %v3540
    %v3543 = vld [vmem:[%s1686] sm:$0xff]
    %v3544 = vld [vmem:[%s1686 + $0x8] sm:$0xff]
    %v3545 = vld [vmem:[%s1686 + $0x10] sm:$0xff]
    %v3546 = vld [vmem:[%s1686 + $0x18] sm:$0xff]
    %3547 = vmatprep.subr.bf16.mxu0 %v2626
    %3548 = vmatpush1.bf16.msra.mxu0 %v2625
    %3549 = vmatprep.subr.bf16.mxu0 %v2630
    %3550 = vmatpush1.bf16.msra.mxu0 %v2629
    %3551 = vmatprep.subr.bf16.mxu0 %v2634
    %3552 = vmatpush1.bf16.msra.mxu0 %v2633
    %3553 = vmatprep.subr.bf16.mxu0 %v2638
    %3554 = vmatpush1.bf16.msra.mxu0 %v2637
    %3555 = vmatprep.subr.bf16.mxu0 %v2642
    %3556 = vmatpush1.bf16.msra.mxu0 %v2641
    %3557 = vmatprep.subr.bf16.mxu0 %v2646
    %3558 = vmatpush1.bf16.msra.mxu0 %v2645
    %3559 = vmatprep.subr.bf16.mxu0 %v2650
    %3560 = vmatpush1.bf16.msra.mxu0 %v2649
    %3561 = vmatprep.subr.bf16.mxu0 %v2654
    %3562 = vmatpush1.bf16.msra.mxu0 %v2653
    %3563 = vmatprep.subr.bf16.mxu0 0
    %3564 = vmatpush1.bf16.msra.mxu0 0
    %3565 = vmatprep.subr.bf16.mxu0 0
    %3566 = vmatpush1.bf16.msra.mxu0 0
    %3567 = vmatprep.subr.bf16.mxu0 0
    %3568 = vmatpush1.bf16.msra.mxu0 0
    %3569 = vmatprep.subr.bf16.mxu0 0
    %3570 = vmatpush1.bf16.msra.mxu0 0
    %3571 = vmatprep.subr.bf16.mxu0 0
    %3572 = vmatpush1.bf16.msra.mxu0 0
    %3573 = vmatprep.subr.bf16.mxu0 0
    %3574 = vmatpush1.bf16.msra.mxu0 0
    %3575 = vmatprep.subr.bf16.mxu0 0
    %3576 = vmatpush1.bf16.msra.mxu0 0
    %3577 = vmatprep.subr.bf16.mxu0 0
    %3578 = vmatpush1.bf16.msra.mxu0 0
    %3579 = vmatprep.mubr.bf16.mxu0 0
    %3580 = vmatmul.mubr.bf16.gmra.mrb[0].mxu0 %v3542
    %v3581 = vpop.f32.mrb[0].mxu0
    %v3582 = vadd.f32 0.0, %v3581
    %v3583 = vpop.f32.mrb[0].mxu0
    %v3584 = vadd.f32 0.0, %v3583
    %v3585 = vpop.f32.mrb[0].mxu0
    %v3586 = vadd.f32 0.0, %v3585
    %v3587 = vpop.f32.mrb[0].mxu0
    %v3588 = vadd.f32 0.0, %v3587
    %3589 = vdwg.mxu0
    %3590 = vmatprep.subr.bf16.mxu0 %v2628
    %3591 = vmatpush1.bf16.msra.mxu0 %v2627
    %3592 = vmatprep.subr.bf16.mxu0 %v2632
    %3593 = vmatpush1.bf16.msra.mxu0 %v2631
    %3594 = vmatprep.subr.bf16.mxu0 %v2636
    %3595 = vmatpush1.bf16.msra.mxu0 %v2635
    %3596 = vmatprep.subr.bf16.mxu0 %v2640
    %3597 = vmatpush1.bf16.msra.mxu0 %v2639
    %3598 = vmatprep.subr.bf16.mxu0 %v2644
    %3599 = vmatpush1.bf16.msra.mxu0 %v2643
    %3600 = vmatprep.subr.bf16.mxu0 %v2648
    %3601 = vmatpush1.bf16.msra.mxu0 %v2647
    %3602 = vmatprep.subr.bf16.mxu0 %v2652
    %3603 = vmatpush1.bf16.msra.mxu0 %v2651
    %3604 = vmatprep.subr.bf16.mxu0 %v2656
    %3605 = vmatpush1.bf16.msra.mxu0 %v2655
    %3606 = vmatprep.subr.bf16.mxu0 0
    %3607 = vmatpush1.bf16.msra.mxu0 0
    %3608 = vmatprep.subr.bf16.mxu0 0
    %3609 = vmatpush1.bf16.msra.mxu0 0
    %3610 = vmatprep.subr.bf16.mxu0 0
    %3611 = vmatpush1.bf16.msra.mxu0 0
    %3612 = vmatprep.subr.bf16.mxu0 0
    %3613 = vmatpush1.bf16.msra.mxu0 0
    %3614 = vmatprep.subr.bf16.mxu0 0
    %3615 = vmatpush1.bf16.msra.mxu0 0
    %3616 = vmatprep.subr.bf16.mxu0 0
    %3617 = vmatpush1.bf16.msra.mxu0 0
    %3618 = vmatprep.subr.bf16.mxu0 0
    %3619 = vmatpush1.bf16.msra.mxu0 0
    %3620 = vmatprep.subr.bf16.mxu0 0
    %3621 = vmatpush1.bf16.msra.mxu0 0
    %3622 = vmatprep.mubr.bf16.mxu0 0
    %3623 = vmatmul.mubr.bf16.gmra.mrb[0].mxu0 %v3542
    %v3624 = vpop.f32.mrb[0].mxu0
    %v3625 = vadd.f32 0.0, %v3624
    %v3626 = vpop.f32.mrb[0].mxu0
    %v3627 = vadd.f32 0.0, %v3626
    %v3628 = vpop.f32.mrb[0].mxu0
    %v3629 = vadd.f32 0.0, %v3628
    %v3630 = vpop.f32.mrb[0].mxu0
    %v3631 = vadd.f32 0.0, %v3630
    %3632 = vdwg.mxu0
    %v3633 = vunpack.c.l.bf16 %v3543
    %v3634 = vunpack.c.l.bf16 %v3544
    %v3635 = vunpack.c.l.bf16 %v3545
    %v3636 = vunpack.c.l.bf16 %v3546
    %v3637 = vunpack.c.h.bf16 %v3543
    %v3638 = vunpack.c.h.bf16 %v3544
    %v3639 = vunpack.c.h.bf16 %v3545
    %v3640 = vunpack.c.h.bf16 %v3546
    %v3641 = vadd.f32 %v3633, %v3582
    %v3642 = vadd.f32 %v3634, %v3584
    %v3643 = vadd.f32 %v3635, %v3625
    %v3644 = vadd.f32 %v3636, %v3627
    %v3645 = vadd.f32 %v3637, %v3586
    %v3646 = vadd.f32 %v3638, %v3588
    %v3647 = vadd.f32 %v3639, %v3629
    %v3648 = vadd.f32 %v3640, %v3631
    %v3649 = vmul.f32 %v3641, 0.5
    %v3650 = vmul.f32 %v3645, 0.5
    %v3651 = vtanh.pop %v3649
    %v3652 = vtanh.pop %v3650
    %v3653 = vmul.f32 %v3651, 0.5
    %v3654 = vmul.f32 %v3652, 0.5
    %v3655 = vadd.f32 %v3653, 0.5
    %v3656 = vadd.f32 %v3654, 0.5
    %v3657 = vmul.f32 %v3642, 0.5
    %v3658 = vmul.f32 %v3646, 0.5
    %v3659 = vtanh.pop %v3657
    %v3660 = vtanh.pop %v3658
    %v3661 = vmul.f32 %v3659, 0.5
    %v3662 = vmul.f32 %v3660, 0.5
    %v3663 = vadd.f32 %v3661, 0.5
    %v3664 = vadd.f32 %v3662, 0.5
    %v3665 = vtanh.pop %v3643
    %v3666 = vtanh.pop %v3647
    %v3667 = vmul.f32 %v3644, 0.5
    %v3668 = vmul.f32 %v3648, 0.5
    %v3669 = vtanh.pop %v3667
    %v3670 = vtanh.pop %v3668
    %v3671 = vmul.f32 %v3669, 0.5
    %v3672 = vmul.f32 %v3670, 0.5
    %v3673 = vadd.f32 %v3671, 0.5
    %v3674 = vadd.f32 %v3672, 0.5
    %v3675 = vmul.f32 %v3663, %v3536
    %v3676 = vmul.f32 %v3664, %v3537
    %v3677 = vmul.f32 %v3655, %v3665
    %v3678 = vmul.f32 %v3656, %v3666
    %v3679 = vadd.f32 %v3675, %v3677
    %v3680 = vadd.f32 %v3676, %v3678
    %v3681 = vtanh.pop %v3679
    %v3682 = vtanh.pop %v3680
    %v3683 = vmul.f32 %v3673, %v3681
    %v3684 = vmul.f32 %v3674, %v3682
    %v3685 = vpack.c.bf16 %v3684, %v3683
    %v3686 = vld [vmem:[%s1832] sm:$0xff]
    %v3687 = vld [vmem:[%s1832 + $0x8] sm:$0xff]
    %v3688 = vld [vmem:[%s1832 + $0x10] sm:$0xff]
    %v3689 = vld [vmem:[%s1832 + $0x18] sm:$0xff]
    %3690 = vmatprep.subr.bf16.mxu0 %v2626
    %3691 = vmatpush1.bf16.msra.mxu0 %v2625
    %3692 = vmatprep.subr.bf16.mxu0 %v2630
    %3693 = vmatpush1.bf16.msra.mxu0 %v2629
    %3694 = vmatprep.subr.bf16.mxu0 %v2634
    %3695 = vmatpush1.bf16.msra.mxu0 %v2633
    %3696 = vmatprep.subr.bf16.mxu0 %v2638
    %3697 = vmatpush1.bf16.msra.mxu0 %v2637
    %3698 = vmatprep.subr.bf16.mxu0 %v2642
    %3699 = vmatpush1.bf16.msra.mxu0 %v2641
    %3700 = vmatprep.subr.bf16.mxu0 %v2646
    %3701 = vmatpush1.bf16.msra.mxu0 %v2645
    %3702 = vmatprep.subr.bf16.mxu0 %v2650
    %3703 = vmatpush1.bf16.msra.mxu0 %v2649
    %3704 = vmatprep.subr.bf16.mxu0 %v2654
    %3705 = vmatpush1.bf16.msra.mxu0 %v2653
    %3706 = vmatprep.subr.bf16.mxu0 0
    %3707 = vmatpush1.bf16.msra.mxu0 0
    %3708 = vmatprep.subr.bf16.mxu0 0
    %3709 = vmatpush1.bf16.msra.mxu0 0
    %3710 = vmatprep.subr.bf16.mxu0 0
    %3711 = vmatpush1.bf16.msra.mxu0 0
    %3712 = vmatprep.subr.bf16.mxu0 0
    %3713 = vmatpush1.bf16.msra.mxu0 0
    %3714 = vmatprep.subr.bf16.mxu0 0
    %3715 = vmatpush1.bf16.msra.mxu0 0
    %3716 = vmatprep.subr.bf16.mxu0 0
    %3717 = vmatpush1.bf16.msra.mxu0 0
    %3718 = vmatprep.subr.bf16.mxu0 0
    %3719 = vmatpush1.bf16.msra.mxu0 0
    %3720 = vmatprep.subr.bf16.mxu0 0
    %3721 = vmatpush1.bf16.msra.mxu0 0
    %3722 = vmatprep.mubr.bf16.mxu0 0
    %3723 = vmatmul.mubr.bf16.gmra.mrb[0].mxu0 %v3685
    %v3724 = vpop.f32.mrb[0].mxu0
    %v3725 = vadd.f32 0.0, %v3724
    %v3726 = vpop.f32.mrb[0].mxu0
    %v3727 = vadd.f32 0.0, %v3726
    %v3728 = vpop.f32.mrb[0].mxu0
    %v3729 = vadd.f32 0.0, %v3728
    %v3730 = vpop.f32.mrb[0].mxu0
    %v3731 = vadd.f32 0.0, %v3730
    %3732 = vdwg.mxu0
    %3733 = vmatprep.subr.bf16.mxu0 %v2628
    %3734 = vmatpush1.bf16.msra.mxu0 %v2627
    %3735 = vmatprep.subr.bf16.mxu0 %v2632
    %3736 = vmatpush1.bf16.msra.mxu0 %v2631
    %3737 = vmatprep.subr.bf16.mxu0 %v2636
    %3738 = vmatpush1.bf16.msra.mxu0 %v2635
    %3739 = vmatprep.subr.bf16.mxu0 %v2640
    %3740 = vmatpush1.bf16.msra.mxu0 %v2639
    %3741 = vmatprep.subr.bf16.mxu0 %v2644
    %3742 = vmatpush1.bf16.msra.mxu0 %v2643
    %3743 = vmatprep.subr.bf16.mxu0 %v2648
    %3744 = vmatpush1.bf16.msra.mxu0 %v2647
    %3745 = vmatprep.subr.bf16.mxu0 %v2652
    %3746 = vmatpush1.bf16.msra.mxu0 %v2651
    %3747 = vmatprep.subr.bf16.mxu0 %v2656
    %3748 = vmatpush1.bf16.msra.mxu0 %v2655
    %3749 = vmatprep.subr.bf16.mxu0 0
    %3750 = vmatpush1.bf16.msra.mxu0 0
    %3751 = vmatprep.subr.bf16.mxu0 0
    %3752 = vmatpush1.bf16.msra.mxu0 0
    %3753 = vmatprep.subr.bf16.mxu0 0
    %3754 = vmatpush1.bf16.msra.mxu0 0
    %3755 = vmatprep.subr.bf16.mxu0 0
    %3756 = vmatpush1.bf16.msra.mxu0 0
    %3757 = vmatprep.subr.bf16.mxu0 0
    %3758 = vmatpush1.bf16.msra.mxu0 0
    %3759 = vmatprep.subr.bf16.mxu0 0
    %3760 = vmatpush1.bf16.msra.mxu0 0
    %3761 = vmatprep.subr.bf16.mxu0 0
    %3762 = vmatpush1.bf16.msra.mxu0 0
    %3763 = vmatprep.subr.bf16.mxu0 0
    %3764 = vmatpush1.bf16.msra.mxu0 0
    %3765 = vmatprep.mubr.bf16.mxu0 0
    %3766 = vmatmul.mubr.bf16.gmra.mrb[0].mxu0 %v3685
    %v3767 = vpop.f32.mrb[0].mxu0
    %v3768 = vadd.f32 0.0, %v3767
    %v3769 = vpop.f32.mrb[0].mxu0
    %v3770 = vadd.f32 0.0, %v3769
    %v3771 = vpop.f32.mrb[0].mxu0
    %v3772 = vadd.f32 0.0, %v3771
    %v3773 = vpop.f32.mrb[0].mxu0
    %v3774 = vadd.f32 0.0, %v3773
    %3775 = vdwg.mxu0
    %v3776 = vunpack.c.l.bf16 %v3686
    %v3777 = vunpack.c.l.bf16 %v3687
    %v3778 = vunpack.c.l.bf16 %v3688
    %v3779 = vunpack.c.l.bf16 %v3689
    %v3780 = vunpack.c.h.bf16 %v3686
    %v3781 = vunpack.c.h.bf16 %v3687
    %v3782 = vunpack.c.h.bf16 %v3688
    %v3783 = vunpack.c.h.bf16 %v3689
    %v3784 = vadd.f32 %v3776, %v3725
    %v3785 = vadd.f32 %v3777, %v3727
    %v3786 = vadd.f32 %v3778, %v3768
    %v3787 = vadd.f32 %v3779, %v3770
    %v3788 = vadd.f32 %v3780, %v3729
    %v3789 = vadd.f32 %v3781, %v3731
    %v3790 = vadd.f32 %v3782, %v3772
    %v3791 = vadd.f32 %v3783, %v3774
    %v3792 = vmul.f32 %v3784, 0.5
    %v3793 = vmul.f32 %v3788, 0.5
    %v3794 = vtanh.pop %v3792
    %v3795 = vtanh.pop %v3793
    %v3796 = vmul.f32 %v3794, 0.5
    %v3797 = vmul.f32 %v3795, 0.5
    %v3798 = vadd.f32 %v3796, 0.5
    %v3799 = vadd.f32 %v3797, 0.5
    %v3800 = vmul.f32 %v3785, 0.5
    %v3801 = vmul.f32 %v3789, 0.5
    %v3802 = vtanh.pop %v3800
    %v3803 = vtanh.pop %v3801
    %v3804 = vmul.f32 %v3802, 0.5
    %v3805 = vmul.f32 %v3803, 0.5
    %v3806 = vadd.f32 %v3804, 0.5
    %v3807 = vadd.f32 %v3805, 0.5
    %v3808 = vtanh.pop %v3786
    %v3809 = vtanh.pop %v3790
    %v3810 = vmul.f32 %v3787, 0.5
    %v3811 = vmul.f32 %v3791, 0.5
    %v3812 = vtanh.pop %v3810
    %v3813 = vtanh.pop %v3811
    %v3814 = vmul.f32 %v3812, 0.5
    %v3815 = vmul.f32 %v3813, 0.5
    %v3816 = vadd.f32 %v3814, 0.5
    %v3817 = vadd.f32 %v3815, 0.5
    %v3818 = vmul.f32 %v3806, %v3679
    %v3819 = vmul.f32 %v3807, %v3680
    %v3820 = vmul.f32 %v3798, %v3808
    %v3821 = vmul.f32 %v3799, %v3809
    %v3822 = vadd.f32 %v3818, %v3820
    %v3823 = vadd.f32 %v3819, %v3821
    %v3824 = vtanh.pop %v3822
    %v3825 = vtanh.pop %v3823
    %v3826 = vmul.f32 %v3816, %v3824
    %v3827 = vmul.f32 %v3817, %v3825
    %v3828 = vpack.c.bf16 %v3827, %v3826
    %v3829 = vld [vmem:[%s4] sm:$0xf]
    %v3830 = vld [vmem:[%s4 + $0x4] sm:$0xf]
    %v3831 = vld [vmem:[%s4 + $0x8] sm:$0xf]
    %v3832 = vld [vmem:[%s4 + $0xc] sm:$0xf]
    %v3833 = vld [vmem:[%s4 + $0x10] sm:$0xf]
    %v3834 = vld [vmem:[%s4 + $0x14] sm:$0xf]
    %v3835 = vld [vmem:[%s4 + $0x18] sm:$0xf]
    %v3836 = vld [vmem:[%s4 + $0x1c] sm:$0xf]
    %v3837 = vld [vmem:[%s4 + $0x20] sm:$0xf]
    %v3838 = vld [vmem:[%s4 + $0x24] sm:$0xf]
    %v3839 = vld [vmem:[%s4 + $0x28] sm:$0xf]
    %v3840 = vld [vmem:[%s4 + $0x2c] sm:$0xf]
    %v3841 = vld [vmem:[%s4 + $0x30] sm:$0xf]
    %v3842 = vld [vmem:[%s4 + $0x34] sm:$0xf]
    %v3843 = vld [vmem:[%s4 + $0x38] sm:$0xf]
    %v3844 = vld [vmem:[%s4 + $0x3c] sm:$0xf]
    %v3845 = vld [vmem:[%s5] sm:$0x1]
    %v3847 = vlaneseq
    %v3848 = vshrl.u32 %v3847, 7
    %v3849 = vsub.s32 0, %v3848
    %v3850 = vrot.slane %v3845, %v3849
    %v3868 = vunpack.c.l.b16 %v3829
    %v3869 = vunpack.c.l.b16 %v3830
    %v3870 = vunpack.c.l.b16 %v3831
    %v3871 = vunpack.c.l.b16 %v3832
    %v3872 = vunpack.c.l.b16 %v3833
    %v3873 = vunpack.c.l.b16 %v3834
    %v3874 = vunpack.c.l.b16 %v3835
    %v3875 = vunpack.c.l.b16 %v3836
    %v3876 = vunpack.c.l.b16 %v3837
    %v3877 = vunpack.c.l.b16 %v3838
    %v3878 = vunpack.c.l.b16 %v3839
    %v3879 = vunpack.c.l.b16 %v3840
    %v3880 = vunpack.c.l.b16 %v3841
    %v3881 = vunpack.c.l.b16 %v3842
    %v3882 = vunpack.c.l.b16 %v3843
    %v3883 = vunpack.c.l.b16 %v3844
    %v3884 = vpack.c.b16 %v3869, %v3868
    %v3885 = vpack.c.b16 %v3871, %v3870
    %v3886 = vpack.c.b16 %v3873, %v3872
    %v3887 = vpack.c.b16 %v3875, %v3874
    %v3888 = vpack.c.b16 %v3877, %v3876
    %v3889 = vpack.c.b16 %v3879, %v3878
    %v3890 = vpack.c.b16 %v3881, %v3880
    %v3891 = vpack.c.b16 %v3883, %v3882
    %3900 = vmatprep.subr.bf16.mxu0 0
    %3901 = vmatpush1.bf16.msra.mxu0 %v3884
    %3902 = vmatprep.subr.bf16.mxu0 0
    %3903 = vmatpush1.bf16.msra.mxu0 %v3885
    %3904 = vmatprep.subr.bf16.mxu0 0
    %3905 = vmatpush1.bf16.msra.mxu0 %v3886
    %3906 = vmatprep.subr.bf16.mxu0 0
    %3907 = vmatpush1.bf16.msra.mxu0 %v3887
    %3908 = vmatprep.subr.bf16.mxu0 0
    %3909 = vmatpush1.bf16.msra.mxu0 %v3888
    %3910 = vmatprep.subr.bf16.mxu0 0
    %3911 = vmatpush1.bf16.msra.mxu0 %v3889
    %3912 = vmatprep.subr.bf16.mxu0 0
    %3913 = vmatpush1.bf16.msra.mxu0 %v3890
    %3914 = vmatprep.subr.bf16.mxu0 0
    %3915 = vmatpush1.bf16.msra.mxu0 %v3891
    %3916 = vmatprep.subr.bf16.mxu0 0
    %3917 = vmatpush1.bf16.msra.mxu0 0
    %3918 = vmatprep.subr.bf16.mxu0 0
    %3919 = vmatpush1.bf16.msra.mxu0 0
    %3920 = vmatprep.subr.bf16.mxu0 0
    %3921 = vmatpush1.bf16.msra.mxu0 0
    %3922 = vmatprep.subr.bf16.mxu0 0
    %3923 = vmatpush1.bf16.msra.mxu0 0
    %3924 = vmatprep.subr.bf16.mxu0 0
    %3925 = vmatpush1.bf16.msra.mxu0 0
    %3926 = vmatprep.subr.bf16.mxu0 0
    %3927 = vmatpush1.bf16.msra.mxu0 0
    %3928 = vmatprep.subr.bf16.mxu0 0
    %3929 = vmatpush1.bf16.msra.mxu0 0
    %3930 = vmatprep.subr.bf16.mxu0 0
    %3931 = vmatpush1.bf16.msra.mxu0 0
    %3932 = vmatprep.mubr.bf16.mxu0 0
    %3933 = vmatmul.mubr.bf16.gmra.mrb[0].mxu0 %v3828
    %v3934 = vpop.f32.mrb[0].mxu0
    %v3935 = vadd.f32 %v3850, %v3934
    %v3936 = vpop.f32.mrb[0].mxu0
    %v3937 = vpop.f32.mrb[0].mxu0
    %v3938 = vadd.f32 %v3850, %v3937
    %v3939 = vpop.f32.mrb[0].mxu0
    %3940 = vdwg.mxu0
    %3941 = vst [vmem:[%s6] sm:$0xff] %v3935
    %3942 = vst [vmem:[%s6 + $0x8] sm:$0xff] %v3938
    // Predicated region
    $region34: #{lotto_lstm_forward.1} parent=1 // pred_check
      _
    $region35: #{lotto_lstm_forward.1} parent=1 // pred_check_branch
      %3944 = sbr.rel (0) target = $region37
    $region36: #{lotto_lstm_forward.1} parent=1 // pred_region
      _
    $region37: #{lotto_lstm_forward.1} parent=1 // pred_fallthru
      _
    // Predicated region
    $region38: #{lotto_lstm_forward.1} parent=1 // pred_check
      _
    $region39: #{lotto_lstm_forward.1} parent=1 // pred_check_branch
      %3946 = sbr.rel (0) target = $region41
    $region40: #{lotto_lstm_forward.1} parent=1 // pred_region
      _
    $region41: #{lotto_lstm_forward.1} parent=1 // pred_fallthru
      _
    %3947 = vsyncpa [#allocation5], 1
    %3948 = vsyncpa [#allocation7], 1

</llo_original>
